<compile_context>
chip_gen: v7x
topology: tpu7x:2x2x1
jax: 0.10.0
libtpu: 0.0.40
codegen_flags: <defaults>
</compile_context>

<pallas_src>
import jax
import jax.numpy as jnp
import numpy as np
from jax.experimental import pallas as pl
from jax.experimental.pallas import tpu as pltpu


def _round_up(x, m):
    return (x + m - 1) // m * m


def make_lstm_kernel(num_layers: int, T: int, Bp: int, Hp: int):
    """Kernel args: x, (w_ih, w_hh, b) * L, w_lin, b_lin, out, gx_scr, seq_scr."""

    def kernel(*args):
        x_ref = args[0]                               # (T*Bp, I)
        layer_refs = args[1:1 + 3 * num_layers]       # per layer: (in,4Hp),(Hp,4Hp),(1,4Hp)
        wlin_ref = args[1 + 3 * num_layers]           # (Hp, O)
        blin_ref = args[2 + 3 * num_layers]           # (1, O)
        out_ref = args[3 + 3 * num_layers]            # (Bp, O)
        gx_scr = args[4 + 3 * num_layers]             # (T*Bp, 4*Hp)
        seq_scr = args[5 + 3 * num_layers]            # (T*Bp, Hp)

        h_last = None
        for l in range(num_layers):
            w_ih_ref = layer_refs[3 * l]
            w_hh_ref = layer_refs[3 * l + 1]
            b_ref = layer_refs[3 * l + 2]

            # Batched input projection: all T timesteps in one matmul, bias
            # folded in here (hoisted off the sequential per-step path).
            inp = x_ref[...] if l == 0 else seq_scr[...]
            gx_scr[...] = (
                jnp.dot(inp, w_ih_ref[...], preferred_element_type=jnp.float32)
                + b_ref[...]
            )

            write_seq = l < num_layers - 1  # last layer's sequence is never re-read

            def step(t, carry, *, _write_seq=write_seq, _whh_ref=w_hh_ref):
                h_prev, c_prev = carry
                row0 = t * Bp
                if not isinstance(row0, int):
                    row0 = pl.multiple_of(row0, Bp)   # Bp is a multiple of 8
                gates = gx_scr[pl.ds(row0, Bp), :] + jnp.dot(
                    h_prev, _whh_ref[...], preferred_element_type=jnp.float32
                )                                     # (Bp, 4*Hp), gate order i,f,g,o
                i_g = jax.nn.sigmoid(gates[:, 0 * Hp:1 * Hp])
                f_g = jax.nn.sigmoid(gates[:, 1 * Hp:2 * Hp])
                g_g = jnp.tanh(gates[:, 2 * Hp:3 * Hp])
                o_g = jax.nn.sigmoid(gates[:, 3 * Hp:4 * Hp])
                c_new = f_g * c_prev + i_g * g_g
                h_new = o_g * jnp.tanh(c_new)
                if _write_seq:
                    seq_scr[pl.ds(row0, Bp), :] = h_new
                return h_new, c_new

            # h0 / c0 are zeros (matches torch.zeros(...) in Model.forward).
            h0 = jnp.zeros((Bp, Hp), jnp.float32)
            c0 = jnp.zeros((Bp, Hp), jnp.float32)
            if T <= 32:
                # Fully unrolled at trace time (static slices, full LLO visibility).
                h, c = h0, c0
                for t in range(T):
                    h, c = step(t, (h, c))
                h_last = h
            else:
                h_last, _ = jax.lax.fori_loop(0, T, step, (h0, c0))

            # TODO(synk): nn.LSTM inter-layer dropout is training-mode only;
            # eval forward is identity, so it is intentionally omitted here.

        # Final Linear on the last timestep's hidden of the top layer.
        out_ref[...] = (
            jnp.dot(h_last, wlin_ref[...], preferred_element_type=jnp.float32)
            + blin_ref[...]
        ).astype(out_ref.dtype)

    return kernel


def pack_params(params, *, num_layers, hidden_size):
    """Pad / pack parameters into the kernel's lane-aligned gate layout."""
    H = hidden_size
    Hp = _round_up(H, 128)

    def pad_gate_cols(w):
        # (..., 4H) -> (..., 4Hp): each gate block zero-padded to Hp lanes.
        lead = w.shape[:-1]
        w4 = w.reshape(lead + (4, H))
        w4 = jnp.pad(w4, [(0, 0)] * len(lead) + [(0, 0), (0, Hp - H)])
        return w4.reshape(lead + (4 * Hp,))

    packed = []
    for l in range(num_layers):
        w_ih = params[f"w_ih{l}"]          # (in, 4H)
        w_hh = params[f"w_hh{l}"]          # (H, 4H)
        b = params[f"b{l}"]                # (1, 4H) == b_ih + b_hh
        if l > 0:
            w_ih = jnp.pad(w_ih, ((0, Hp - H), (0, 0)))  # zero rows for padded h lanes
        w_hh = jnp.pad(w_hh, ((0, Hp - H), (0, 0)))
        packed += [pad_gate_cols(w_ih), pad_gate_cols(w_hh), pad_gate_cols(b)]
    w_lin = jnp.pad(params["w_lin"], ((0, Hp - H), (0, 0)))  # (Hp, O)
    packed += [w_lin, params["b_lin"]]
    return packed, Hp


def lstm_forward(x, params, *, num_layers, hidden_size, output_size):
    """x: (B, T, I) float32 -> (B, output_size) float32."""
    B, T, I = x.shape
    O = output_size
    Bp = _round_up(B, 8)
    packed, Hp = pack_params(params, num_layers=num_layers, hidden_size=hidden_size)

    # time-major, batch zero-padded to a sublane multiple, flattened to 2-D
    # (sublane-tile friendly per-timestep row blocks of size Bp).
    x_tm = jnp.transpose(x.astype(jnp.float32), (1, 0, 2))     # (T, B, I)
    x_tm = jnp.pad(x_tm, ((0, 0), (0, Bp - B), (0, 0)))        # (T, Bp, I)
    x_flat = x_tm.reshape(T * Bp, I)

    inputs = [x_flat] + packed
    kernel = make_lstm_kernel(num_layers, T, Bp, Hp)
    vmem_spec = pl.BlockSpec(memory_space=pltpu.MemorySpace.VMEM)

    # TODO(synk): for production sizes (H >= 512) cast the packed weights to
    # bf16 for the MXU (keep f32 activations) and set
    # pltpu.CompilerParams(vmem_limit_bytes=...) explicitly.
    out_p = pl.pallas_call(
        kernel,
        out_shape=jax.ShapeDtypeStruct((Bp, O), jnp.float32),
        in_specs=[vmem_spec] * len(inputs),
        out_specs=vmem_spec,
        scratch_shapes=[
            pltpu.VMEM((T * Bp, 4 * Hp), jnp.float32),  # gates_x of the current layer
            pltpu.VMEM((T * Bp, Hp), jnp.float32),      # current layer's output sequence
        ],
    )(*inputs)
    return out_p[:B]


def lstm_reference(x, params, *, num_layers, hidden_size):
    """Pure-JAX reference mirroring nn.LSTM (eval) + Linear on the last step."""
    B, T, I = x.shape
    H = hidden_size
    seq = x.astype(jnp.float32)
    for l in range(num_layers):
        w_ih = params[f"w_ih{l}"]
        w_hh = params[f"w_hh{l}"]
        b = params[f"b{l}"]
        h = jnp.zeros((B, H), jnp.float32)
        c = jnp.zeros((B, H), jnp.float32)
        outs = []
        for t in range(T):
            gates = seq[:, t, :] @ w_ih + h @ w_hh + b
            i_g = jax.nn.sigmoid(gates[:, 0:H])
            f_g = jax.nn.sigmoid(gates[:, H:2 * H])
            g_g = jnp.tanh(gates[:, 2 * H:3 * H])
            o_g = jax.nn.sigmoid(gates[:, 3 * H:4 * H])
            c = f_g * c + i_g * g_g
            h = o_g * jnp.tanh(c)
            outs.append(h)
        seq = jnp.stack(outs, axis=1)
    return seq[:, -1, :] @ params["w_lin"] + params["b_lin"]


def init_params(key, *, input_size, hidden_size, num_layers, output_size):
    """Uniform(-k, k) init, shapes matching nn.LSTM / nn.Linear.

    Weights are stored pre-transposed ((in, 4H) / (H, 4H) / (H, O)), gate order
    i,f,g,o; biases b_ih + b_hh are pre-summed.
    """
    params = {}
    k = 1.0 / np.sqrt(hidden_size)
    keys = jax.random.split(key, 4 * num_layers + 2)
    ki = 0
    for l in range(num_layers):
        in_dim = input_size if l == 0 else hidden_size
        params[f"w_ih{l}"] = jax.random.uniform(
            keys[ki], (in_dim, 4 * hidden_size), jnp.float32, -k, k); ki += 1
        params[f"w_hh{l}"] = jax.random.uniform(
            keys[ki], (hidden_size, 4 * hidden_size), jnp.float32, -k, k); ki += 1
        b_ih = jax.random.uniform(
            keys[ki], (1, 4 * hidden_size), jnp.float32, -k, k); ki += 1
        b_hh = jax.random.uniform(
            keys[ki], (1, 4 * hidden_size), jnp.float32, -k, k); ki += 1
        params[f"b{l}"] = b_ih + b_hh
    klin = 1.0 / np.sqrt(hidden_size)
    params["w_lin"] = jax.random.uniform(
        keys[ki], (hidden_size, output_size), jnp.float32, -klin, klin); ki += 1
    params["b_lin"] = jax.random.uniform(
        keys[ki], (1, output_size), jnp.float32, -klin, klin)
    return params


if __name__ == "__main__":
    B, T = 2, 8
    INPUT_SIZE, HIDDEN_SIZE, NUM_LAYERS, OUTPUT_SIZE = 16, 32, 2, 4

    key = jax.random.PRNGKey(0)
    kx, kp = jax.random.split(key)
    x = jax.random.normal(kx, (B, T, INPUT_SIZE), jnp.float32)
    params = init_params(
        kp,
        input_size=INPUT_SIZE,
        hidden_size=HIDDEN_SIZE,
        num_layers=NUM_LAYERS,
        output_size=OUTPUT_SIZE,
    )

    out = lstm_forward(
        x, params,
        num_layers=NUM_LAYERS,
        hidden_size=HIDDEN_SIZE,
        output_size=OUTPUT_SIZE,
    )
    out = jax.block_until_ready(out)

    ref = lstm_reference(x, params, num_layers=NUM_LAYERS, hidden_size=HIDDEN_SIZE)
    np.testing.assert_allclose(np.asarray(out), np.asarray(ref), rtol=1e-5, atol=1e-5)

    print("KERNEL_OK")
</pallas_src>

<mosaic_0001>
module attributes {stable_mosaic.version = 11 : i64} {
  func.func @kernel(%arg0: memref<64x16xf32, #tpu.memory_space<vmem>>, %arg1: memref<16x512xf32, #tpu.memory_space<vmem>>, %arg2: memref<128x512xf32, #tpu.memory_space<vmem>>, %arg3: memref<1x512xf32, #tpu.memory_space<vmem>>, %arg4: memref<128x512xf32, #tpu.memory_space<vmem>>, %arg5: memref<128x512xf32, #tpu.memory_space<vmem>>, %arg6: memref<1x512xf32, #tpu.memory_space<vmem>>, %arg7: memref<128x4xf32, #tpu.memory_space<vmem>>, %arg8: memref<1x4xf32, #tpu.memory_space<vmem>>, %arg9: memref<8x4xf32, #tpu.memory_space<vmem>>, %arg10: memref<64x512xf32, #tpu.memory_space<vmem>>, %arg11: memref<64x128xf32, #tpu.memory_space<vmem>>) attributes {dimension_semantics = [], scalar_prefetch = 0 : i64, scratch_operands = 2 : i64, tpu.core_type = #tpu.core_type<tc>} {
    %c0 = arith.constant 0 : index
    %c0_0 = arith.constant 0 : index
    %0 = vector.load %arg0[%c0, %c0_0] : memref<64x16xf32, #tpu.memory_space<vmem>>, vector<64x16xf32>
    %c0_1 = arith.constant 0 : index
    %c0_2 = arith.constant 0 : index
    %1 = vector.load %arg1[%c0_1, %c0_2] : memref<16x512xf32, #tpu.memory_space<vmem>>, vector<16x512xf32>
    %cst = arith.constant dense<0.000000e+00> : vector<64x512xf32>
    %2 = tpu.matmul %0, %1, %cst {dimension_numbers = #tpu.dot_dimension_numbers<[1], [0], [0], [1], [0, 0, 1, 1], [], []>} : vector<64x16xf32>, vector<16x512xf32>, vector<64x512xf32> -> vector<64x512xf32>
    %c0_3 = arith.constant 0 : index
    %c0_4 = arith.constant 0 : index
    %3 = vector.load %arg3[%c0_3, %c0_4] : memref<1x512xf32, #tpu.memory_space<vmem>>, vector<1x512xf32>
    %4 = vector.broadcast %3 : vector<1x512xf32> to vector<64x512xf32>
    %5 = arith.addf %2, %4 : vector<64x512xf32>
    %c0_5 = arith.constant 0 : index
    %c0_6 = arith.constant 0 : index
    %6 = vector.load %arg10[%c0_5, %c0_6] : memref<64x512xf32, #tpu.memory_space<vmem>>, vector<64x512xf32>
    tpu.vector_store %arg10[%c0_5, %c0_6], %5 {strides = array<i32>} : memref<64x512xf32, #tpu.memory_space<vmem>>, vector<64x512xf32>,
    %cst_7 = arith.constant 0.000000e+00 : f32
    %7 = vector.broadcast %cst_7 : f32 to vector<8x128xf32>
    %cst_8 = arith.constant 0.000000e+00 : f32
    %8 = vector.broadcast %cst_8 : f32 to vector<8x128xf32>
    %c0_9 = arith.constant 0 : index
    %c0_10 = arith.constant 0 : index
    %9 = vector.load %arg10[%c0_9, %c0_10] : memref<64x512xf32, #tpu.memory_space<vmem>>, vector<8x512xf32>
    %c0_11 = arith.constant 0 : index
    %c0_12 = arith.constant 0 : index
    %10 = vector.load %arg2[%c0_11, %c0_12] : memref<128x512xf32, #tpu.memory_space<vmem>>, vector<128x512xf32>
    %cst_13 = arith.constant dense<0.000000e+00> : vector<8x512xf32>
    %11 = tpu.matmul %7, %10, %cst_13 {dimension_numbers = #tpu.dot_dimension_numbers<[1], [0], [0], [1], [0, 0, 1, 1], [], []>} : vector<8x128xf32>, vector<128x512xf32>, vector<8x512xf32> -> vector<8x512xf32>
    %12 = arith.addf %9, %11 : vector<8x512xf32>
    %13 = vector.extract_strided_slice %12 {offsets = [0, 0], sizes = [8, 128], strides = [1, 1]} : vector<8x512xf32> to vector<8x128xf32>
    %14 = arith.negf %13 : vector<8x128xf32>
    %15 = math.exp %14 : vector<8x128xf32>
    %cst_14 = arith.constant 1.000000e+00 : f32
    %16 = vector.broadcast %cst_14 : f32 to vector<8x128xf32>
    %17 = arith.addf %16, %15 : vector<8x128xf32>
    %18 = arith.divf %16, %17 : vector<8x128xf32>
    %19 = vector.extract_strided_slice %12 {offsets = [0, 128], sizes = [8, 128], strides = [1, 1]} : vector<8x512xf32> to vector<8x128xf32>
    %20 = arith.negf %19 : vector<8x128xf32>
    %21 = math.exp %20 : vector<8x128xf32>
    %cst_15 = arith.constant 1.000000e+00 : f32
    %22 = vector.broadcast %cst_15 : f32 to vector<8x128xf32>
    %23 = arith.addf %22, %21 : vector<8x128xf32>
    %24 = arith.divf %22, %23 : vector<8x128xf32>
    %25 = vector.extract_strided_slice %12 {offsets = [0, 256], sizes = [8, 128], strides = [1, 1]} : vector<8x512xf32> to vector<8x128xf32>
    %26 = math.tanh %25 : vector<8x128xf32>
    %27 = vector.extract_strided_slice %12 {offsets = [0, 384], sizes = [8, 128], strides = [1, 1]} : vector<8x512xf32> to vector<8x128xf32>
    %28 = arith.negf %27 : vector<8x128xf32>
    %29 = math.exp %28 : vector<8x128xf32>
    %cst_16 = arith.constant 1.000000e+00 : f32
    %30 = vector.broadcast %cst_16 : f32 to vector<8x128xf32>
    %31 = arith.addf %30, %29 : vector<8x128xf32>
    %32 = arith.divf %30, %31 : vector<8x128xf32>
    %33 = arith.mulf %24, %8 : vector<8x128xf32>
    %34 = arith.mulf %18, %26 : vector<8x128xf32>
    %35 = arith.addf %33, %34 : vector<8x128xf32>
    %36 = math.tanh %35 : vector<8x128xf32>
    %37 = arith.mulf %32, %36 : vector<8x128xf32>
    %c0_17 = arith.constant 0 : index
    %c0_18 = arith.constant 0 : index
    %38 = vector.load %arg11[%c0_17, %c0_18] : memref<64x128xf32, #tpu.memory_space<vmem>>, vector<8x128xf32>
    tpu.vector_store %arg11[%c0_17, %c0_18], %37 {strides = array<i32>} : memref<64x128xf32, #tpu.memory_space<vmem>>, vector<8x128xf32>,
    %c8 = arith.constant 8 : index
    %c0_19 = arith.constant 0 : index
    %39 = vector.load %arg10[%c8, %c0_19] : memref<64x512xf32, #tpu.memory_space<vmem>>, vector<8x512xf32>
    %c0_20 = arith.constant 0 : index
    %c0_21 = arith.constant 0 : index
    %40 = vector.load %arg2[%c0_20, %c0_21] : memref<128x512xf32, #tpu.memory_space<vmem>>, vector<128x512xf32>
    %cst_22 = arith.constant dense<0.000000e+00> : vector<8x512xf32>
    %41 = tpu.matmul %37, %40, %cst_22 {dimension_numbers = #tpu.dot_dimension_numbers<[1], [0], [0], [1], [0, 0, 1, 1], [], []>} : vector<8x128xf32>, vector<128x512xf32>, vector<8x512xf32> -> vector<8x512xf32>
    %42 = arith.addf %39, %41 : vector<8x512xf32>
    %43 = vector.extract_strided_slice %42 {offsets = [0, 0], sizes = [8, 128], strides = [1, 1]} : vector<8x512xf32> to vector<8x128xf32>
    %44 = arith.negf %43 : vector<8x128xf32>
    %45 = math.exp %44 : vector<8x128xf32>
    %cst_23 = arith.constant 1.000000e+00 : f32
    %46 = vector.broadcast %cst_23 : f32 to vector<8x128xf32>
    %47 = arith.addf %46, %45 : vector<8x128xf32>
    %48 = arith.divf %46, %47 : vector<8x128xf32>
    %49 = vector.extract_strided_slice %42 {offsets = [0, 128], sizes = [8, 128], strides = [1, 1]} : vector<8x512xf32> to vector<8x128xf32>
    %50 = arith.negf %49 : vector<8x128xf32>
    %51 = math.exp %50 : vector<8x128xf32>
    %cst_24 = arith.constant 1.000000e+00 : f32
    %52 = vector.broadcast %cst_24 : f32 to vector<8x128xf32>
    %53 = arith.addf %52, %51 : vector<8x128xf32>
    %54 = arith.divf %52, %53 : vector<8x128xf32>
    %55 = vector.extract_strided_slice %42 {offsets = [0, 256], sizes = [8, 128], strides = [1, 1]} : vector<8x512xf32> to vector<8x128xf32>
    %56 = math.tanh %55 : vector<8x128xf32>
    %57 = vector.extract_strided_slice %42 {offsets = [0, 384], sizes = [8, 128], strides = [1, 1]} : vector<8x512xf32> to vector<8x128xf32>
    %58 = arith.negf %57 : vector<8x128xf32>
    %59 = math.exp %58 : vector<8x128xf32>
    %cst_25 = arith.constant 1.000000e+00 : f32
    %60 = vector.broadcast %cst_25 : f32 to vector<8x128xf32>
    %61 = arith.addf %60, %59 : vector<8x128xf32>
    %62 = arith.divf %60, %61 : vector<8x128xf32>
    %63 = arith.mulf %54, %35 : vector<8x128xf32>
    %64 = arith.mulf %48, %56 : vector<8x128xf32>
    %65 = arith.addf %63, %64 : vector<8x128xf32>
    %66 = math.tanh %65 : vector<8x128xf32>
    %67 = arith.mulf %62, %66 : vector<8x128xf32>
    %c8_26 = arith.constant 8 : index
    %c0_27 = arith.constant 0 : index
    %68 = vector.load %arg11[%c8_26, %c0_27] : memref<64x128xf32, #tpu.memory_space<vmem>>, vector<8x128xf32>
    tpu.vector_store %arg11[%c8_26, %c0_27], %67 {strides = array<i32>} : memref<64x128xf32, #tpu.memory_space<vmem>>, vector<8x128xf32>,
    %c16 = arith.constant 16 : index
    %c0_28 = arith.constant 0 : index
    %69 = vector.load %arg10[%c16, %c0_28] : memref<64x512xf32, #tpu.memory_space<vmem>>, vector<8x512xf32>
    %c0_29 = arith.constant 0 : index
    %c0_30 = arith.constant 0 : index
    %70 = vector.load %arg2[%c0_29, %c0_30] : memref<128x512xf32, #tpu.memory_space<vmem>>, vector<128x512xf32>
    %cst_31 = arith.constant dense<0.000000e+00> : vector<8x512xf32>
    %71 = tpu.matmul %67, %70, %cst_31 {dimension_numbers = #tpu.dot_dimension_numbers<[1], [0], [0], [1], [0, 0, 1, 1], [], []>} : vector<8x128xf32>, vector<128x512xf32>, vector<8x512xf32> -> vector<8x512xf32>
    %72 = arith.addf %69, %71 : vector<8x512xf32>
    %73 = vector.extract_strided_slice %72 {offsets = [0, 0], sizes = [8, 128], strides = [1, 1]} : vector<8x512xf32> to vector<8x128xf32>
    %74 = arith.negf %73 : vector<8x128xf32>
    %75 = math.exp %74 : vector<8x128xf32>
    %cst_32 = arith.constant 1.000000e+00 : f32
    %76 = vector.broadcast %cst_32 : f32 to vector<8x128xf32>
    %77 = arith.addf %76, %75 : vector<8x128xf32>
    %78 = arith.divf %76, %77 : vector<8x128xf32>
    %79 = vector.extract_strided_slice %72 {offsets = [0, 128], sizes = [8, 128], strides = [1, 1]} : vector<8x512xf32> to vector<8x128xf32>
    %80 = arith.negf %79 : vector<8x128xf32>
    %81 = math.exp %80 : vector<8x128xf32>
    %cst_33 = arith.constant 1.000000e+00 : f32
    %82 = vector.broadcast %cst_33 : f32 to vector<8x128xf32>
    %83 = arith.addf %82, %81 : vector<8x128xf32>
    %84 = arith.divf %82, %83 : vector<8x128xf32>
    %85 = vector.extract_strided_slice %72 {offsets = [0, 256], sizes = [8, 128], strides = [1, 1]} : vector<8x512xf32> to vector<8x128xf32>
    %86 = math.tanh %85 : vector<8x128xf32>
    %87 = vector.extract_strided_slice %72 {offsets = [0, 384], sizes = [8, 128], strides = [1, 1]} : vector<8x512xf32> to vector<8x128xf32>
    %88 = arith.negf %87 : vector<8x128xf32>
    %89 = math.exp %88 : vector<8x128xf32>
    %cst_34 = arith.constant 1.000000e+00 : f32
    %90 = vector.broadcast %cst_34 : f32 to vector<8x128xf32>
    %91 = arith.addf %90, %89 : vector<8x128xf32>
    %92 = arith.divf %90, %91 : vector<8x128xf32>
    %93 = arith.mulf %84, %65 : vector<8x128xf32>
    %94 = arith.mulf %78, %86 : vector<8x128xf32>
    %95 = arith.addf %93, %94 : vector<8x128xf32>
    %96 = math.tanh %95 : vector<8x128xf32>
    %97 = arith.mulf %92, %96 : vector<8x128xf32>
    %c16_35 = arith.constant 16 : index
    %c0_36 = arith.constant 0 : index
    %98 = vector.load %arg11[%c16_35, %c0_36] : memref<64x128xf32, #tpu.memory_space<vmem>>, vector<8x128xf32>
    tpu.vector_store %arg11[%c16_35, %c0_36], %97 {strides = array<i32>} : memref<64x128xf32, #tpu.memory_space<vmem>>, vector<8x128xf32>,
    %c24 = arith.constant 24 : index
    %c0_37 = arith.constant 0 : index
    %99 = vector.load %arg10[%c24, %c0_37] : memref<64x512xf32, #tpu.memory_space<vmem>>, vector<8x512xf32>
    %c0_38 = arith.constant 0 : index
    %c0_39 = arith.constant 0 : index
    %100 = vector.load %arg2[%c0_38, %c0_39] : memref<128x512xf32, #tpu.memory_space<vmem>>, vector<128x512xf32>
    %cst_40 = arith.constant dense<0.000000e+00> : vector<8x512xf32>
    %101 = tpu.matmul %97, %100, %cst_40 {dimension_numbers = #tpu.dot_dimension_numbers<[1], [0], [0], [1], [0, 0, 1, 1], [], []>} : vector<8x128xf32>, vector<128x512xf32>, vector<8x512xf32> -> vector<8x512xf32>
    %102 = arith.addf %99, %101 : vector<8x512xf32>
    %103 = vector.extract_strided_slice %102 {offsets = [0, 0], sizes = [8, 128], strides = [1, 1]} : vector<8x512xf32> to vector<8x128xf32>
    %104 = arith.negf %103 : vector<8x128xf32>
    %105 = math.exp %104 : vector<8x128xf32>
    %cst_41 = arith.constant 1.000000e+00 : f32
    %106 = vector.broadcast %cst_41 : f32 to vector<8x128xf32>
    %107 = arith.addf %106, %105 : vector<8x128xf32>
    %108 = arith.divf %106, %107 : vector<8x128xf32>
    %109 = vector.extract_strided_slice %102 {offsets = [0, 128], sizes = [8, 128], strides = [1, 1]} : vector<8x512xf32> to vector<8x128xf32>
    %110 = arith.negf %109 : vector<8x128xf32>
    %111 = math.exp %110 : vector<8x128xf32>
    %cst_42 = arith.constant 1.000000e+00 : f32
    %112 = vector.broadcast %cst_42 : f32 to vector<8x128xf32>
    %113 = arith.addf %112, %111 : vector<8x128xf32>
    %114 = arith.divf %112, %113 : vector<8x128xf32>
    %115 = vector.extract_strided_slice %102 {offsets = [0, 256], sizes = [8, 128], strides = [1, 1]} : vector<8x512xf32> to vector<8x128xf32>
    %116 = math.tanh %115 : vector<8x128xf32>
    %117 = vector.extract_strided_slice %102 {offsets = [0, 384], sizes = [8, 128], strides = [1, 1]} : vector<8x512xf32> to vector<8x128xf32>
    %118 = arith.negf %117 : vector<8x128xf32>
    %119 = math.exp %118 : vector<8x128xf32>
    %cst_43 = arith.constant 1.000000e+00 : f32
    %120 = vector.broadcast %cst_43 : f32 to vector<8x128xf32>
    %121 = arith.addf %120, %119 : vector<8x128xf32>
    %122 = arith.divf %120, %121 : vector<8x128xf32>
    %123 = arith.mulf %114, %95 : vector<8x128xf32>
    %124 = arith.mulf %108, %116 : vector<8x128xf32>
    %125 = arith.addf %123, %124 : vector<8x128xf32>
    %126 = math.tanh %125 : vector<8x128xf32>
    %127 = arith.mulf %122, %126 : vector<8x128xf32>
    %c24_44 = arith.constant 24 : index
    %c0_45 = arith.constant 0 : index
    %128 = vector.load %arg11[%c24_44, %c0_45] : memref<64x128xf32, #tpu.memory_space<vmem>>, vector<8x128xf32>
    tpu.vector_store %arg11[%c24_44, %c0_45], %127 {strides = array<i32>} : memref<64x128xf32, #tpu.memory_space<vmem>>, vector<8x128xf32>,
    %c32 = arith.constant 32 : index
    %c0_46 = arith.constant 0 : index
    %129 = vector.load %arg10[%c32, %c0_46] : memref<64x512xf32, #tpu.memory_space<vmem>>, vector<8x512xf32>
    %c0_47 = arith.constant 0 : index
    %c0_48 = arith.constant 0 : index
    %130 = vector.load %arg2[%c0_47, %c0_48] : memref<128x512xf32, #tpu.memory_space<vmem>>, vector<128x512xf32>
    %cst_49 = arith.constant dense<0.000000e+00> : vector<8x512xf32>
    %131 = tpu.matmul %127, %130, %cst_49 {dimension_numbers = #tpu.dot_dimension_numbers<[1], [0], [0], [1], [0, 0, 1, 1], [], []>} : vector<8x128xf32>, vector<128x512xf32>, vector<8x512xf32> -> vector<8x512xf32>
    %132 = arith.addf %129, %131 : vector<8x512xf32>
    %133 = vector.extract_strided_slice %132 {offsets = [0, 0], sizes = [8, 128], strides = [1, 1]} : vector<8x512xf32> to vector<8x128xf32>
    %134 = arith.negf %133 : vector<8x128xf32>
    %135 = math.exp %134 : vector<8x128xf32>
    %cst_50 = arith.constant 1.000000e+00 : f32
    %136 = vector.broadcast %cst_50 : f32 to vector<8x128xf32>
    %137 = arith.addf %136, %135 : vector<8x128xf32>
    %138 = arith.divf %136, %137 : vector<8x128xf32>
    %139 = vector.extract_strided_slice %132 {offsets = [0, 128], sizes = [8, 128], strides = [1, 1]} : vector<8x512xf32> to vector<8x128xf32>
    %140 = arith.negf %139 : vector<8x128xf32>
    %141 = math.exp %140 : vector<8x128xf32>
    %cst_51 = arith.constant 1.000000e+00 : f32
    %142 = vector.broadcast %cst_51 : f32 to vector<8x128xf32>
    %143 = arith.addf %142, %141 : vector<8x128xf32>
    %144 = arith.divf %142, %143 : vector<8x128xf32>
    %145 = vector.extract_strided_slice %132 {offsets = [0, 256], sizes = [8, 128], strides = [1, 1]} : vector<8x512xf32> to vector<8x128xf32>
    %146 = math.tanh %145 : vector<8x128xf32>
    %147 = vector.extract_strided_slice %132 {offsets = [0, 384], sizes = [8, 128], strides = [1, 1]} : vector<8x512xf32> to vector<8x128xf32>
    %148 = arith.negf %147 : vector<8x128xf32>
    %149 = math.exp %148 : vector<8x128xf32>
    %cst_52 = arith.constant 1.000000e+00 : f32
    %150 = vector.broadcast %cst_52 : f32 to vector<8x128xf32>
    %151 = arith.addf %150, %149 : vector<8x128xf32>
    %152 = arith.divf %150, %151 : vector<8x128xf32>
    %153 = arith.mulf %144, %125 : vector<8x128xf32>
    %154 = arith.mulf %138, %146 : vector<8x128xf32>
    %155 = arith.addf %153, %154 : vector<8x128xf32>
    %156 = math.tanh %155 : vector<8x128xf32>
    %157 = arith.mulf %152, %156 : vector<8x128xf32>
    %c32_53 = arith.constant 32 : index
    %c0_54 = arith.constant 0 : index
    %158 = vector.load %arg11[%c32_53, %c0_54] : memref<64x128xf32, #tpu.memory_space<vmem>>, vector<8x128xf32>
    tpu.vector_store %arg11[%c32_53, %c0_54], %157 {strides = array<i32>} : memref<64x128xf32, #tpu.memory_space<vmem>>, vector<8x128xf32>,
    %c40 = arith.constant 40 : index
    %c0_55 = arith.constant 0 : index
    %159 = vector.load %arg10[%c40, %c0_55] : memref<64x512xf32, #tpu.memory_space<vmem>>, vector<8x512xf32>
    %c0_56 = arith.constant 0 : index
    %c0_57 = arith.constant 0 : index
    %160 = vector.load %arg2[%c0_56, %c0_57] : memref<128x512xf32, #tpu.memory_space<vmem>>, vector<128x512xf32>
    %cst_58 = arith.constant dense<0.000000e+00> : vector<8x512xf32>
    %161 = tpu.matmul %157, %160, %cst_58 {dimension_numbers = #tpu.dot_dimension_numbers<[1], [0], [0], [1], [0, 0, 1, 1], [], []>} : vector<8x128xf32>, vector<128x512xf32>, vector<8x512xf32> -> vector<8x512xf32>
    %162 = arith.addf %159, %161 : vector<8x512xf32>
    %163 = vector.extract_strided_slice %162 {offsets = [0, 0], sizes = [8, 128], strides = [1, 1]} : vector<8x512xf32> to vector<8x128xf32>
    %164 = arith.negf %163 : vector<8x128xf32>
    %165 = math.exp %164 : vector<8x128xf32>
    %cst_59 = arith.constant 1.000000e+00 : f32
    %166 = vector.broadcast %cst_59 : f32 to vector<8x128xf32>
    %167 = arith.addf %166, %165 : vector<8x128xf32>
    %168 = arith.divf %166, %167 : vector<8x128xf32>
    %169 = vector.extract_strided_slice %162 {offsets = [0, 128], sizes = [8, 128], strides = [1, 1]} : vector<8x512xf32> to vector<8x128xf32>
    %170 = arith.negf %169 : vector<8x128xf32>
    %171 = math.exp %170 : vector<8x128xf32>
    %cst_60 = arith.constant 1.000000e+00 : f32
    %172 = vector.broadcast %cst_60 : f32 to vector<8x128xf32>
    %173 = arith.addf %172, %171 : vector<8x128xf32>
    %174 = arith.divf %172, %173 : vector<8x128xf32>
    %175 = vector.extract_strided_slice %162 {offsets = [0, 256], sizes = [8, 128], strides = [1, 1]} : vector<8x512xf32> to vector<8x128xf32>
    %176 = math.tanh %175 : vector<8x128xf32>
    %177 = vector.extract_strided_slice %162 {offsets = [0, 384], sizes = [8, 128], strides = [1, 1]} : vector<8x512xf32> to vector<8x128xf32>
    %178 = arith.negf %177 : vector<8x128xf32>
    %179 = math.exp %178 : vector<8x128xf32>
    %cst_61 = arith.constant 1.000000e+00 : f32
    %180 = vector.broadcast %cst_61 : f32 to vector<8x128xf32>
    %181 = arith.addf %180, %179 : vector<8x128xf32>
    %182 = arith.divf %180, %181 : vector<8x128xf32>
    %183 = arith.mulf %174, %155 : vector<8x128xf32>
    %184 = arith.mulf %168, %176 : vector<8x128xf32>
    %185 = arith.addf %183, %184 : vector<8x128xf32>
    %186 = math.tanh %185 : vector<8x128xf32>
    %187 = arith.mulf %182, %186 : vector<8x128xf32>
    %c40_62 = arith.constant 40 : index
    %c0_63 = arith.constant 0 : index
    %188 = vector.load %arg11[%c40_62, %c0_63] : memref<64x128xf32, #tpu.memory_space<vmem>>, vector<8x128xf32>
    tpu.vector_store %arg11[%c40_62, %c0_63], %187 {strides = array<i32>} : memref<64x128xf32, #tpu.memory_space<vmem>>, vector<8x128xf32>,
    %c48 = arith.constant 48 : index
    %c0_64 = arith.constant 0 : index
    %189 = vector.load %arg10[%c48, %c0_64] : memref<64x512xf32, #tpu.memory_space<vmem>>, vector<8x512xf32>
    %c0_65 = arith.constant 0 : index
    %c0_66 = arith.constant 0 : index
    %190 = vector.load %arg2[%c0_65, %c0_66] : memref<128x512xf32, #tpu.memory_space<vmem>>, vector<128x512xf32>
    %cst_67 = arith.constant dense<0.000000e+00> : vector<8x512xf32>
    %191 = tpu.matmul %187, %190, %cst_67 {dimension_numbers = #tpu.dot_dimension_numbers<[1], [0], [0], [1], [0, 0, 1, 1], [], []>} : vector<8x128xf32>, vector<128x512xf32>, vector<8x512xf32> -> vector<8x512xf32>
    %192 = arith.addf %189, %191 : vector<8x512xf32>
    %193 = vector.extract_strided_slice %192 {offsets = [0, 0], sizes = [8, 128], strides = [1, 1]} : vector<8x512xf32> to vector<8x128xf32>
    %194 = arith.negf %193 : vector<8x128xf32>
    %195 = math.exp %194 : vector<8x128xf32>
    %cst_68 = arith.constant 1.000000e+00 : f32
    %196 = vector.broadcast %cst_68 : f32 to vector<8x128xf32>
    %197 = arith.addf %196, %195 : vector<8x128xf32>
    %198 = arith.divf %196, %197 : vector<8x128xf32>
    %199 = vector.extract_strided_slice %192 {offsets = [0, 128], sizes = [8, 128], strides = [1, 1]} : vector<8x512xf32> to vector<8x128xf32>
    %200 = arith.negf %199 : vector<8x128xf32>
    %201 = math.exp %200 : vector<8x128xf32>
    %cst_69 = arith.constant 1.000000e+00 : f32
    %202 = vector.broadcast %cst_69 : f32 to vector<8x128xf32>
    %203 = arith.addf %202, %201 : vector<8x128xf32>
    %204 = arith.divf %202, %203 : vector<8x128xf32>
    %205 = vector.extract_strided_slice %192 {offsets = [0, 256], sizes = [8, 128], strides = [1, 1]} : vector<8x512xf32> to vector<8x128xf32>
    %206 = math.tanh %205 : vector<8x128xf32>
    %207 = vector.extract_strided_slice %192 {offsets = [0, 384], sizes = [8, 128], strides = [1, 1]} : vector<8x512xf32> to vector<8x128xf32>
    %208 = arith.negf %207 : vector<8x128xf32>
    %209 = math.exp %208 : vector<8x128xf32>
    %cst_70 = arith.constant 1.000000e+00 : f32
    %210 = vector.broadcast %cst_70 : f32 to vector<8x128xf32>
    %211 = arith.addf %210, %209 : vector<8x128xf32>
    %212 = arith.divf %210, %211 : vector<8x128xf32>
    %213 = arith.mulf %204, %185 : vector<8x128xf32>
    %214 = arith.mulf %198, %206 : vector<8x128xf32>
    %215 = arith.addf %213, %214 : vector<8x128xf32>
    %216 = math.tanh %215 : vector<8x128xf32>
    %217 = arith.mulf %212, %216 : vector<8x128xf32>
    %c48_71 = arith.constant 48 : index
    %c0_72 = arith.constant 0 : index
    %218 = vector.load %arg11[%c48_71, %c0_72] : memref<64x128xf32, #tpu.memory_space<vmem>>, vector<8x128xf32>
    tpu.vector_store %arg11[%c48_71, %c0_72], %217 {strides = array<i32>} : memref<64x128xf32, #tpu.memory_space<vmem>>, vector<8x128xf32>,
    %c56 = arith.constant 56 : index
    %c0_73 = arith.constant 0 : index
    %219 = vector.load %arg10[%c56, %c0_73] : memref<64x512xf32, #tpu.memory_space<vmem>>, vector<8x512xf32>
    %c0_74 = arith.constant 0 : index
    %c0_75 = arith.constant 0 : index
    %220 = vector.load %arg2[%c0_74, %c0_75] : memref<128x512xf32, #tpu.memory_space<vmem>>, vector<128x512xf32>
    %cst_76 = arith.constant dense<0.000000e+00> : vector<8x512xf32>
    %221 = tpu.matmul %217, %220, %cst_76 {dimension_numbers = #tpu.dot_dimension_numbers<[1], [0], [0], [1], [0, 0, 1, 1], [], []>} : vector<8x128xf32>, vector<128x512xf32>, vector<8x512xf32> -> vector<8x512xf32>
    %222 = arith.addf %219, %221 : vector<8x512xf32>
    %223 = vector.extract_strided_slice %222 {offsets = [0, 0], sizes = [8, 128], strides = [1, 1]} : vector<8x512xf32> to vector<8x128xf32>
    %224 = arith.negf %223 : vector<8x128xf32>
    %225 = math.exp %224 : vector<8x128xf32>
    %cst_77 = arith.constant 1.000000e+00 : f32
    %226 = vector.broadcast %cst_77 : f32 to vector<8x128xf32>
    %227 = arith.addf %226, %225 : vector<8x128xf32>
    %228 = arith.divf %226, %227 : vector<8x128xf32>
    %229 = vector.extract_strided_slice %222 {offsets = [0, 128], sizes = [8, 128], strides = [1, 1]} : vector<8x512xf32> to vector<8x128xf32>
    %230 = arith.negf %229 : vector<8x128xf32>
    %231 = math.exp %230 : vector<8x128xf32>
    %cst_78 = arith.constant 1.000000e+00 : f32
    %232 = vector.broadcast %cst_78 : f32 to vector<8x128xf32>
    %233 = arith.addf %232, %231 : vector<8x128xf32>
    %234 = arith.divf %232, %233 : vector<8x128xf32>
    %235 = vector.extract_strided_slice %222 {offsets = [0, 256], sizes = [8, 128], strides = [1, 1]} : vector<8x512xf32> to vector<8x128xf32>
    %236 = math.tanh %235 : vector<8x128xf32>
    %237 = vector.extract_strided_slice %222 {offsets = [0, 384], sizes = [8, 128], strides = [1, 1]} : vector<8x512xf32> to vector<8x128xf32>
    %238 = arith.negf %237 : vector<8x128xf32>
    %239 = math.exp %238 : vector<8x128xf32>
    %cst_79 = arith.constant 1.000000e+00 : f32
    %240 = vector.broadcast %cst_79 : f32 to vector<8x128xf32>
    %241 = arith.addf %240, %239 : vector<8x128xf32>
    %242 = arith.divf %240, %241 : vector<8x128xf32>
    %243 = arith.mulf %234, %215 : vector<8x128xf32>
    %244 = arith.mulf %228, %236 : vector<8x128xf32>
    %245 = arith.addf %243, %244 : vector<8x128xf32>
    %246 = math.tanh %245 : vector<8x128xf32>
    %247 = arith.mulf %242, %246 : vector<8x128xf32>
    %c56_80 = arith.constant 56 : index
    %c0_81 = arith.constant 0 : index
    %248 = vector.load %arg11[%c56_80, %c0_81] : memref<64x128xf32, #tpu.memory_space<vmem>>, vector<8x128xf32>
    tpu.vector_store %arg11[%c56_80, %c0_81], %247 {strides = array<i32>} : memref<64x128xf32, #tpu.memory_space<vmem>>, vector<8x128xf32>,
    %c0_82 = arith.constant 0 : index
    %c0_83 = arith.constant 0 : index
    %249 = vector.load %arg11[%c0_82, %c0_83] : memref<64x128xf32, #tpu.memory_space<vmem>>, vector<64x128xf32>
    %c0_84 = arith.constant 0 : index
    %c0_85 = arith.constant 0 : index
    %250 = vector.load %arg4[%c0_84, %c0_85] : memref<128x512xf32, #tpu.memory_space<vmem>>, vector<128x512xf32>
    %cst_86 = arith.constant dense<0.000000e+00> : vector<64x512xf32>
    %251 = tpu.matmul %249, %250, %cst_86 {dimension_numbers = #tpu.dot_dimension_numbers<[1], [0], [0], [1], [0, 0, 1, 1], [], []>} : vector<64x128xf32>, vector<128x512xf32>, vector<64x512xf32> -> vector<64x512xf32>
    %c0_87 = arith.constant 0 : index
    %c0_88 = arith.constant 0 : index
    %252 = vector.load %arg6[%c0_87, %c0_88] : memref<1x512xf32, #tpu.memory_space<vmem>>, vector<1x512xf32>
    %253 = vector.broadcast %252 : vector<1x512xf32> to vector<64x512xf32>
    %254 = arith.addf %251, %253 : vector<64x512xf32>
    %c0_89 = arith.constant 0 : index
    %c0_90 = arith.constant 0 : index
    %255 = vector.load %arg10[%c0_89, %c0_90] : memref<64x512xf32, #tpu.memory_space<vmem>>, vector<64x512xf32>
    tpu.vector_store %arg10[%c0_89, %c0_90], %254 {strides = array<i32>} : memref<64x512xf32, #tpu.memory_space<vmem>>, vector<64x512xf32>,
    %cst_91 = arith.constant 0.000000e+00 : f32
    %256 = vector.broadcast %cst_91 : f32 to vector<8x128xf32>
    %cst_92 = arith.constant 0.000000e+00 : f32
    %257 = vector.broadcast %cst_92 : f32 to vector<8x128xf32>
    %c0_93 = arith.constant 0 : index
    %c0_94 = arith.constant 0 : index
    %258 = vector.load %arg10[%c0_93, %c0_94] : memref<64x512xf32, #tpu.memory_space<vmem>>, vector<8x512xf32>
    %c0_95 = arith.constant 0 : index
    %c0_96 = arith.constant 0 : index
    %259 = vector.load %arg5[%c0_95, %c0_96] : memref<128x512xf32, #tpu.memory_space<vmem>>, vector<128x512xf32>
    %cst_97 = arith.constant dense<0.000000e+00> : vector<8x512xf32>
    %260 = tpu.matmul %256, %259, %cst_97 {dimension_numbers = #tpu.dot_dimension_numbers<[1], [0], [0], [1], [0, 0, 1, 1], [], []>} : vector<8x128xf32>, vector<128x512xf32>, vector<8x512xf32> -> vector<8x512xf32>
    %261 = arith.addf %258, %260 : vector<8x512xf32>
    %262 = vector.extract_strided_slice %261 {offsets = [0, 0], sizes = [8, 128], strides = [1, 1]} : vector<8x512xf32> to vector<8x128xf32>
    %263 = arith.negf %262 : vector<8x128xf32>
    %264 = math.exp %263 : vector<8x128xf32>
    %cst_98 = arith.constant 1.000000e+00 : f32
    %265 = vector.broadcast %cst_98 : f32 to vector<8x128xf32>
    %266 = arith.addf %265, %264 : vector<8x128xf32>
    %267 = arith.divf %265, %266 : vector<8x128xf32>
    %268 = vector.extract_strided_slice %261 {offsets = [0, 128], sizes = [8, 128], strides = [1, 1]} : vector<8x512xf32> to vector<8x128xf32>
    %269 = arith.negf %268 : vector<8x128xf32>
    %270 = math.exp %269 : vector<8x128xf32>
    %cst_99 = arith.constant 1.000000e+00 : f32
    %271 = vector.broadcast %cst_99 : f32 to vector<8x128xf32>
    %272 = arith.addf %271, %270 : vector<8x128xf32>
    %273 = arith.divf %271, %272 : vector<8x128xf32>
    %274 = vector.extract_strided_slice %261 {offsets = [0, 256], sizes = [8, 128], strides = [1, 1]} : vector<8x512xf32> to vector<8x128xf32>
    %275 = math.tanh %274 : vector<8x128xf32>
    %276 = vector.extract_strided_slice %261 {offsets = [0, 384], sizes = [8, 128], strides = [1, 1]} : vector<8x512xf32> to vector<8x128xf32>
    %277 = arith.negf %276 : vector<8x128xf32>
    %278 = math.exp %277 : vector<8x128xf32>
    %cst_100 = arith.constant 1.000000e+00 : f32
    %279 = vector.broadcast %cst_100 : f32 to vector<8x128xf32>
    %280 = arith.addf %279, %278 : vector<8x128xf32>
    %281 = arith.divf %279, %280 : vector<8x128xf32>
    %282 = arith.mulf %273, %257 : vector<8x128xf32>
    %283 = arith.mulf %267, %275 : vector<8x128xf32>
    %284 = arith.addf %282, %283 : vector<8x128xf32>
    %285 = math.tanh %284 : vector<8x128xf32>
    %286 = arith.mulf %281, %285 : vector<8x128xf32>
    %c8_101 = arith.constant 8 : index
    %c0_102 = arith.constant 0 : index
    %287 = vector.load %arg10[%c8_101, %c0_102] : memref<64x512xf32, #tpu.memory_space<vmem>>, vector<8x512xf32>
    %c0_103 = arith.constant 0 : index
    %c0_104 = arith.constant 0 : index
    %288 = vector.load %arg5[%c0_103, %c0_104] : memref<128x512xf32, #tpu.memory_space<vmem>>, vector<128x512xf32>
    %cst_105 = arith.constant dense<0.000000e+00> : vector<8x512xf32>
    %289 = tpu.matmul %286, %288, %cst_105 {dimension_numbers = #tpu.dot_dimension_numbers<[1], [0], [0], [1], [0, 0, 1, 1], [], []>} : vector<8x128xf32>, vector<128x512xf32>, vector<8x512xf32> -> vector<8x512xf32>
    %290 = arith.addf %287, %289 : vector<8x512xf32>
    %291 = vector.extract_strided_slice %290 {offsets = [0, 0], sizes = [8, 128], strides = [1, 1]} : vector<8x512xf32> to vector<8x128xf32>
    %292 = arith.negf %291 : vector<8x128xf32>
    %293 = math.exp %292 : vector<8x128xf32>
    %cst_106 = arith.constant 1.000000e+00 : f32
    %294 = vector.broadcast %cst_106 : f32 to vector<8x128xf32>
    %295 = arith.addf %294, %293 : vector<8x128xf32>
    %296 = arith.divf %294, %295 : vector<8x128xf32>
    %297 = vector.extract_strided_slice %290 {offsets = [0, 128], sizes = [8, 128], strides = [1, 1]} : vector<8x512xf32> to vector<8x128xf32>
    %298 = arith.negf %297 : vector<8x128xf32>
    %299 = math.exp %298 : vector<8x128xf32>
    %cst_107 = arith.constant 1.000000e+00 : f32
    %300 = vector.broadcast %cst_107 : f32 to vector<8x128xf32>
    %301 = arith.addf %300, %299 : vector<8x128xf32>
    %302 = arith.divf %300, %301 : vector<8x128xf32>
    %303 = vector.extract_strided_slice %290 {offsets = [0, 256], sizes = [8, 128], strides = [1, 1]} : vector<8x512xf32> to vector<8x128xf32>
    %304 = math.tanh %303 : vector<8x128xf32>
    %305 = vector.extract_strided_slice %290 {offsets = [0, 384], sizes = [8, 128], strides = [1, 1]} : vector<8x512xf32> to vector<8x128xf32>
    %306 = arith.negf %305 : vector<8x128xf32>
    %307 = math.exp %306 : vector<8x128xf32>
    %cst_108 = arith.constant 1.000000e+00 : f32
    %308 = vector.broadcast %cst_108 : f32 to vector<8x128xf32>
    %309 = arith.addf %308, %307 : vector<8x128xf32>
    %310 = arith.divf %308, %309 : vector<8x128xf32>
    %311 = arith.mulf %302, %284 : vector<8x128xf32>
    %312 = arith.mulf %296, %304 : vector<8x128xf32>
    %313 = arith.addf %311, %312 : vector<8x128xf32>
    %314 = math.tanh %313 : vector<8x128xf32>
    %315 = arith.mulf %310, %314 : vector<8x128xf32>
    %c16_109 = arith.constant 16 : index
    %c0_110 = arith.constant 0 : index
    %316 = vector.load %arg10[%c16_109, %c0_110] : memref<64x512xf32, #tpu.memory_space<vmem>>, vector<8x512xf32>
    %c0_111 = arith.constant 0 : index
    %c0_112 = arith.constant 0 : index
    %317 = vector.load %arg5[%c0_111, %c0_112] : memref<128x512xf32, #tpu.memory_space<vmem>>, vector<128x512xf32>
    %cst_113 = arith.constant dense<0.000000e+00> : vector<8x512xf32>
    %318 = tpu.matmul %315, %317, %cst_113 {dimension_numbers = #tpu.dot_dimension_numbers<[1], [0], [0], [1], [0, 0, 1, 1], [], []>} : vector<8x128xf32>, vector<128x512xf32>, vector<8x512xf32> -> vector<8x512xf32>
    %319 = arith.addf %316, %318 : vector<8x512xf32>
    %320 = vector.extract_strided_slice %319 {offsets = [0, 0], sizes = [8, 128], strides = [1, 1]} : vector<8x512xf32> to vector<8x128xf32>
    %321 = arith.negf %320 : vector<8x128xf32>
    %322 = math.exp %321 : vector<8x128xf32>
    %cst_114 = arith.constant 1.000000e+00 : f32
    %323 = vector.broadcast %cst_114 : f32 to vector<8x128xf32>
    %324 = arith.addf %323, %322 : vector<8x128xf32>
    %325 = arith.divf %323, %324 : vector<8x128xf32>
    %326 = vector.extract_strided_slice %319 {offsets = [0, 128], sizes = [8, 128], strides = [1, 1]} : vector<8x512xf32> to vector<8x128xf32>
    %327 = arith.negf %326 : vector<8x128xf32>
    %328 = math.exp %327 : vector<8x128xf32>
    %cst_115 = arith.constant 1.000000e+00 : f32
    %329 = vector.broadcast %cst_115 : f32 to vector<8x128xf32>
    %330 = arith.addf %329, %328 : vector<8x128xf32>
    %331 = arith.divf %329, %330 : vector<8x128xf32>
    %332 = vector.extract_strided_slice %319 {offsets = [0, 256], sizes = [8, 128], strides = [1, 1]} : vector<8x512xf32> to vector<8x128xf32>
    %333 = math.tanh %332 : vector<8x128xf32>
    %334 = vector.extract_strided_slice %319 {offsets = [0, 384], sizes = [8, 128], strides = [1, 1]} : vector<8x512xf32> to vector<8x128xf32>
    %335 = arith.negf %334 : vector<8x128xf32>
    %336 = math.exp %335 : vector<8x128xf32>
    %cst_116 = arith.constant 1.000000e+00 : f32
    %337 = vector.broadcast %cst_116 : f32 to vector<8x128xf32>
    %338 = arith.addf %337, %336 : vector<8x128xf32>
    %339 = arith.divf %337, %338 : vector<8x128xf32>
    %340 = arith.mulf %331, %313 : vector<8x128xf32>
    %341 = arith.mulf %325, %333 : vector<8x128xf32>
    %342 = arith.addf %340, %341 : vector<8x128xf32>
    %343 = math.tanh %342 : vector<8x128xf32>
    %344 = arith.mulf %339, %343 : vector<8x128xf32>
    %c24_117 = arith.constant 24 : index
    %c0_118 = arith.constant 0 : index
    %345 = vector.load %arg10[%c24_117, %c0_118] : memref<64x512xf32, #tpu.memory_space<vmem>>, vector<8x512xf32>
    %c0_119 = arith.constant 0 : index
    %c0_120 = arith.constant 0 : index
    %346 = vector.load %arg5[%c0_119, %c0_120] : memref<128x512xf32, #tpu.memory_space<vmem>>, vector<128x512xf32>
    %cst_121 = arith.constant dense<0.000000e+00> : vector<8x512xf32>
    %347 = tpu.matmul %344, %346, %cst_121 {dimension_numbers = #tpu.dot_dimension_numbers<[1], [0], [0], [1], [0, 0, 1, 1], [], []>} : vector<8x128xf32>, vector<128x512xf32>, vector<8x512xf32> -> vector<8x512xf32>
    %348 = arith.addf %345, %347 : vector<8x512xf32>
    %349 = vector.extract_strided_slice %348 {offsets = [0, 0], sizes = [8, 128], strides = [1, 1]} : vector<8x512xf32> to vector<8x128xf32>
    %350 = arith.negf %349 : vector<8x128xf32>
    %351 = math.exp %350 : vector<8x128xf32>
    %cst_122 = arith.constant 1.000000e+00 : f32
    %352 = vector.broadcast %cst_122 : f32 to vector<8x128xf32>
    %353 = arith.addf %352, %351 : vector<8x128xf32>
    %354 = arith.divf %352, %353 : vector<8x128xf32>
    %355 = vector.extract_strided_slice %348 {offsets = [0, 128], sizes = [8, 128], strides = [1, 1]} : vector<8x512xf32> to vector<8x128xf32>
    %356 = arith.negf %355 : vector<8x128xf32>
    %357 = math.exp %356 : vector<8x128xf32>
    %cst_123 = arith.constant 1.000000e+00 : f32
    %358 = vector.broadcast %cst_123 : f32 to vector<8x128xf32>
    %359 = arith.addf %358, %357 : vector<8x128xf32>
    %360 = arith.divf %358, %359 : vector<8x128xf32>
    %361 = vector.extract_strided_slice %348 {offsets = [0, 256], sizes = [8, 128], strides = [1, 1]} : vector<8x512xf32> to vector<8x128xf32>
    %362 = math.tanh %361 : vector<8x128xf32>
    %363 = vector.extract_strided_slice %348 {offsets = [0, 384], sizes = [8, 128], strides = [1, 1]} : vector<8x512xf32> to vector<8x128xf32>
    %364 = arith.negf %363 : vector<8x128xf32>
    %365 = math.exp %364 : vector<8x128xf32>
    %cst_124 = arith.constant 1.000000e+00 : f32
    %366 = vector.broadcast %cst_124 : f32 to vector<8x128xf32>
    %367 = arith.addf %366, %365 : vector<8x128xf32>
    %368 = arith.divf %366, %367 : vector<8x128xf32>
    %369 = arith.mulf %360, %342 : vector<8x128xf32>
    %370 = arith.mulf %354, %362 : vector<8x128xf32>
    %371 = arith.addf %369, %370 : vector<8x128xf32>
    %372 = math.tanh %371 : vector<8x128xf32>
    %373 = arith.mulf %368, %372 : vector<8x128xf32>
    %c32_125 = arith.constant 32 : index
    %c0_126 = arith.constant 0 : index
    %374 = vector.load %arg10[%c32_125, %c0_126] : memref<64x512xf32, #tpu.memory_space<vmem>>, vector<8x512xf32>
    %c0_127 = arith.constant 0 : index
    %c0_128 = arith.constant 0 : index
    %375 = vector.load %arg5[%c0_127, %c0_128] : memref<128x512xf32, #tpu.memory_space<vmem>>, vector<128x512xf32>
    %cst_129 = arith.constant dense<0.000000e+00> : vector<8x512xf32>
    %376 = tpu.matmul %373, %375, %cst_129 {dimension_numbers = #tpu.dot_dimension_numbers<[1], [0], [0], [1], [0, 0, 1, 1], [], []>} : vector<8x128xf32>, vector<128x512xf32>, vector<8x512xf32> -> vector<8x512xf32>
    %377 = arith.addf %374, %376 : vector<8x512xf32>
    %378 = vector.extract_strided_slice %377 {offsets = [0, 0], sizes = [8, 128], strides = [1, 1]} : vector<8x512xf32> to vector<8x128xf32>
    %379 = arith.negf %378 : vector<8x128xf32>
    %380 = math.exp %379 : vector<8x128xf32>
    %cst_130 = arith.constant 1.000000e+00 : f32
    %381 = vector.broadcast %cst_130 : f32 to vector<8x128xf32>
    %382 = arith.addf %381, %380 : vector<8x128xf32>
    %383 = arith.divf %381, %382 : vector<8x128xf32>
    %384 = vector.extract_strided_slice %377 {offsets = [0, 128], sizes = [8, 128], strides = [1, 1]} : vector<8x512xf32> to vector<8x128xf32>
    %385 = arith.negf %384 : vector<8x128xf32>
    %386 = math.exp %385 : vector<8x128xf32>
    %cst_131 = arith.constant 1.000000e+00 : f32
    %387 = vector.broadcast %cst_131 : f32 to vector<8x128xf32>
    %388 = arith.addf %387, %386 : vector<8x128xf32>
    %389 = arith.divf %387, %388 : vector<8x128xf32>
    %390 = vector.extract_strided_slice %377 {offsets = [0, 256], sizes = [8, 128], strides = [1, 1]} : vector<8x512xf32> to vector<8x128xf32>
    %391 = math.tanh %390 : vector<8x128xf32>
    %392 = vector.extract_strided_slice %377 {offsets = [0, 384], sizes = [8, 128], strides = [1, 1]} : vector<8x512xf32> to vector<8x128xf32>
    %393 = arith.negf %392 : vector<8x128xf32>
    %394 = math.exp %393 : vector<8x128xf32>
    %cst_132 = arith.constant 1.000000e+00 : f32
    %395 = vector.broadcast %cst_132 : f32 to vector<8x128xf32>
    %396 = arith.addf %395, %394 : vector<8x128xf32>
    %397 = arith.divf %395, %396 : vector<8x128xf32>
    %398 = arith.mulf %389, %371 : vector<8x128xf32>
    %399 = arith.mulf %383, %391 : vector<8x128xf32>
    %400 = arith.addf %398, %399 : vector<8x128xf32>
    %401 = math.tanh %400 : vector<8x128xf32>
    %402 = arith.mulf %397, %401 : vector<8x128xf32>
    %c40_133 = arith.constant 40 : index
    %c0_134 = arith.constant 0 : index
    %403 = vector.load %arg10[%c40_133, %c0_134] : memref<64x512xf32, #tpu.memory_space<vmem>>, vector<8x512xf32>
    %c0_135 = arith.constant 0 : index
    %c0_136 = arith.constant 0 : index
    %404 = vector.load %arg5[%c0_135, %c0_136] : memref<128x512xf32, #tpu.memory_space<vmem>>, vector<128x512xf32>
    %cst_137 = arith.constant dense<0.000000e+00> : vector<8x512xf32>
    %405 = tpu.matmul %402, %404, %cst_137 {dimension_numbers = #tpu.dot_dimension_numbers<[1], [0], [0], [1], [0, 0, 1, 1], [], []>} : vector<8x128xf32>, vector<128x512xf32>, vector<8x512xf32> -> vector<8x512xf32>
    %406 = arith.addf %403, %405 : vector<8x512xf32>
    %407 = vector.extract_strided_slice %406 {offsets = [0, 0], sizes = [8, 128], strides = [1, 1]} : vector<8x512xf32> to vector<8x128xf32>
    %408 = arith.negf %407 : vector<8x128xf32>
    %409 = math.exp %408 : vector<8x128xf32>
    %cst_138 = arith.constant 1.000000e+00 : f32
    %410 = vector.broadcast %cst_138 : f32 to vector<8x128xf32>
    %411 = arith.addf %410, %409 : vector<8x128xf32>
    %412 = arith.divf %410, %411 : vector<8x128xf32>
    %413 = vector.extract_strided_slice %406 {offsets = [0, 128], sizes = [8, 128], strides = [1, 1]} : vector<8x512xf32> to vector<8x128xf32>
    %414 = arith.negf %413 : vector<8x128xf32>
    %415 = math.exp %414 : vector<8x128xf32>
    %cst_139 = arith.constant 1.000000e+00 : f32
    %416 = vector.broadcast %cst_139 : f32 to vector<8x128xf32>
    %417 = arith.addf %416, %415 : vector<8x128xf32>
    %418 = arith.divf %416, %417 : vector<8x128xf32>
    %419 = vector.extract_strided_slice %406 {offsets = [0, 256], sizes = [8, 128], strides = [1, 1]} : vector<8x512xf32> to vector<8x128xf32>
    %420 = math.tanh %419 : vector<8x128xf32>
    %421 = vector.extract_strided_slice %406 {offsets = [0, 384], sizes = [8, 128], strides = [1, 1]} : vector<8x512xf32> to vector<8x128xf32>
    %422 = arith.negf %421 : vector<8x128xf32>
    %423 = math.exp %422 : vector<8x128xf32>
    %cst_140 = arith.constant 1.000000e+00 : f32
    %424 = vector.broadcast %cst_140 : f32 to vector<8x128xf32>
    %425 = arith.addf %424, %423 : vector<8x128xf32>
    %426 = arith.divf %424, %425 : vector<8x128xf32>
    %427 = arith.mulf %418, %400 : vector<8x128xf32>
    %428 = arith.mulf %412, %420 : vector<8x128xf32>
    %429 = arith.addf %427, %428 : vector<8x128xf32>
    %430 = math.tanh %429 : vector<8x128xf32>
    %431 = arith.mulf %426, %430 : vector<8x128xf32>
    %c48_141 = arith.constant 48 : index
    %c0_142 = arith.constant 0 : index
    %432 = vector.load %arg10[%c48_141, %c0_142] : memref<64x512xf32, #tpu.memory_space<vmem>>, vector<8x512xf32>
    %c0_143 = arith.constant 0 : index
    %c0_144 = arith.constant 0 : index
    %433 = vector.load %arg5[%c0_143, %c0_144] : memref<128x512xf32, #tpu.memory_space<vmem>>, vector<128x512xf32>
    %cst_145 = arith.constant dense<0.000000e+00> : vector<8x512xf32>
    %434 = tpu.matmul %431, %433, %cst_145 {dimension_numbers = #tpu.dot_dimension_numbers<[1], [0], [0], [1], [0, 0, 1, 1], [], []>} : vector<8x128xf32>, vector<128x512xf32>, vector<8x512xf32> -> vector<8x512xf32>
    %435 = arith.addf %432, %434 : vector<8x512xf32>
    %436 = vector.extract_strided_slice %435 {offsets = [0, 0], sizes = [8, 128], strides = [1, 1]} : vector<8x512xf32> to vector<8x128xf32>
    %437 = arith.negf %436 : vector<8x128xf32>
    %438 = math.exp %437 : vector<8x128xf32>
    %cst_146 = arith.constant 1.000000e+00 : f32
    %439 = vector.broadcast %cst_146 : f32 to vector<8x128xf32>
    %440 = arith.addf %439, %438 : vector<8x128xf32>
    %441 = arith.divf %439, %440 : vector<8x128xf32>
    %442 = vector.extract_strided_slice %435 {offsets = [0, 128], sizes = [8, 128], strides = [1, 1]} : vector<8x512xf32> to vector<8x128xf32>
    %443 = arith.negf %442 : vector<8x128xf32>
    %444 = math.exp %443 : vector<8x128xf32>
    %cst_147 = arith.constant 1.000000e+00 : f32
    %445 = vector.broadcast %cst_147 : f32 to vector<8x128xf32>
    %446 = arith.addf %445, %444 : vector<8x128xf32>
    %447 = arith.divf %445, %446 : vector<8x128xf32>
    %448 = vector.extract_strided_slice %435 {offsets = [0, 256], sizes = [8, 128], strides = [1, 1]} : vector<8x512xf32> to vector<8x128xf32>
    %449 = math.tanh %448 : vector<8x128xf32>
    %450 = vector.extract_strided_slice %435 {offsets = [0, 384], sizes = [8, 128], strides = [1, 1]} : vector<8x512xf32> to vector<8x128xf32>
    %451 = arith.negf %450 : vector<8x128xf32>
    %452 = math.exp %451 : vector<8x128xf32>
    %cst_148 = arith.constant 1.000000e+00 : f32
    %453 = vector.broadcast %cst_148 : f32 to vector<8x128xf32>
    %454 = arith.addf %453, %452 : vector<8x128xf32>
    %455 = arith.divf %453, %454 : vector<8x128xf32>
    %456 = arith.mulf %447, %429 : vector<8x128xf32>
    %457 = arith.mulf %441, %449 : vector<8x128xf32>
    %458 = arith.addf %456, %457 : vector<8x128xf32>
    %459 = math.tanh %458 : vector<8x128xf32>
    %460 = arith.mulf %455, %459 : vector<8x128xf32>
    %c56_149 = arith.constant 56 : index
    %c0_150 = arith.constant 0 : index
    %461 = vector.load %arg10[%c56_149, %c0_150] : memref<64x512xf32, #tpu.memory_space<vmem>>, vector<8x512xf32>
    %c0_151 = arith.constant 0 : index
    %c0_152 = arith.constant 0 : index
    %462 = vector.load %arg5[%c0_151, %c0_152] : memref<128x512xf32, #tpu.memory_space<vmem>>, vector<128x512xf32>
    %cst_153 = arith.constant dense<0.000000e+00> : vector<8x512xf32>
    %463 = tpu.matmul %460, %462, %cst_153 {dimension_numbers = #tpu.dot_dimension_numbers<[1], [0], [0], [1], [0, 0, 1, 1], [], []>} : vector<8x128xf32>, vector<128x512xf32>, vector<8x512xf32> -> vector<8x512xf32>
    %464 = arith.addf %461, %463 : vector<8x512xf32>
    %465 = vector.extract_strided_slice %464 {offsets = [0, 0], sizes = [8, 128], strides = [1, 1]} : vector<8x512xf32> to vector<8x128xf32>
    %466 = arith.negf %465 : vector<8x128xf32>
    %467 = math.exp %466 : vector<8x128xf32>
    %cst_154 = arith.constant 1.000000e+00 : f32
    %468 = vector.broadcast %cst_154 : f32 to vector<8x128xf32>
    %469 = arith.addf %468, %467 : vector<8x128xf32>
    %470 = arith.divf %468, %469 : vector<8x128xf32>
    %471 = vector.extract_strided_slice %464 {offsets = [0, 128], sizes = [8, 128], strides = [1, 1]} : vector<8x512xf32> to vector<8x128xf32>
    %472 = arith.negf %471 : vector<8x128xf32>
    %473 = math.exp %472 : vector<8x128xf32>
    %cst_155 = arith.constant 1.000000e+00 : f32
    %474 = vector.broadcast %cst_155 : f32 to vector<8x128xf32>
    %475 = arith.addf %474, %473 : vector<8x128xf32>
    %476 = arith.divf %474, %475 : vector<8x128xf32>
    %477 = vector.extract_strided_slice %464 {offsets = [0, 256], sizes = [8, 128], strides = [1, 1]} : vector<8x512xf32> to vector<8x128xf32>
    %478 = math.tanh %477 : vector<8x128xf32>
    %479 = vector.extract_strided_slice %464 {offsets = [0, 384], sizes = [8, 128], strides = [1, 1]} : vector<8x512xf32> to vector<8x128xf32>
    %480 = arith.negf %479 : vector<8x128xf32>
    %481 = math.exp %480 : vector<8x128xf32>
    %cst_156 = arith.constant 1.000000e+00 : f32
    %482 = vector.broadcast %cst_156 : f32 to vector<8x128xf32>
    %483 = arith.addf %482, %481 : vector<8x128xf32>
    %484 = arith.divf %482, %483 : vector<8x128xf32>
    %485 = arith.mulf %476, %458 : vector<8x128xf32>
    %486 = arith.mulf %470, %478 : vector<8x128xf32>
    %487 = arith.addf %485, %486 : vector<8x128xf32>
    %488 = math.tanh %487 : vector<8x128xf32>
    %489 = arith.mulf %484, %488 : vector<8x128xf32>
    %c0_157 = arith.constant 0 : index
    %c0_158 = arith.constant 0 : index
    %490 = vector.load %arg7[%c0_157, %c0_158] : memref<128x4xf32, #tpu.memory_space<vmem>>, vector<128x4xf32>
    %cst_159 = arith.constant dense<0.000000e+00> : vector<8x4xf32>
    %491 = tpu.matmul %489, %490, %cst_159 {dimension_numbers = #tpu.dot_dimension_numbers<[1], [0], [0], [1], [0, 0, 1, 1], [], []>} : vector<8x128xf32>, vector<128x4xf32>, vector<8x4xf32> -> vector<8x4xf32>
    %c0_160 = arith.constant 0 : index
    %c0_161 = arith.constant 0 : index
    %492 = vector.load %arg8[%c0_160, %c0_161] : memref<1x4xf32, #tpu.memory_space<vmem>>, vector<1x4xf32>
    %493 = vector.broadcast %492 : vector<1x4xf32> to vector<8x4xf32>
    %494 = arith.addf %491, %493 : vector<8x4xf32>
    %c0_162 = arith.constant 0 : index
    %c0_163 = arith.constant 0 : index
    %495 = vector.load %arg9[%c0_162, %c0_163] : memref<8x4xf32, #tpu.memory_space<vmem>>, vector<8x4xf32>
    tpu.vector_store %arg9[%c0_162, %c0_163], %494 {strides = array<i32>} : memref<8x4xf32, #tpu.memory_space<vmem>>, vector<8x4xf32>,
    return
  }
}

</mosaic_0001>

<llo_original>
// kernel: tpu_custom_call.1
$region0: #{tpu_custom_call.1}
  #allocation0 [shape = 'u32[]', space=smem, size = 0x4, offset = 0x4, fixed_abs, tag = 'smem constant byte address 0x4 - core index']
  #allocation1 [shape = 'u32[144,128]{1,0:T(1,128)}', space=vmem, size = 0x12000, scoped, tag = 'internal scratch']
  #allocation2 [shape = 'f32[64,512]{1,0:T(8,128)}', space=vmem, size = 0x20000, scoped, tag = 'scratch operand']
  #allocation3 [shape = 'f32[64,128]{1,0:T(8,128)}', space=vmem, size = 0x8000, scoped, tag = 'scratch operand']
  %s0 = inlined_call_operand.vmem [shape: f32[64,16], index: 0, kind: input, shape index: {}]
  %s1 = inlined_call_operand.vmem [shape: f32[16,512], index: 1, kind: input, shape index: {}]
  %s2 = inlined_call_operand.hbm [shape: f32[128,512], index: 2, kind: input, shape index: {}]
  %s3 = inlined_call_operand.vmem [shape: f32[1,512], index: 3, kind: input, shape index: {}]
  %s4 = inlined_call_operand.hbm [shape: f32[128,512], index: 4, kind: input, shape index: {}]
  %s5 = inlined_call_operand.hbm [shape: f32[128,512], index: 5, kind: input, shape index: {}]
  %s6 = inlined_call_operand.vmem [shape: f32[1,512], index: 6, kind: input, shape index: {}]
  %s7 = inlined_call_operand.vmem [shape: f32[128,4], index: 7, kind: input, shape index: {}]
  %s8 = inlined_call_operand.vmem [shape: f32[1,4], index: 8, kind: input, shape index: {}]
  %s9 = inlined_call_operand.vmem [shape: f32[8,4], index: 9, kind: output, shape index: {}]
  %s10 = sld [smem:[#allocation0]]
  $region58: #{tpu_custom_call.1} parent=0
    _
  %s12 = ssub.s32 1, %s10
  %s13 = scalar_select 0, %s12, %s10
  $region1: #{tpu_custom_call.1} parent=0
    #allocation4 [shape = 'u8[262144]{0}', space=vmem, size = 0x40000, scoped, tag = 'input window, operand 2, single buffered']
    #allocation5 [shape = 's32[1]{0}', space=sflag, size = 0x4, scoped, tag = 'scoped memory for tpu_custom_call.1']
    #allocation6 [shape = 'u8[262144]{0}', space=vmem, size = 0x40000, scoped, tag = 'input window, operand 4, single buffered']
    #allocation7 [shape = 's32[1]{0}', space=sflag, size = 0x4, scoped, tag = 'scoped memory for tpu_custom_call.1']
    #allocation8 [shape = 'u8[262144]{0}', space=vmem, size = 0x40000, scoped, tag = 'input window, operand 5, single buffered']
    %14 = vsyncpa [#allocation5], 0
    %15 = vsyncpa [#allocation7], 0
    // Predicated region
    $region2: #{tpu_custom_call.1} parent=1 // pred_check
      _
    $region3: #{tpu_custom_call.1} parent=1 // pred_check_branch
      %17 = sbr.rel (0) target = $region5
    $region4: #{tpu_custom_call.1} parent=1 // pred_region
      _
    $region5: #{tpu_custom_call.1} parent=1 // pred_fallthru
      _
    // Predicated region
    $region6: #{tpu_custom_call.1} parent=1 // pred_check
      _
    $region7: #{tpu_custom_call.1} parent=1 // pred_check_branch
      %19 = sbr.rel (0) target = $region9
    $region8: #{tpu_custom_call.1} parent=1 // pred_region
      _
    $region9: #{tpu_custom_call.1} parent=1 // pred_fallthru
      _
    // Predicated region
    $region10: #{tpu_custom_call.1} parent=1 // pred_check
      _
    $region11: #{tpu_custom_call.1} parent=1 // pred_check_branch
      %21 = sbr.rel (0) target = $region13
    $region12: #{tpu_custom_call.1} parent=1 // pred_region
      %s23 = ssub.s32 8192, 8192
      %24 = vsyncadd [#allocation5], %s23
      %s25 = sshll.u32 [#allocation4], 4
      %s26 = int_to_ptr.vmem [resolvable:$true] %s25
      %31 = dma.hbm_to_vmem [thread:$0]  %s2, 8192, %s26, [#allocation5], 512, 512, 32
    $region13: #{tpu_custom_call.1} parent=1 // pred_fallthru
      _
    // Predicated region
    $region14: #{tpu_custom_call.1} parent=1 // pred_check
      _
    $region15: #{tpu_custom_call.1} parent=1 // pred_check_branch
      %33 = sbr.rel (0) target = $region17
    $region16: #{tpu_custom_call.1} parent=1 // pred_region
      _
    $region17: #{tpu_custom_call.1} parent=1 // pred_fallthru
      _
    // Predicated region
    $region18: #{tpu_custom_call.1} parent=1 // pred_check
      _
    $region19: #{tpu_custom_call.1} parent=1 // pred_check_branch
      %35 = sbr.rel (0) target = $region21
    $region20: #{tpu_custom_call.1} parent=1 // pred_region
      %s37 = ssub.s32 8192, 8192
      %38 = vsyncadd [#allocation7], %s37
      %s39 = sshll.u32 [#allocation6], 4
      %s40 = int_to_ptr.vmem [resolvable:$true] %s39
      %45 = dma.hbm_to_vmem [thread:$0]  %s4, 8192, %s40, [#allocation7], 512, 512, 32
    $region21: #{tpu_custom_call.1} parent=1 // pred_fallthru
      _
    // Predicated region
    $region22: #{tpu_custom_call.1} parent=1 // pred_check
      _
    $region23: #{tpu_custom_call.1} parent=1 // pred_check_branch
      %47 = sbr.rel (0) target = $region25
    $region24: #{tpu_custom_call.1} parent=1 // pred_region
      %s49 = ssub.s32 8192, 8192
      %50 = vsyncadd [#allocation7], %s49
      %s51 = sshll.u32 [#allocation8], 4
      %s52 = int_to_ptr.vmem [resolvable:$true] %s51
      %57 = dma.hbm_to_vmem [thread:$0]  %s5, 8192, %s52, [#allocation7], 512, 512, 32
    $region25: #{tpu_custom_call.1} parent=1 // pred_fallthru
      _
    // Predicated region
    $region26: #{tpu_custom_call.1} parent=1 // pred_check
      _
    $region27: #{tpu_custom_call.1} parent=1 // pred_check_branch
      %59 = sbr.rel (0) target = $region29
    $region28: #{tpu_custom_call.1} parent=1 // pred_region
      _
    $region29: #{tpu_custom_call.1} parent=1 // pred_fallthru
      _
    // Predicated region
    $region30: #{tpu_custom_call.1} parent=1 // pred_check
      _
    $region31: #{tpu_custom_call.1} parent=1 // pred_check_branch
      %61 = sbr.rel (0) target = $region33
    $region32: #{tpu_custom_call.1} parent=1 // pred_region
      _
    $region33: #{tpu_custom_call.1} parent=1 // pred_fallthru
      _
    // Predicated region
    $region34: #{tpu_custom_call.1} parent=1 // pred_check
      _
    $region35: #{tpu_custom_call.1} parent=1 // pred_check_branch
      %63 = sbr.rel (0) target = $region37
    $region36: #{tpu_custom_call.1} parent=1 // pred_region
      _
    $region37: #{tpu_custom_call.1} parent=1 // pred_fallthru
      _
    // Predicated region
    $region38: #{tpu_custom_call.1} parent=1 // pred_check
      _
    $region39: #{tpu_custom_call.1} parent=1 // pred_check_branch
      %65 = sbr.rel (0) target = $region41
    $region40: #{tpu_custom_call.1} parent=1 // pred_region
      %66 = dma.done [#allocation5], 8192
    $region41: #{tpu_custom_call.1} parent=1 // pred_fallthru
      _
    // Predicated region
    $region42: #{tpu_custom_call.1} parent=1 // pred_check
      _
    $region43: #{tpu_custom_call.1} parent=1 // pred_check_branch
      %68 = sbr.rel (0) target = $region45
    $region44: #{tpu_custom_call.1} parent=1 // pred_region
      %69 = dma.done [#allocation7], 8192
    $region45: #{tpu_custom_call.1} parent=1 // pred_fallthru
      _
    // Predicated region
    $region46: #{tpu_custom_call.1} parent=1 // pred_check
      _
    $region47: #{tpu_custom_call.1} parent=1 // pred_check_branch
      %71 = sbr.rel (0) target = $region49
    $region48: #{tpu_custom_call.1} parent=1 // pred_region
      %72 = dma.done [#allocation7], 8192
    $region49: #{tpu_custom_call.1} parent=1 // pred_fallthru
      _
    %v73 = vld [vmem:[%s0] sm:$0xff]
    %v74 = vld [vmem:[%s0 + $0x8] sm:$0xff]
    %v75 = vld [vmem:[%s0 + $0x10] sm:$0xff]
    %v76 = vld [vmem:[%s0 + $0x18] sm:$0xff]
    %v77 = vld [vmem:[%s0 + $0x20] sm:$0xff]
    %v78 = vld [vmem:[%s0 + $0x28] sm:$0xff]
    %v79 = vld [vmem:[%s0 + $0x30] sm:$0xff]
    %v80 = vld [vmem:[%s0 + $0x38] sm:$0xff]
    %v81 = vld [vmem:[%s1] sm:$0xff]
    %v82 = vld [vmem:[%s1 + $0x8] sm:$0xff]
    %v83 = vld [vmem:[%s1 + $0x10] sm:$0xff]
    %v84 = vld [vmem:[%s1 + $0x18] sm:$0xff]
    %v85 = vld [vmem:[%s1 + $0x20] sm:$0xff]
    %v86 = vld [vmem:[%s1 + $0x28] sm:$0xff]
    %v87 = vld [vmem:[%s1 + $0x30] sm:$0xff]
    %v88 = vld [vmem:[%s1 + $0x38] sm:$0xff]
    %v89 = vld [vmem:[%s3] sm:$0xf]
    %v91 = vlaneseq
    %v92 = vshrl.u32 %v91, 7
    %v93 = vsub.s32 0, %v92
    %v94 = vrot.slane %v89, %v93
    %v95 = vlaneseq
    %v96 = vshrl.u32 %v95, 7
    %v97 = vsub.s32 1, %v96
    %v98 = vrot.slane %v89, %v97
    %v99 = vlaneseq
    %v100 = vshrl.u32 %v99, 7
    %v101 = vsub.s32 2, %v100
    %v102 = vrot.slane %v89, %v101
    %v103 = vlaneseq
    %v104 = vshrl.u32 %v103, 7
    %v105 = vsub.s32 3, %v104
    %v106 = vrot.slane %v89, %v105
    %vm111 = vcmask 130048
    %v113 = vsel %vm111, %v73, 0
    %v116 = vsel %vm111, %v74, 0
    %v119 = vsel %vm111, %v75, 0
    %v122 = vsel %vm111, %v76, 0
    %v125 = vsel %vm111, %v77, 0
    %v128 = vsel %vm111, %v78, 0
    %v131 = vsel %vm111, %v79, 0
    %v134 = vsel %vm111, %v80, 0
    %136 = vmatprep.subr.mxu0 %v82
    %137 = vmatpush1.msra.mxu0 %v81
    %138 = vmatprep.subr.mxu0 %v86
    %139 = vmatpush1.msra.mxu0 %v85
    %140 = vmatprep.subr.mxu0 0.0
    %141 = vmatpush1.msra.mxu0 0.0
    %142 = vmatprep.subr.mxu0 0.0
    %143 = vmatpush1.msra.mxu0 0.0
    %144 = vmatprep.subr.mxu0 0.0
    %145 = vmatpush1.msra.mxu0 0.0
    %146 = vmatprep.subr.mxu0 0.0
    %147 = vmatpush1.msra.mxu0 0.0
    %148 = vmatprep.subr.mxu0 0.0
    %149 = vmatpush1.msra.mxu0 0.0
    %150 = vmatprep.subr.mxu0 0.0
    %151 = vmatpush1.msra.mxu0 0.0
    %152 = vmatprep.subr.mxu0 0.0
    %153 = vmatpush1.msra.mxu0 0.0
    %154 = vmatprep.subr.mxu0 0.0
    %155 = vmatpush1.msra.mxu0 0.0
    %156 = vmatprep.subr.mxu0 0.0
    %157 = vmatpush1.msra.mxu0 0.0
    %158 = vmatprep.subr.mxu0 0.0
    %159 = vmatpush1.msra.mxu0 0.0
    %160 = vmatprep.subr.mxu0 0.0
    %161 = vmatpush1.msra.mxu0 0.0
    %162 = vmatprep.subr.mxu0 0.0
    %163 = vmatpush1.msra.mxu0 0.0
    %164 = vmatprep.subr.mxu0 0.0
    %165 = vmatpush1.msra.mxu0 0.0
    %166 = vmatprep.subr.mxu0 0.0
    %167 = vmatpush1.msra.mxu0 0.0
    %168 = vmatprep.subr.mxu0 0.0
    %169 = vmatpush1.msra.mxu0 0.0
    %170 = vmatprep.subr.mxu0 0.0
    %171 = vmatpush1.msra.mxu0 0.0
    %172 = vmatprep.subr.mxu0 0.0
    %173 = vmatpush1.msra.mxu0 0.0
    %174 = vmatprep.subr.mxu0 0.0
    %175 = vmatpush1.msra.mxu0 0.0
    %176 = vmatprep.subr.mxu0 0.0
    %177 = vmatpush1.msra.mxu0 0.0
    %178 = vmatprep.subr.mxu0 0.0
    %179 = vmatpush1.msra.mxu0 0.0
    %180 = vmatprep.subr.mxu0 0.0
    %181 = vmatpush1.msra.mxu0 0.0
    %182 = vmatprep.subr.mxu0 0.0
    %183 = vmatpush1.msra.mxu0 0.0
    %184 = vmatprep.subr.mxu0 0.0
    %185 = vmatpush1.msra.mxu0 0.0
    %186 = vmatprep.subr.mxu0 0.0
    %187 = vmatpush1.msra.mxu0 0.0
    %188 = vmatprep.subr.mxu0 0.0
    %189 = vmatpush1.msra.mxu0 0.0
    %190 = vmatprep.subr.mxu0 0.0
    %191 = vmatpush1.msra.mxu0 0.0
    %192 = vmatprep.subr.mxu0 0.0
    %193 = vmatpush1.msra.mxu0 0.0
    %194 = vmatprep.subr.mxu0 0.0
    %195 = vmatpush1.msra.mxu0 0.0
    %196 = vmatprep.subr.mxu0 0.0
    %197 = vmatpush1.msra.mxu0 0.0
    %198 = vmatprep.subr.mxu0 0.0
    %199 = vmatpush1.msra.mxu0 0.0
    %200 = vmatprep.mubr.f32.mxu0 0.0
    %201 = vmatmul.mubr.f32.gmra.mrb[0].mxu0 %v113
    %v202 = vpop.f32.mrb[0].mxu0
    %v203 = vadd.f32 %v94, %v202
    %v204 = vpop.f32.mrb[0].mxu0
    %v205 = vadd.f32 %v98, %v204
    %206 = vmatprep.mubr.f32.mxu0 0.0
    %207 = vmatmul.mubr.f32.gmra.mrb[0].mxu0 %v116
    %v208 = vpop.f32.mrb[0].mxu0
    %v209 = vadd.f32 %v94, %v208
    %v210 = vpop.f32.mrb[0].mxu0
    %v211 = vadd.f32 %v98, %v210
    %212 = vmatprep.mubr.f32.mxu0 0.0
    %213 = vmatmul.mubr.f32.gmra.mrb[0].mxu0 %v119
    %v214 = vpop.f32.mrb[0].mxu0
    %v215 = vadd.f32 %v94, %v214
    %v216 = vpop.f32.mrb[0].mxu0
    %v217 = vadd.f32 %v98, %v216
    %218 = vmatprep.mubr.f32.mxu0 0.0
    %219 = vmatmul.mubr.f32.gmra.mrb[0].mxu0 %v122
    %v220 = vpop.f32.mrb[0].mxu0
    %v221 = vadd.f32 %v94, %v220
    %v222 = vpop.f32.mrb[0].mxu0
    %v223 = vadd.f32 %v98, %v222
    %224 = vmatprep.mubr.f32.mxu0 0.0
    %225 = vmatmul.mubr.f32.gmra.mrb[0].mxu0 %v125
    %v226 = vpop.f32.mrb[0].mxu0
    %v227 = vadd.f32 %v94, %v226
    %v228 = vpop.f32.mrb[0].mxu0
    %v229 = vadd.f32 %v98, %v228
    %230 = vmatprep.mubr.f32.mxu0 0.0
    %231 = vmatmul.mubr.f32.gmra.mrb[0].mxu0 %v128
    %v232 = vpop.f32.mrb[0].mxu0
    %v233 = vadd.f32 %v94, %v232
    %v234 = vpop.f32.mrb[0].mxu0
    %v235 = vadd.f32 %v98, %v234
    %236 = vmatprep.mubr.f32.mxu0 0.0
    %237 = vmatmul.mubr.f32.gmra.mrb[0].mxu0 %v131
    %v238 = vpop.f32.mrb[0].mxu0
    %v239 = vadd.f32 %v94, %v238
    %v240 = vpop.f32.mrb[0].mxu0
    %v241 = vadd.f32 %v98, %v240
    %242 = vmatprep.mubr.f32.mxu0 0.0
    %243 = vmatmul.mubr.f32.gmra.mrb[0].mxu0 %v134
    %v244 = vpop.f32.mrb[0].mxu0
    %v245 = vadd.f32 %v94, %v244
    %v246 = vpop.f32.mrb[0].mxu0
    %v247 = vadd.f32 %v98, %v246
    %248 = vdwg.mxu0
    %249 = vmatprep.subr.mxu0 %v84
    %250 = vmatpush1.msra.mxu0 %v83
    %251 = vmatprep.subr.mxu0 %v88
    %252 = vmatpush1.msra.mxu0 %v87
    %253 = vmatprep.subr.mxu0 0.0
    %254 = vmatpush1.msra.mxu0 0.0
    %255 = vmatprep.subr.mxu0 0.0
    %256 = vmatpush1.msra.mxu0 0.0
    %257 = vmatprep.subr.mxu0 0.0
    %258 = vmatpush1.msra.mxu0 0.0
    %259 = vmatprep.subr.mxu0 0.0
    %260 = vmatpush1.msra.mxu0 0.0
    %261 = vmatprep.subr.mxu0 0.0
    %262 = vmatpush1.msra.mxu0 0.0
    %263 = vmatprep.subr.mxu0 0.0
    %264 = vmatpush1.msra.mxu0 0.0
    %265 = vmatprep.subr.mxu0 0.0
    %266 = vmatpush1.msra.mxu0 0.0
    %267 = vmatprep.subr.mxu0 0.0
    %268 = vmatpush1.msra.mxu0 0.0
    %269 = vmatprep.subr.mxu0 0.0
    %270 = vmatpush1.msra.mxu0 0.0
    %271 = vmatprep.subr.mxu0 0.0
    %272 = vmatpush1.msra.mxu0 0.0
    %273 = vmatprep.subr.mxu0 0.0
    %274 = vmatpush1.msra.mxu0 0.0
    %275 = vmatprep.subr.mxu0 0.0
    %276 = vmatpush1.msra.mxu0 0.0
    %277 = vmatprep.subr.mxu0 0.0
    %278 = vmatpush1.msra.mxu0 0.0
    %279 = vmatprep.subr.mxu0 0.0
    %280 = vmatpush1.msra.mxu0 0.0
    %281 = vmatprep.subr.mxu0 0.0
    %282 = vmatpush1.msra.mxu0 0.0
    %283 = vmatprep.subr.mxu0 0.0
    %284 = vmatpush1.msra.mxu0 0.0
    %285 = vmatprep.subr.mxu0 0.0
    %286 = vmatpush1.msra.mxu0 0.0
    %287 = vmatprep.subr.mxu0 0.0
    %288 = vmatpush1.msra.mxu0 0.0
    %289 = vmatprep.subr.mxu0 0.0
    %290 = vmatpush1.msra.mxu0 0.0
    %291 = vmatprep.subr.mxu0 0.0
    %292 = vmatpush1.msra.mxu0 0.0
    %293 = vmatprep.subr.mxu0 0.0
    %294 = vmatpush1.msra.mxu0 0.0
    %295 = vmatprep.subr.mxu0 0.0
    %296 = vmatpush1.msra.mxu0 0.0
    %297 = vmatprep.subr.mxu0 0.0
    %298 = vmatpush1.msra.mxu0 0.0
    %299 = vmatprep.subr.mxu0 0.0
    %300 = vmatpush1.msra.mxu0 0.0
    %301 = vmatprep.subr.mxu0 0.0
    %302 = vmatpush1.msra.mxu0 0.0
    %303 = vmatprep.subr.mxu0 0.0
    %304 = vmatpush1.msra.mxu0 0.0
    %305 = vmatprep.subr.mxu0 0.0
    %306 = vmatpush1.msra.mxu0 0.0
    %307 = vmatprep.subr.mxu0 0.0
    %308 = vmatpush1.msra.mxu0 0.0
    %309 = vmatprep.subr.mxu0 0.0
    %310 = vmatpush1.msra.mxu0 0.0
    %311 = vmatprep.subr.mxu0 0.0
    %312 = vmatpush1.msra.mxu0 0.0
    %313 = vmatprep.mubr.f32.mxu0 0.0
    %314 = vmatmul.mubr.f32.gmra.mrb[0].mxu0 %v113
    %v315 = vpop.f32.mrb[0].mxu0
    %v316 = vadd.f32 %v102, %v315
    %v317 = vpop.f32.mrb[0].mxu0
    %v318 = vadd.f32 %v106, %v317
    %319 = vmatprep.mubr.f32.mxu0 0.0
    %320 = vmatmul.mubr.f32.gmra.mrb[0].mxu0 %v116
    %v321 = vpop.f32.mrb[0].mxu0
    %v322 = vadd.f32 %v102, %v321
    %v323 = vpop.f32.mrb[0].mxu0
    %v324 = vadd.f32 %v106, %v323
    %325 = vmatprep.mubr.f32.mxu0 0.0
    %326 = vmatmul.mubr.f32.gmra.mrb[0].mxu0 %v119
    %v327 = vpop.f32.mrb[0].mxu0
    %v328 = vadd.f32 %v102, %v327
    %v329 = vpop.f32.mrb[0].mxu0
    %v330 = vadd.f32 %v106, %v329
    %331 = vmatprep.mubr.f32.mxu0 0.0
    %332 = vmatmul.mubr.f32.gmra.mrb[0].mxu0 %v122
    %v333 = vpop.f32.mrb[0].mxu0
    %v334 = vadd.f32 %v102, %v333
    %v335 = vpop.f32.mrb[0].mxu0
    %v336 = vadd.f32 %v106, %v335
    %337 = vmatprep.mubr.f32.mxu0 0.0
    %338 = vmatmul.mubr.f32.gmra.mrb[0].mxu0 %v125
    %v339 = vpop.f32.mrb[0].mxu0
    %v340 = vadd.f32 %v102, %v339
    %v341 = vpop.f32.mrb[0].mxu0
    %v342 = vadd.f32 %v106, %v341
    %343 = vmatprep.mubr.f32.mxu0 0.0
    %344 = vmatmul.mubr.f32.gmra.mrb[0].mxu0 %v128
    %v345 = vpop.f32.mrb[0].mxu0
    %v346 = vadd.f32 %v102, %v345
    %v347 = vpop.f32.mrb[0].mxu0
    %v348 = vadd.f32 %v106, %v347
    %349 = vmatprep.mubr.f32.mxu0 0.0
    %350 = vmatmul.mubr.f32.gmra.mrb[0].mxu0 %v131
    %v351 = vpop.f32.mrb[0].mxu0
    %v352 = vadd.f32 %v102, %v351
    %v353 = vpop.f32.mrb[0].mxu0
    %v354 = vadd.f32 %v106, %v353
    %355 = vmatprep.mubr.f32.mxu0 0.0
    %356 = vmatmul.mubr.f32.gmra.mrb[0].mxu0 %v134
    %v357 = vpop.f32.mrb[0].mxu0
    %v358 = vadd.f32 %v102, %v357
    %v359 = vpop.f32.mrb[0].mxu0
    %v360 = vadd.f32 %v106, %v359
    %361 = vdwg.mxu0
    %362 = vst [vmem:[#allocation2] sm:$0xff] %v203
    %363 = vst [vmem:[#allocation2 + $0x8] sm:$0xff] %v205
    %364 = vst [vmem:[#allocation2 + $0x10] sm:$0xff] %v316
    %365 = vst [vmem:[#allocation2 + $0x18] sm:$0xff] %v318
    %366 = vst [vmem:[#allocation2 + $0x20] sm:$0xff] %v209
    %367 = vst [vmem:[#allocation2 + $0x28] sm:$0xff] %v211
    %368 = vst [vmem:[#allocation2 + $0x30] sm:$0xff] %v322
    %369 = vst [vmem:[#allocation2 + $0x38] sm:$0xff] %v324
    %370 = vst [vmem:[#allocation2 + $0x40] sm:$0xff] %v215
    %371 = vst [vmem:[#allocation2 + $0x48] sm:$0xff] %v217
    %372 = vst [vmem:[#allocation2 + $0x50] sm:$0xff] %v328
    %373 = vst [vmem:[#allocation2 + $0x58] sm:$0xff] %v330
    %374 = vst [vmem:[#allocation2 + $0x60] sm:$0xff] %v221
    %375 = vst [vmem:[#allocation2 + $0x68] sm:$0xff] %v223
    %376 = vst [vmem:[#allocation2 + $0x70] sm:$0xff] %v334
    %377 = vst [vmem:[#allocation2 + $0x78] sm:$0xff] %v336
    %378 = vst [vmem:[#allocation2 + $0x80] sm:$0xff] %v227
    %379 = vst [vmem:[#allocation2 + $0x88] sm:$0xff] %v229
    %380 = vst [vmem:[#allocation2 + $0x90] sm:$0xff] %v340
    %381 = vst [vmem:[#allocation2 + $0x98] sm:$0xff] %v342
    %382 = vst [vmem:[#allocation2 + $0xa0] sm:$0xff] %v233
    %383 = vst [vmem:[#allocation2 + $0xa8] sm:$0xff] %v235
    %384 = vst [vmem:[#allocation2 + $0xb0] sm:$0xff] %v346
    %385 = vst [vmem:[#allocation2 + $0xb8] sm:$0xff] %v348
    %386 = vst [vmem:[#allocation2 + $0xc0] sm:$0xff] %v239
    %387 = vst [vmem:[#allocation2 + $0xc8] sm:$0xff] %v241
    %388 = vst [vmem:[#allocation2 + $0xd0] sm:$0xff] %v352
    %389 = vst [vmem:[#allocation2 + $0xd8] sm:$0xff] %v354
    %390 = vst [vmem:[#allocation2 + $0xe0] sm:$0xff] %v245
    %391 = vst [vmem:[#allocation2 + $0xe8] sm:$0xff] %v247
    %392 = vst [vmem:[#allocation2 + $0xf0] sm:$0xff] %v358
    %393 = vst [vmem:[#allocation2 + $0xf8] sm:$0xff] %v360
    %v394 = vld [vmem:[#allocation2] sm:$0xff]
    %v395 = vld [vmem:[#allocation2 + $0x8] sm:$0xff]
    %v396 = vld [vmem:[#allocation2 + $0x10] sm:$0xff]
    %v397 = vld [vmem:[#allocation2 + $0x18] sm:$0xff]
    %v398 = vld [vmem:[#allocation4] sm:$0xff]
    %v399 = vld [vmem:[#allocation4 + $0x8] sm:$0xff]
    %v400 = vld [vmem:[#allocation4 + $0x10] sm:$0xff]
    %v401 = vld [vmem:[#allocation4 + $0x18] sm:$0xff]
    %v402 = vld [vmem:[#allocation4 + $0x20] sm:$0xff]
    %v403 = vld [vmem:[#allocation4 + $0x28] sm:$0xff]
    %v404 = vld [vmem:[#allocation4 + $0x30] sm:$0xff]
    %v405 = vld [vmem:[#allocation4 + $0x38] sm:$0xff]
    %v406 = vld [vmem:[#allocation4 + $0x40] sm:$0xff]
    %v407 = vld [vmem:[#allocation4 + $0x48] sm:$0xff]
    %v408 = vld [vmem:[#allocation4 + $0x50] sm:$0xff]
    %v409 = vld [vmem:[#allocation4 + $0x58] sm:$0xff]
    %v410 = vld [vmem:[#allocation4 + $0x60] sm:$0xff]
    %v411 = vld [vmem:[#allocation4 + $0x68] sm:$0xff]
    %v412 = vld [vmem:[#allocation4 + $0x70] sm:$0xff]
    %v413 = vld [vmem:[#allocation4 + $0x78] sm:$0xff]
    %v414 = vld [vmem:[#allocation4 + $0x80] sm:$0xff]
    %v415 = vld [vmem:[#allocation4 + $0x88] sm:$0xff]
    %v416 = vld [vmem:[#allocation4 + $0x90] sm:$0xff]
    %v417 = vld [vmem:[#allocation4 + $0x98] sm:$0xff]
    %v418 = vld [vmem:[#allocation4 + $0xa0] sm:$0xff]
    %v419 = vld [vmem:[#allocation4 + $0xa8] sm:$0xff]
    %v420 = vld [vmem:[#allocation4 + $0xb0] sm:$0xff]
    %v421 = vld [vmem:[#allocation4 + $0xb8] sm:$0xff]
    %v422 = vld [vmem:[#allocation4 + $0xc0] sm:$0xff]
    %v423 = vld [vmem:[#allocation4 + $0xc8] sm:$0xff]
    %v424 = vld [vmem:[#allocation4 + $0xd0] sm:$0xff]
    %v425 = vld [vmem:[#allocation4 + $0xd8] sm:$0xff]
    %v426 = vld [vmem:[#allocation4 + $0xe0] sm:$0xff]
    %v427 = vld [vmem:[#allocation4 + $0xe8] sm:$0xff]
    %v428 = vld [vmem:[#allocation4 + $0xf0] sm:$0xff]
    %v429 = vld [vmem:[#allocation4 + $0xf8] sm:$0xff]
    %v430 = vld [vmem:[#allocation4 + $0x100] sm:$0xff]
    %v431 = vld [vmem:[#allocation4 + $0x108] sm:$0xff]
    %v432 = vld [vmem:[#allocation4 + $0x110] sm:$0xff]
    %v433 = vld [vmem:[#allocation4 + $0x118] sm:$0xff]
    %v434 = vld [vmem:[#allocation4 + $0x120] sm:$0xff]
    %v435 = vld [vmem:[#allocation4 + $0x128] sm:$0xff]
    %v436 = vld [vmem:[#allocation4 + $0x130] sm:$0xff]
    %v437 = vld [vmem:[#allocation4 + $0x138] sm:$0xff]
    %v438 = vld [vmem:[#allocation4 + $0x140] sm:$0xff]
    %v439 = vld [vmem:[#allocation4 + $0x148] sm:$0xff]
    %v440 = vld [vmem:[#allocation4 + $0x150] sm:$0xff]
    %v441 = vld [vmem:[#allocation4 + $0x158] sm:$0xff]
    %v442 = vld [vmem:[#allocation4 + $0x160] sm:$0xff]
    %v443 = vld [vmem:[#allocation4 + $0x168] sm:$0xff]
    %v444 = vld [vmem:[#allocation4 + $0x170] sm:$0xff]
    %v445 = vld [vmem:[#allocation4 + $0x178] sm:$0xff]
    %v446 = vld [vmem:[#allocation4 + $0x180] sm:$0xff]
    %v447 = vld [vmem:[#allocation4 + $0x188] sm:$0xff]
    %v448 = vld [vmem:[#allocation4 + $0x190] sm:$0xff]
    %v449 = vld [vmem:[#allocation4 + $0x198] sm:$0xff]
    %v450 = vld [vmem:[#allocation4 + $0x1a0] sm:$0xff]
    %v451 = vld [vmem:[#allocation4 + $0x1a8] sm:$0xff]
    %v452 = vld [vmem:[#allocation4 + $0x1b0] sm:$0xff]
    %v453 = vld [vmem:[#allocation4 + $0x1b8] sm:$0xff]
    %v454 = vld [vmem:[#allocation4 + $0x1c0] sm:$0xff]
    %v455 = vld [vmem:[#allocation4 + $0x1c8] sm:$0xff]
    %v456 = vld [vmem:[#allocation4 + $0x1d0] sm:$0xff]
    %v457 = vld [vmem:[#allocation4 + $0x1d8] sm:$0xff]
    %v458 = vld [vmem:[#allocation4 + $0x1e0] sm:$0xff]
    %v459 = vld [vmem:[#allocation4 + $0x1e8] sm:$0xff]
    %v460 = vld [vmem:[#allocation4 + $0x1f0] sm:$0xff]
    %v461 = vld [vmem:[#allocation4 + $0x1f8] sm:$0xff]
    %462 = vmatprep.subr.mxu0 %v399
    %463 = vmatpush1.msra.mxu0 %v398
    %464 = vmatprep.subr.mxu0 %v403
    %465 = vmatpush1.msra.mxu0 %v402
    %466 = vmatprep.subr.mxu0 %v407
    %467 = vmatpush1.msra.mxu0 %v406
    %468 = vmatprep.subr.mxu0 %v411
    %469 = vmatpush1.msra.mxu0 %v410
    %470 = vmatprep.subr.mxu0 %v415
    %471 = vmatpush1.msra.mxu0 %v414
    %472 = vmatprep.subr.mxu0 %v419
    %473 = vmatpush1.msra.mxu0 %v418
    %474 = vmatprep.subr.mxu0 %v423
    %475 = vmatpush1.msra.mxu0 %v422
    %476 = vmatprep.subr.mxu0 %v427
    %477 = vmatpush1.msra.mxu0 %v426
    %478 = vmatprep.subr.mxu0 %v431
    %479 = vmatpush1.msra.mxu0 %v430
    %480 = vmatprep.subr.mxu0 %v435
    %481 = vmatpush1.msra.mxu0 %v434
    %482 = vmatprep.subr.mxu0 %v439
    %483 = vmatpush1.msra.mxu0 %v438
    %484 = vmatprep.subr.mxu0 %v443
    %485 = vmatpush1.msra.mxu0 %v442
    %486 = vmatprep.subr.mxu0 %v447
    %487 = vmatpush1.msra.mxu0 %v446
    %488 = vmatprep.subr.mxu0 %v451
    %489 = vmatpush1.msra.mxu0 %v450
    %490 = vmatprep.subr.mxu0 %v455
    %491 = vmatpush1.msra.mxu0 %v454
    %492 = vmatprep.subr.mxu0 %v459
    %493 = vmatpush1.msra.mxu0 %v458
    %494 = vmatprep.subr.mxu0 0.0
    %495 = vmatpush1.msra.mxu0 0.0
    %496 = vmatprep.subr.mxu0 0.0
    %497 = vmatpush1.msra.mxu0 0.0
    %498 = vmatprep.subr.mxu0 0.0
    %499 = vmatpush1.msra.mxu0 0.0
    %500 = vmatprep.subr.mxu0 0.0
    %501 = vmatpush1.msra.mxu0 0.0
    %502 = vmatprep.subr.mxu0 0.0
    %503 = vmatpush1.msra.mxu0 0.0
    %504 = vmatprep.subr.mxu0 0.0
    %505 = vmatpush1.msra.mxu0 0.0
    %506 = vmatprep.subr.mxu0 0.0
    %507 = vmatpush1.msra.mxu0 0.0
    %508 = vmatprep.subr.mxu0 0.0
    %509 = vmatpush1.msra.mxu0 0.0
    %510 = vmatprep.subr.mxu0 0.0
    %511 = vmatpush1.msra.mxu0 0.0
    %512 = vmatprep.subr.mxu0 0.0
    %513 = vmatpush1.msra.mxu0 0.0
    %514 = vmatprep.subr.mxu0 0.0
    %515 = vmatpush1.msra.mxu0 0.0
    %516 = vmatprep.subr.mxu0 0.0
    %517 = vmatpush1.msra.mxu0 0.0
    %518 = vmatprep.subr.mxu0 0.0
    %519 = vmatpush1.msra.mxu0 0.0
    %520 = vmatprep.subr.mxu0 0.0
    %521 = vmatpush1.msra.mxu0 0.0
    %522 = vmatprep.subr.mxu0 0.0
    %523 = vmatpush1.msra.mxu0 0.0
    %524 = vmatprep.subr.mxu0 0.0
    %525 = vmatpush1.msra.mxu0 0.0
    %526 = vmatprep.mubr.f32.mxu0 0.0
    %527 = vmatmul.mubr.f32.gmra.mrb[0].mxu0 0.0
    %v528 = vpop.f32.mrb[0].mxu0
    %v529 = vadd.f32 0.0, %v528
    %v530 = vpop.f32.mrb[0].mxu0
    %v531 = vadd.f32 0.0, %v530
    %532 = vdwg.mxu0
    %533 = vmatprep.subr.mxu0 %v401
    %534 = vmatpush1.msra.mxu0 %v400
    %535 = vmatprep.subr.mxu0 %v405
    %536 = vmatpush1.msra.mxu0 %v404
    %537 = vmatprep.subr.mxu0 %v409
    %538 = vmatpush1.msra.mxu0 %v408
    %539 = vmatprep.subr.mxu0 %v413
    %540 = vmatpush1.msra.mxu0 %v412
    %541 = vmatprep.subr.mxu0 %v417
    %542 = vmatpush1.msra.mxu0 %v416
    %543 = vmatprep.subr.mxu0 %v421
    %544 = vmatpush1.msra.mxu0 %v420
    %545 = vmatprep.subr.mxu0 %v425
    %546 = vmatpush1.msra.mxu0 %v424
    %547 = vmatprep.subr.mxu0 %v429
    %548 = vmatpush1.msra.mxu0 %v428
    %549 = vmatprep.subr.mxu0 %v433
    %550 = vmatpush1.msra.mxu0 %v432
    %551 = vmatprep.subr.mxu0 %v437
    %552 = vmatpush1.msra.mxu0 %v436
    %553 = vmatprep.subr.mxu0 %v441
    %554 = vmatpush1.msra.mxu0 %v440
    %555 = vmatprep.subr.mxu0 %v445
    %556 = vmatpush1.msra.mxu0 %v444
    %557 = vmatprep.subr.mxu0 %v449
    %558 = vmatpush1.msra.mxu0 %v448
    %559 = vmatprep.subr.mxu0 %v453
    %560 = vmatpush1.msra.mxu0 %v452
    %561 = vmatprep.subr.mxu0 %v457
    %562 = vmatpush1.msra.mxu0 %v456
    %563 = vmatprep.subr.mxu0 %v461
    %564 = vmatpush1.msra.mxu0 %v460
    %565 = vmatprep.subr.mxu0 0.0
    %566 = vmatpush1.msra.mxu0 0.0
    %567 = vmatprep.subr.mxu0 0.0
    %568 = vmatpush1.msra.mxu0 0.0
    %569 = vmatprep.subr.mxu0 0.0
    %570 = vmatpush1.msra.mxu0 0.0
    %571 = vmatprep.subr.mxu0 0.0
    %572 = vmatpush1.msra.mxu0 0.0
    %573 = vmatprep.subr.mxu0 0.0
    %574 = vmatpush1.msra.mxu0 0.0
    %575 = vmatprep.subr.mxu0 0.0
    %576 = vmatpush1.msra.mxu0 0.0
    %577 = vmatprep.subr.mxu0 0.0
    %578 = vmatpush1.msra.mxu0 0.0
    %579 = vmatprep.subr.mxu0 0.0
    %580 = vmatpush1.msra.mxu0 0.0
    %581 = vmatprep.subr.mxu0 0.0
    %582 = vmatpush1.msra.mxu0 0.0
    %583 = vmatprep.subr.mxu0 0.0
    %584 = vmatpush1.msra.mxu0 0.0
    %585 = vmatprep.subr.mxu0 0.0
    %586 = vmatpush1.msra.mxu0 0.0
    %587 = vmatprep.subr.mxu0 0.0
    %588 = vmatpush1.msra.mxu0 0.0
    %589 = vmatprep.subr.mxu0 0.0
    %590 = vmatpush1.msra.mxu0 0.0
    %591 = vmatprep.subr.mxu0 0.0
    %592 = vmatpush1.msra.mxu0 0.0
    %593 = vmatprep.subr.mxu0 0.0
    %594 = vmatpush1.msra.mxu0 0.0
    %595 = vmatprep.subr.mxu0 0.0
    %596 = vmatpush1.msra.mxu0 0.0
    %597 = vmatprep.mubr.f32.mxu0 0.0
    %598 = vmatmul.mubr.f32.gmra.mrb[0].mxu0 0.0
    %v599 = vpop.f32.mrb[0].mxu0
    %v600 = vadd.f32 0.0, %v599
    %v601 = vpop.f32.mrb[0].mxu0
    %v602 = vadd.f32 0.0, %v601
    %603 = vdwg.mxu0
    %v604 = vadd.f32 %v394, %v529
    %v605 = vadd.f32 %v395, %v531
    %v606 = vadd.f32 %v396, %v600
    %v607 = vadd.f32 %v397, %v602
    %v608 = vxor.u32 %v604, 2147483648
    %v609 = vmul.f32 %v608, 1.442695
    %v610 = vpow.pop %v609
    %v611 = vadd.f32 %v610, 1.0
    %v612 = vrcp.pop %v611
    %v613 = vmul.f32 1.0, %v612
    %v614 = vxor.u32 %v605, 2147483648
    %v615 = vmul.f32 %v614, 1.442695
    %v616 = vpow.pop %v615
    %v617 = vadd.f32 %v616, 1.0
    %v618 = vrcp.pop %v617
    %v619 = vmul.f32 1.0, %v618
    %v620 = vtanh.pop %v606
    %v621 = vxor.u32 %v607, 2147483648
    %v622 = vmul.f32 %v621, 1.442695
    %v623 = vpow.pop %v622
    %v624 = vadd.f32 %v623, 1.0
    %v625 = vrcp.pop %v624
    %v626 = vmul.f32 1.0, %v625
    %v627 = vmul.f32 %v619, 0.0
    %v628 = vmul.f32 %v613, %v620
    %v629 = vadd.f32 %v627, %v628
    %v630 = vtanh.pop %v629
    %v631 = vmul.f32 %v626, %v630
    %632 = vst [vmem:[#allocation3] sm:$0xff] %v631
    %v633 = vld [vmem:[#allocation2 + $0x20] sm:$0xff]
    %v634 = vld [vmem:[#allocation2 + $0x28] sm:$0xff]
    %v635 = vld [vmem:[#allocation2 + $0x30] sm:$0xff]
    %v636 = vld [vmem:[#allocation2 + $0x38] sm:$0xff]
    %v637 = vld [vmem:[#allocation4] sm:$0xff]
    %v638 = vld [vmem:[#allocation4 + $0x8] sm:$0xff]
    %v639 = vld [vmem:[#allocation4 + $0x10] sm:$0xff]
    %v640 = vld [vmem:[#allocation4 + $0x18] sm:$0xff]
    %v641 = vld [vmem:[#allocation4 + $0x20] sm:$0xff]
    %v642 = vld [vmem:[#allocation4 + $0x28] sm:$0xff]
    %v643 = vld [vmem:[#allocation4 + $0x30] sm:$0xff]
    %v644 = vld [vmem:[#allocation4 + $0x38] sm:$0xff]
    %v645 = vld [vmem:[#allocation4 + $0x40] sm:$0xff]
    %v646 = vld [vmem:[#allocation4 + $0x48] sm:$0xff]
    %v647 = vld [vmem:[#allocation4 + $0x50] sm:$0xff]
    %v648 = vld [vmem:[#allocation4 + $0x58] sm:$0xff]
    %v649 = vld [vmem:[#allocation4 + $0x60] sm:$0xff]
    %v650 = vld [vmem:[#allocation4 + $0x68] sm:$0xff]
    %v651 = vld [vmem:[#allocation4 + $0x70] sm:$0xff]
    %v652 = vld [vmem:[#allocation4 + $0x78] sm:$0xff]
    %v653 = vld [vmem:[#allocation4 + $0x80] sm:$0xff]
    %v654 = vld [vmem:[#allocation4 + $0x88] sm:$0xff]
    %v655 = vld [vmem:[#allocation4 + $0x90] sm:$0xff]
    %v656 = vld [vmem:[#allocation4 + $0x98] sm:$0xff]
    %v657 = vld [vmem:[#allocation4 + $0xa0] sm:$0xff]
    %v658 = vld [vmem:[#allocation4 + $0xa8] sm:$0xff]
    %v659 = vld [vmem:[#allocation4 + $0xb0] sm:$0xff]
    %v660 = vld [vmem:[#allocation4 + $0xb8] sm:$0xff]
    %v661 = vld [vmem:[#allocation4 + $0xc0] sm:$0xff]
    %v662 = vld [vmem:[#allocation4 + $0xc8] sm:$0xff]
    %v663 = vld [vmem:[#allocation4 + $0xd0] sm:$0xff]
    %v664 = vld [vmem:[#allocation4 + $0xd8] sm:$0xff]
    %v665 = vld [vmem:[#allocation4 + $0xe0] sm:$0xff]
    %v666 = vld [vmem:[#allocation4 + $0xe8] sm:$0xff]
    %v667 = vld [vmem:[#allocation4 + $0xf0] sm:$0xff]
    %v668 = vld [vmem:[#allocation4 + $0xf8] sm:$0xff]
    %v669 = vld [vmem:[#allocation4 + $0x100] sm:$0xff]
    %v670 = vld [vmem:[#allocation4 + $0x108] sm:$0xff]
    %v671 = vld [vmem:[#allocation4 + $0x110] sm:$0xff]
    %v672 = vld [vmem:[#allocation4 + $0x118] sm:$0xff]
    %v673 = vld [vmem:[#allocation4 + $0x120] sm:$0xff]
    %v674 = vld [vmem:[#allocation4 + $0x128] sm:$0xff]
    %v675 = vld [vmem:[#allocation4 + $0x130] sm:$0xff]
    %v676 = vld [vmem:[#allocation4 + $0x138] sm:$0xff]
    %v677 = vld [vmem:[#allocation4 + $0x140] sm:$0xff]
    %v678 = vld [vmem:[#allocation4 + $0x148] sm:$0xff]
    %v679 = vld [vmem:[#allocation4 + $0x150] sm:$0xff]
    %v680 = vld [vmem:[#allocation4 + $0x158] sm:$0xff]
    %v681 = vld [vmem:[#allocation4 + $0x160] sm:$0xff]
    %v682 = vld [vmem:[#allocation4 + $0x168] sm:$0xff]
    %v683 = vld [vmem:[#allocation4 + $0x170] sm:$0xff]
    %v684 = vld [vmem:[#allocation4 + $0x178] sm:$0xff]
    %v685 = vld [vmem:[#allocation4 + $0x180] sm:$0xff]
    %v686 = vld [vmem:[#allocation4 + $0x188] sm:$0xff]
    %v687 = vld [vmem:[#allocation4 + $0x190] sm:$0xff]
    %v688 = vld [vmem:[#allocation4 + $0x198] sm:$0xff]
    %v689 = vld [vmem:[#allocation4 + $0x1a0] sm:$0xff]
    %v690 = vld [vmem:[#allocation4 + $0x1a8] sm:$0xff]
    %v691 = vld [vmem:[#allocation4 + $0x1b0] sm:$0xff]
    %v692 = vld [vmem:[#allocation4 + $0x1b8] sm:$0xff]
    %v693 = vld [vmem:[#allocation4 + $0x1c0] sm:$0xff]
    %v694 = vld [vmem:[#allocation4 + $0x1c8] sm:$0xff]
    %v695 = vld [vmem:[#allocation4 + $0x1d0] sm:$0xff]
    %v696 = vld [vmem:[#allocation4 + $0x1d8] sm:$0xff]
    %v697 = vld [vmem:[#allocation4 + $0x1e0] sm:$0xff]
    %v698 = vld [vmem:[#allocation4 + $0x1e8] sm:$0xff]
    %v699 = vld [vmem:[#allocation4 + $0x1f0] sm:$0xff]
    %v700 = vld [vmem:[#allocation4 + $0x1f8] sm:$0xff]
    %701 = vmatprep.subr.mxu0 %v638
    %702 = vmatpush1.msra.mxu0 %v637
    %703 = vmatprep.subr.mxu0 %v642
    %704 = vmatpush1.msra.mxu0 %v641
    %705 = vmatprep.subr.mxu0 %v646
    %706 = vmatpush1.msra.mxu0 %v645
    %707 = vmatprep.subr.mxu0 %v650
    %708 = vmatpush1.msra.mxu0 %v649
    %709 = vmatprep.subr.mxu0 %v654
    %710 = vmatpush1.msra.mxu0 %v653
    %711 = vmatprep.subr.mxu0 %v658
    %712 = vmatpush1.msra.mxu0 %v657
    %713 = vmatprep.subr.mxu0 %v662
    %714 = vmatpush1.msra.mxu0 %v661
    %715 = vmatprep.subr.mxu0 %v666
    %716 = vmatpush1.msra.mxu0 %v665
    %717 = vmatprep.subr.mxu0 %v670
    %718 = vmatpush1.msra.mxu0 %v669
    %719 = vmatprep.subr.mxu0 %v674
    %720 = vmatpush1.msra.mxu0 %v673
    %721 = vmatprep.subr.mxu0 %v678
    %722 = vmatpush1.msra.mxu0 %v677
    %723 = vmatprep.subr.mxu0 %v682
    %724 = vmatpush1.msra.mxu0 %v681
    %725 = vmatprep.subr.mxu0 %v686
    %726 = vmatpush1.msra.mxu0 %v685
    %727 = vmatprep.subr.mxu0 %v690
    %728 = vmatpush1.msra.mxu0 %v689
    %729 = vmatprep.subr.mxu0 %v694
    %730 = vmatpush1.msra.mxu0 %v693
    %731 = vmatprep.subr.mxu0 %v698
    %732 = vmatpush1.msra.mxu0 %v697
    %733 = vmatprep.subr.mxu0 0.0
    %734 = vmatpush1.msra.mxu0 0.0
    %735 = vmatprep.subr.mxu0 0.0
    %736 = vmatpush1.msra.mxu0 0.0
    %737 = vmatprep.subr.mxu0 0.0
    %738 = vmatpush1.msra.mxu0 0.0
    %739 = vmatprep.subr.mxu0 0.0
    %740 = vmatpush1.msra.mxu0 0.0
    %741 = vmatprep.subr.mxu0 0.0
    %742 = vmatpush1.msra.mxu0 0.0
    %743 = vmatprep.subr.mxu0 0.0
    %744 = vmatpush1.msra.mxu0 0.0
    %745 = vmatprep.subr.mxu0 0.0
    %746 = vmatpush1.msra.mxu0 0.0
    %747 = vmatprep.subr.mxu0 0.0
    %748 = vmatpush1.msra.mxu0 0.0
    %749 = vmatprep.subr.mxu0 0.0
    %750 = vmatpush1.msra.mxu0 0.0
    %751 = vmatprep.subr.mxu0 0.0
    %752 = vmatpush1.msra.mxu0 0.0
    %753 = vmatprep.subr.mxu0 0.0
    %754 = vmatpush1.msra.mxu0 0.0
    %755 = vmatprep.subr.mxu0 0.0
    %756 = vmatpush1.msra.mxu0 0.0
    %757 = vmatprep.subr.mxu0 0.0
    %758 = vmatpush1.msra.mxu0 0.0
    %759 = vmatprep.subr.mxu0 0.0
    %760 = vmatpush1.msra.mxu0 0.0
    %761 = vmatprep.subr.mxu0 0.0
    %762 = vmatpush1.msra.mxu0 0.0
    %763 = vmatprep.subr.mxu0 0.0
    %764 = vmatpush1.msra.mxu0 0.0
    %765 = vmatprep.mubr.f32.mxu0 0.0
    %766 = vmatmul.mubr.f32.gmra.mrb[0].mxu0 %v631
    %v767 = vpop.f32.mrb[0].mxu0
    %v768 = vadd.f32 0.0, %v767
    %v769 = vpop.f32.mrb[0].mxu0
    %v770 = vadd.f32 0.0, %v769
    %771 = vdwg.mxu0
    %772 = vmatprep.subr.mxu0 %v640
    %773 = vmatpush1.msra.mxu0 %v639
    %774 = vmatprep.subr.mxu0 %v644
    %775 = vmatpush1.msra.mxu0 %v643
    %776 = vmatprep.subr.mxu0 %v648
    %777 = vmatpush1.msra.mxu0 %v647
    %778 = vmatprep.subr.mxu0 %v652
    %779 = vmatpush1.msra.mxu0 %v651
    %780 = vmatprep.subr.mxu0 %v656
    %781 = vmatpush1.msra.mxu0 %v655
    %782 = vmatprep.subr.mxu0 %v660
    %783 = vmatpush1.msra.mxu0 %v659
    %784 = vmatprep.subr.mxu0 %v664
    %785 = vmatpush1.msra.mxu0 %v663
    %786 = vmatprep.subr.mxu0 %v668
    %787 = vmatpush1.msra.mxu0 %v667
    %788 = vmatprep.subr.mxu0 %v672
    %789 = vmatpush1.msra.mxu0 %v671
    %790 = vmatprep.subr.mxu0 %v676
    %791 = vmatpush1.msra.mxu0 %v675
    %792 = vmatprep.subr.mxu0 %v680
    %793 = vmatpush1.msra.mxu0 %v679
    %794 = vmatprep.subr.mxu0 %v684
    %795 = vmatpush1.msra.mxu0 %v683
    %796 = vmatprep.subr.mxu0 %v688
    %797 = vmatpush1.msra.mxu0 %v687
    %798 = vmatprep.subr.mxu0 %v692
    %799 = vmatpush1.msra.mxu0 %v691
    %800 = vmatprep.subr.mxu0 %v696
    %801 = vmatpush1.msra.mxu0 %v695
    %802 = vmatprep.subr.mxu0 %v700
    %803 = vmatpush1.msra.mxu0 %v699
    %804 = vmatprep.subr.mxu0 0.0
    %805 = vmatpush1.msra.mxu0 0.0
    %806 = vmatprep.subr.mxu0 0.0
    %807 = vmatpush1.msra.mxu0 0.0
    %808 = vmatprep.subr.mxu0 0.0
    %809 = vmatpush1.msra.mxu0 0.0
    %810 = vmatprep.subr.mxu0 0.0
    %811 = vmatpush1.msra.mxu0 0.0
    %812 = vmatprep.subr.mxu0 0.0
    %813 = vmatpush1.msra.mxu0 0.0
    %814 = vmatprep.subr.mxu0 0.0
    %815 = vmatpush1.msra.mxu0 0.0
    %816 = vmatprep.subr.mxu0 0.0
    %817 = vmatpush1.msra.mxu0 0.0
    %818 = vmatprep.subr.mxu0 0.0
    %819 = vmatpush1.msra.mxu0 0.0
    %820 = vmatprep.subr.mxu0 0.0
    %821 = vmatpush1.msra.mxu0 0.0
    %822 = vmatprep.subr.mxu0 0.0
    %823 = vmatpush1.msra.mxu0 0.0
    %824 = vmatprep.subr.mxu0 0.0
    %825 = vmatpush1.msra.mxu0 0.0
    %826 = vmatprep.subr.mxu0 0.0
    %827 = vmatpush1.msra.mxu0 0.0
    %828 = vmatprep.subr.mxu0 0.0
    %829 = vmatpush1.msra.mxu0 0.0
    %830 = vmatprep.subr.mxu0 0.0
    %831 = vmatpush1.msra.mxu0 0.0
    %832 = vmatprep.subr.mxu0 0.0
    %833 = vmatpush1.msra.mxu0 0.0
    %834 = vmatprep.subr.mxu0 0.0
    %835 = vmatpush1.msra.mxu0 0.0
    %836 = vmatprep.mubr.f32.mxu0 0.0
    %837 = vmatmul.mubr.f32.gmra.mrb[0].mxu0 %v631
    %v838 = vpop.f32.mrb[0].mxu0
    %v839 = vadd.f32 0.0, %v838
    %v840 = vpop.f32.mrb[0].mxu0
    %v841 = vadd.f32 0.0, %v840
    %842 = vdwg.mxu0
    %v843 = vadd.f32 %v633, %v768
    %v844 = vadd.f32 %v634, %v770
    %v845 = vadd.f32 %v635, %v839
    %v846 = vadd.f32 %v636, %v841
    %v847 = vxor.u32 %v843, 2147483648
    %v848 = vmul.f32 %v847, 1.442695
    %v849 = vpow.pop %v848
    %v850 = vadd.f32 %v849, 1.0
    %v851 = vrcp.pop %v850
    %v852 = vmul.f32 1.0, %v851
    %v853 = vxor.u32 %v844, 2147483648
    %v854 = vmul.f32 %v853, 1.442695
    %v855 = vpow.pop %v854
    %v856 = vadd.f32 %v855, 1.0
    %v857 = vrcp.pop %v856
    %v858 = vmul.f32 1.0, %v857
    %v859 = vtanh.pop %v845
    %v860 = vxor.u32 %v846, 2147483648
    %v861 = vmul.f32 %v860, 1.442695
    %v862 = vpow.pop %v861
    %v863 = vadd.f32 %v862, 1.0
    %v864 = vrcp.pop %v863
    %v865 = vmul.f32 1.0, %v864
    %v866 = vmul.f32 %v858, %v629
    %v867 = vmul.f32 %v852, %v859
    %v868 = vadd.f32 %v866, %v867
    %v869 = vtanh.pop %v868
    %v870 = vmul.f32 %v865, %v869
    %871 = vst [vmem:[#allocation3 + $0x8] sm:$0xff] %v870
    %v872 = vld [vmem:[#allocation2 + $0x40] sm:$0xff]
    %v873 = vld [vmem:[#allocation2 + $0x48] sm:$0xff]
    %v874 = vld [vmem:[#allocation2 + $0x50] sm:$0xff]
    %v875 = vld [vmem:[#allocation2 + $0x58] sm:$0xff]
    %v876 = vld [vmem:[#allocation4] sm:$0xff]
    %v877 = vld [vmem:[#allocation4 + $0x8] sm:$0xff]
    %v878 = vld [vmem:[#allocation4 + $0x10] sm:$0xff]
    %v879 = vld [vmem:[#allocation4 + $0x18] sm:$0xff]
    %v880 = vld [vmem:[#allocation4 + $0x20] sm:$0xff]
    %v881 = vld [vmem:[#allocation4 + $0x28] sm:$0xff]
    %v882 = vld [vmem:[#allocation4 + $0x30] sm:$0xff]
    %v883 = vld [vmem:[#allocation4 + $0x38] sm:$0xff]
    %v884 = vld [vmem:[#allocation4 + $0x40] sm:$0xff]
    %v885 = vld [vmem:[#allocation4 + $0x48] sm:$0xff]
    %v886 = vld [vmem:[#allocation4 + $0x50] sm:$0xff]
    %v887 = vld [vmem:[#allocation4 + $0x58] sm:$0xff]
    %v888 = vld [vmem:[#allocation4 + $0x60] sm:$0xff]
    %v889 = vld [vmem:[#allocation4 + $0x68] sm:$0xff]
    %v890 = vld [vmem:[#allocation4 + $0x70] sm:$0xff]
    %v891 = vld [vmem:[#allocation4 + $0x78] sm:$0xff]
    %v892 = vld [vmem:[#allocation4 + $0x80] sm:$0xff]
    %v893 = vld [vmem:[#allocation4 + $0x88] sm:$0xff]
    %v894 = vld [vmem:[#allocation4 + $0x90] sm:$0xff]
    %v895 = vld [vmem:[#allocation4 + $0x98] sm:$0xff]
    %v896 = vld [vmem:[#allocation4 + $0xa0] sm:$0xff]
    %v897 = vld [vmem:[#allocation4 + $0xa8] sm:$0xff]
    %v898 = vld [vmem:[#allocation4 + $0xb0] sm:$0xff]
    %v899 = vld [vmem:[#allocation4 + $0xb8] sm:$0xff]
    %v900 = vld [vmem:[#allocation4 + $0xc0] sm:$0xff]
    %v901 = vld [vmem:[#allocation4 + $0xc8] sm:$0xff]
    %v902 = vld [vmem:[#allocation4 + $0xd0] sm:$0xff]
    %v903 = vld [vmem:[#allocation4 + $0xd8] sm:$0xff]
    %v904 = vld [vmem:[#allocation4 + $0xe0] sm:$0xff]
    %v905 = vld [vmem:[#allocation4 + $0xe8] sm:$0xff]
    %v906 = vld [vmem:[#allocation4 + $0xf0] sm:$0xff]
    %v907 = vld [vmem:[#allocation4 + $0xf8] sm:$0xff]
    %v908 = vld [vmem:[#allocation4 + $0x100] sm:$0xff]
    %v909 = vld [vmem:[#allocation4 + $0x108] sm:$0xff]
    %v910 = vld [vmem:[#allocation4 + $0x110] sm:$0xff]
    %v911 = vld [vmem:[#allocation4 + $0x118] sm:$0xff]
    %v912 = vld [vmem:[#allocation4 + $0x120] sm:$0xff]
    %v913 = vld [vmem:[#allocation4 + $0x128] sm:$0xff]
    %v914 = vld [vmem:[#allocation4 + $0x130] sm:$0xff]
    %v915 = vld [vmem:[#allocation4 + $0x138] sm:$0xff]
    %v916 = vld [vmem:[#allocation4 + $0x140] sm:$0xff]
    %v917 = vld [vmem:[#allocation4 + $0x148] sm:$0xff]
    %v918 = vld [vmem:[#allocation4 + $0x150] sm:$0xff]
    %v919 = vld [vmem:[#allocation4 + $0x158] sm:$0xff]
    %v920 = vld [vmem:[#allocation4 + $0x160] sm:$0xff]
    %v921 = vld [vmem:[#allocation4 + $0x168] sm:$0xff]
    %v922 = vld [vmem:[#allocation4 + $0x170] sm:$0xff]
    %v923 = vld [vmem:[#allocation4 + $0x178] sm:$0xff]
    %v924 = vld [vmem:[#allocation4 + $0x180] sm:$0xff]
    %v925 = vld [vmem:[#allocation4 + $0x188] sm:$0xff]
    %v926 = vld [vmem:[#allocation4 + $0x190] sm:$0xff]
    %v927 = vld [vmem:[#allocation4 + $0x198] sm:$0xff]
    %v928 = vld [vmem:[#allocation4 + $0x1a0] sm:$0xff]
    %v929 = vld [vmem:[#allocation4 + $0x1a8] sm:$0xff]
    %v930 = vld [vmem:[#allocation4 + $0x1b0] sm:$0xff]
    %v931 = vld [vmem:[#allocation4 + $0x1b8] sm:$0xff]
    %v932 = vld [vmem:[#allocation4 + $0x1c0] sm:$0xff]
    %v933 = vld [vmem:[#allocation4 + $0x1c8] sm:$0xff]
    %v934 = vld [vmem:[#allocation4 + $0x1d0] sm:$0xff]
    %v935 = vld [vmem:[#allocation4 + $0x1d8] sm:$0xff]
    %v936 = vld [vmem:[#allocation4 + $0x1e0] sm:$0xff]
    %v937 = vld [vmem:[#allocation4 + $0x1e8] sm:$0xff]
    %v938 = vld [vmem:[#allocation4 + $0x1f0] sm:$0xff]
    %v939 = vld [vmem:[#allocation4 + $0x1f8] sm:$0xff]
    %940 = vmatprep.subr.mxu0 %v877
    %941 = vmatpush1.msra.mxu0 %v876
    %942 = vmatprep.subr.mxu0 %v881
    %943 = vmatpush1.msra.mxu0 %v880
    %944 = vmatprep.subr.mxu0 %v885
    %945 = vmatpush1.msra.mxu0 %v884
    %946 = vmatprep.subr.mxu0 %v889
    %947 = vmatpush1.msra.mxu0 %v888
    %948 = vmatprep.subr.mxu0 %v893
    %949 = vmatpush1.msra.mxu0 %v892
    %950 = vmatprep.subr.mxu0 %v897
    %951 = vmatpush1.msra.mxu0 %v896
    %952 = vmatprep.subr.mxu0 %v901
    %953 = vmatpush1.msra.mxu0 %v900
    %954 = vmatprep.subr.mxu0 %v905
    %955 = vmatpush1.msra.mxu0 %v904
    %956 = vmatprep.subr.mxu0 %v909
    %957 = vmatpush1.msra.mxu0 %v908
    %958 = vmatprep.subr.mxu0 %v913
    %959 = vmatpush1.msra.mxu0 %v912
    %960 = vmatprep.subr.mxu0 %v917
    %961 = vmatpush1.msra.mxu0 %v916
    %962 = vmatprep.subr.mxu0 %v921
    %963 = vmatpush1.msra.mxu0 %v920
    %964 = vmatprep.subr.mxu0 %v925
    %965 = vmatpush1.msra.mxu0 %v924
    %966 = vmatprep.subr.mxu0 %v929
    %967 = vmatpush1.msra.mxu0 %v928
    %968 = vmatprep.subr.mxu0 %v933
    %969 = vmatpush1.msra.mxu0 %v932
    %970 = vmatprep.subr.mxu0 %v937
    %971 = vmatpush1.msra.mxu0 %v936
    %972 = vmatprep.subr.mxu0 0.0
    %973 = vmatpush1.msra.mxu0 0.0
    %974 = vmatprep.subr.mxu0 0.0
    %975 = vmatpush1.msra.mxu0 0.0
    %976 = vmatprep.subr.mxu0 0.0
    %977 = vmatpush1.msra.mxu0 0.0
    %978 = vmatprep.subr.mxu0 0.0
    %979 = vmatpush1.msra.mxu0 0.0
    %980 = vmatprep.subr.mxu0 0.0
    %981 = vmatpush1.msra.mxu0 0.0
    %982 = vmatprep.subr.mxu0 0.0
    %983 = vmatpush1.msra.mxu0 0.0
    %984 = vmatprep.subr.mxu0 0.0
    %985 = vmatpush1.msra.mxu0 0.0
    %986 = vmatprep.subr.mxu0 0.0
    %987 = vmatpush1.msra.mxu0 0.0
    %988 = vmatprep.subr.mxu0 0.0
    %989 = vmatpush1.msra.mxu0 0.0
    %990 = vmatprep.subr.mxu0 0.0
    %991 = vmatpush1.msra.mxu0 0.0
    %992 = vmatprep.subr.mxu0 0.0
    %993 = vmatpush1.msra.mxu0 0.0
    %994 = vmatprep.subr.mxu0 0.0
    %995 = vmatpush1.msra.mxu0 0.0
    %996 = vmatprep.subr.mxu0 0.0
    %997 = vmatpush1.msra.mxu0 0.0
    %998 = vmatprep.subr.mxu0 0.0
    %999 = vmatpush1.msra.mxu0 0.0
    %1000 = vmatprep.subr.mxu0 0.0
    %1001 = vmatpush1.msra.mxu0 0.0
    %1002 = vmatprep.subr.mxu0 0.0
    %1003 = vmatpush1.msra.mxu0 0.0
    %1004 = vmatprep.mubr.f32.mxu0 0.0
    %1005 = vmatmul.mubr.f32.gmra.mrb[0].mxu0 %v870
    %v1006 = vpop.f32.mrb[0].mxu0
    %v1007 = vadd.f32 0.0, %v1006
    %v1008 = vpop.f32.mrb[0].mxu0
    %v1009 = vadd.f32 0.0, %v1008
    %1010 = vdwg.mxu0
    %1011 = vmatprep.subr.mxu0 %v879
    %1012 = vmatpush1.msra.mxu0 %v878
    %1013 = vmatprep.subr.mxu0 %v883
    %1014 = vmatpush1.msra.mxu0 %v882
    %1015 = vmatprep.subr.mxu0 %v887
    %1016 = vmatpush1.msra.mxu0 %v886
    %1017 = vmatprep.subr.mxu0 %v891
    %1018 = vmatpush1.msra.mxu0 %v890
    %1019 = vmatprep.subr.mxu0 %v895
    %1020 = vmatpush1.msra.mxu0 %v894
    %1021 = vmatprep.subr.mxu0 %v899
    %1022 = vmatpush1.msra.mxu0 %v898
    %1023 = vmatprep.subr.mxu0 %v903
    %1024 = vmatpush1.msra.mxu0 %v902
    %1025 = vmatprep.subr.mxu0 %v907
    %1026 = vmatpush1.msra.mxu0 %v906
    %1027 = vmatprep.subr.mxu0 %v911
    %1028 = vmatpush1.msra.mxu0 %v910
    %1029 = vmatprep.subr.mxu0 %v915
    %1030 = vmatpush1.msra.mxu0 %v914
    %1031 = vmatprep.subr.mxu0 %v919
    %1032 = vmatpush1.msra.mxu0 %v918
    %1033 = vmatprep.subr.mxu0 %v923
    %1034 = vmatpush1.msra.mxu0 %v922
    %1035 = vmatprep.subr.mxu0 %v927
    %1036 = vmatpush1.msra.mxu0 %v926
    %1037 = vmatprep.subr.mxu0 %v931
    %1038 = vmatpush1.msra.mxu0 %v930
    %1039 = vmatprep.subr.mxu0 %v935
    %1040 = vmatpush1.msra.mxu0 %v934
    %1041 = vmatprep.subr.mxu0 %v939
    %1042 = vmatpush1.msra.mxu0 %v938
    %1043 = vmatprep.subr.mxu0 0.0
    %1044 = vmatpush1.msra.mxu0 0.0
    %1045 = vmatprep.subr.mxu0 0.0
    %1046 = vmatpush1.msra.mxu0 0.0
    %1047 = vmatprep.subr.mxu0 0.0
    %1048 = vmatpush1.msra.mxu0 0.0
    %1049 = vmatprep.subr.mxu0 0.0
    %1050 = vmatpush1.msra.mxu0 0.0
    %1051 = vmatprep.subr.mxu0 0.0
    %1052 = vmatpush1.msra.mxu0 0.0
    %1053 = vmatprep.subr.mxu0 0.0
    %1054 = vmatpush1.msra.mxu0 0.0
    %1055 = vmatprep.subr.mxu0 0.0
    %1056 = vmatpush1.msra.mxu0 0.0
    %1057 = vmatprep.subr.mxu0 0.0
    %1058 = vmatpush1.msra.mxu0 0.0
    %1059 = vmatprep.subr.mxu0 0.0
    %1060 = vmatpush1.msra.mxu0 0.0
    %1061 = vmatprep.subr.mxu0 0.0
    %1062 = vmatpush1.msra.mxu0 0.0
    %1063 = vmatprep.subr.mxu0 0.0
    %1064 = vmatpush1.msra.mxu0 0.0
    %1065 = vmatprep.subr.mxu0 0.0
    %1066 = vmatpush1.msra.mxu0 0.0
    %1067 = vmatprep.subr.mxu0 0.0
    %1068 = vmatpush1.msra.mxu0 0.0
    %1069 = vmatprep.subr.mxu0 0.0
    %1070 = vmatpush1.msra.mxu0 0.0
    %1071 = vmatprep.subr.mxu0 0.0
    %1072 = vmatpush1.msra.mxu0 0.0
    %1073 = vmatprep.subr.mxu0 0.0
    %1074 = vmatpush1.msra.mxu0 0.0
    %1075 = vmatprep.mubr.f32.mxu0 0.0
    %1076 = vmatmul.mubr.f32.gmra.mrb[0].mxu0 %v870
    %v1077 = vpop.f32.mrb[0].mxu0
    %v1078 = vadd.f32 0.0, %v1077
    %v1079 = vpop.f32.mrb[0].mxu0
    %v1080 = vadd.f32 0.0, %v1079
    %1081 = vdwg.mxu0
    %v1082 = vadd.f32 %v872, %v1007
    %v1083 = vadd.f32 %v873, %v1009
    %v1084 = vadd.f32 %v874, %v1078
    %v1085 = vadd.f32 %v875, %v1080
    %v1086 = vxor.u32 %v1082, 2147483648
    %v1087 = vmul.f32 %v1086, 1.442695
    %v1088 = vpow.pop %v1087
    %v1089 = vadd.f32 %v1088, 1.0
    %v1090 = vrcp.pop %v1089
    %v1091 = vmul.f32 1.0, %v1090
    %v1092 = vxor.u32 %v1083, 2147483648
    %v1093 = vmul.f32 %v1092, 1.442695
    %v1094 = vpow.pop %v1093
    %v1095 = vadd.f32 %v1094, 1.0
    %v1096 = vrcp.pop %v1095
    %v1097 = vmul.f32 1.0, %v1096
    %v1098 = vtanh.pop %v1084
    %v1099 = vxor.u32 %v1085, 2147483648
    %v1100 = vmul.f32 %v1099, 1.442695
    %v1101 = vpow.pop %v1100
    %v1102 = vadd.f32 %v1101, 1.0
    %v1103 = vrcp.pop %v1102
    %v1104 = vmul.f32 1.0, %v1103
    %v1105 = vmul.f32 %v1097, %v868
    %v1106 = vmul.f32 %v1091, %v1098
    %v1107 = vadd.f32 %v1105, %v1106
    %v1108 = vtanh.pop %v1107
    %v1109 = vmul.f32 %v1104, %v1108
    %1110 = vst [vmem:[#allocation3 + $0x10] sm:$0xff] %v1109
    %v1111 = vld [vmem:[#allocation2 + $0x60] sm:$0xff]
    %v1112 = vld [vmem:[#allocation2 + $0x68] sm:$0xff]
    %v1113 = vld [vmem:[#allocation2 + $0x70] sm:$0xff]
    %v1114 = vld [vmem:[#allocation2 + $0x78] sm:$0xff]
    %v1115 = vld [vmem:[#allocation4] sm:$0xff]
    %v1116 = vld [vmem:[#allocation4 + $0x8] sm:$0xff]
    %v1117 = vld [vmem:[#allocation4 + $0x10] sm:$0xff]
    %v1118 = vld [vmem:[#allocation4 + $0x18] sm:$0xff]
    %v1119 = vld [vmem:[#allocation4 + $0x20] sm:$0xff]
    %v1120 = vld [vmem:[#allocation4 + $0x28] sm:$0xff]
    %v1121 = vld [vmem:[#allocation4 + $0x30] sm:$0xff]
    %v1122 = vld [vmem:[#allocation4 + $0x38] sm:$0xff]
    %v1123 = vld [vmem:[#allocation4 + $0x40] sm:$0xff]
    %v1124 = vld [vmem:[#allocation4 + $0x48] sm:$0xff]
    %v1125 = vld [vmem:[#allocation4 + $0x50] sm:$0xff]
    %v1126 = vld [vmem:[#allocation4 + $0x58] sm:$0xff]
    %v1127 = vld [vmem:[#allocation4 + $0x60] sm:$0xff]
    %v1128 = vld [vmem:[#allocation4 + $0x68] sm:$0xff]
    %v1129 = vld [vmem:[#allocation4 + $0x70] sm:$0xff]
    %v1130 = vld [vmem:[#allocation4 + $0x78] sm:$0xff]
    %v1131 = vld [vmem:[#allocation4 + $0x80] sm:$0xff]
    %v1132 = vld [vmem:[#allocation4 + $0x88] sm:$0xff]
    %v1133 = vld [vmem:[#allocation4 + $0x90] sm:$0xff]
    %v1134 = vld [vmem:[#allocation4 + $0x98] sm:$0xff]
    %v1135 = vld [vmem:[#allocation4 + $0xa0] sm:$0xff]
    %v1136 = vld [vmem:[#allocation4 + $0xa8] sm:$0xff]
    %v1137 = vld [vmem:[#allocation4 + $0xb0] sm:$0xff]
    %v1138 = vld [vmem:[#allocation4 + $0xb8] sm:$0xff]
    %v1139 = vld [vmem:[#allocation4 + $0xc0] sm:$0xff]
    %v1140 = vld [vmem:[#allocation4 + $0xc8] sm:$0xff]
    %v1141 = vld [vmem:[#allocation4 + $0xd0] sm:$0xff]
    %v1142 = vld [vmem:[#allocation4 + $0xd8] sm:$0xff]
    %v1143 = vld [vmem:[#allocation4 + $0xe0] sm:$0xff]
    %v1144 = vld [vmem:[#allocation4 + $0xe8] sm:$0xff]
    %v1145 = vld [vmem:[#allocation4 + $0xf0] sm:$0xff]
    %v1146 = vld [vmem:[#allocation4 + $0xf8] sm:$0xff]
    %v1147 = vld [vmem:[#allocation4 + $0x100] sm:$0xff]
    %v1148 = vld [vmem:[#allocation4 + $0x108] sm:$0xff]
    %v1149 = vld [vmem:[#allocation4 + $0x110] sm:$0xff]
    %v1150 = vld [vmem:[#allocation4 + $0x118] sm:$0xff]
    %v1151 = vld [vmem:[#allocation4 + $0x120] sm:$0xff]
    %v1152 = vld [vmem:[#allocation4 + $0x128] sm:$0xff]
    %v1153 = vld [vmem:[#allocation4 + $0x130] sm:$0xff]
    %v1154 = vld [vmem:[#allocation4 + $0x138] sm:$0xff]
    %v1155 = vld [vmem:[#allocation4 + $0x140] sm:$0xff]
    %v1156 = vld [vmem:[#allocation4 + $0x148] sm:$0xff]
    %v1157 = vld [vmem:[#allocation4 + $0x150] sm:$0xff]
    %v1158 = vld [vmem:[#allocation4 + $0x158] sm:$0xff]
    %v1159 = vld [vmem:[#allocation4 + $0x160] sm:$0xff]
    %v1160 = vld [vmem:[#allocation4 + $0x168] sm:$0xff]
    %v1161 = vld [vmem:[#allocation4 + $0x170] sm:$0xff]
    %v1162 = vld [vmem:[#allocation4 + $0x178] sm:$0xff]
    %v1163 = vld [vmem:[#allocation4 + $0x180] sm:$0xff]
    %v1164 = vld [vmem:[#allocation4 + $0x188] sm:$0xff]
    %v1165 = vld [vmem:[#allocation4 + $0x190] sm:$0xff]
    %v1166 = vld [vmem:[#allocation4 + $0x198] sm:$0xff]
    %v1167 = vld [vmem:[#allocation4 + $0x1a0] sm:$0xff]
    %v1168 = vld [vmem:[#allocation4 + $0x1a8] sm:$0xff]
    %v1169 = vld [vmem:[#allocation4 + $0x1b0] sm:$0xff]
    %v1170 = vld [vmem:[#allocation4 + $0x1b8] sm:$0xff]
    %v1171 = vld [vmem:[#allocation4 + $0x1c0] sm:$0xff]
    %v1172 = vld [vmem:[#allocation4 + $0x1c8] sm:$0xff]
    %v1173 = vld [vmem:[#allocation4 + $0x1d0] sm:$0xff]
    %v1174 = vld [vmem:[#allocation4 + $0x1d8] sm:$0xff]
    %v1175 = vld [vmem:[#allocation4 + $0x1e0] sm:$0xff]
    %v1176 = vld [vmem:[#allocation4 + $0x1e8] sm:$0xff]
    %v1177 = vld [vmem:[#allocation4 + $0x1f0] sm:$0xff]
    %v1178 = vld [vmem:[#allocation4 + $0x1f8] sm:$0xff]
    %1179 = vmatprep.subr.mxu0 %v1116
    %1180 = vmatpush1.msra.mxu0 %v1115
    %1181 = vmatprep.subr.mxu0 %v1120
    %1182 = vmatpush1.msra.mxu0 %v1119
    %1183 = vmatprep.subr.mxu0 %v1124
    %1184 = vmatpush1.msra.mxu0 %v1123
    %1185 = vmatprep.subr.mxu0 %v1128
    %1186 = vmatpush1.msra.mxu0 %v1127
    %1187 = vmatprep.subr.mxu0 %v1132
    %1188 = vmatpush1.msra.mxu0 %v1131
    %1189 = vmatprep.subr.mxu0 %v1136
    %1190 = vmatpush1.msra.mxu0 %v1135
    %1191 = vmatprep.subr.mxu0 %v1140
    %1192 = vmatpush1.msra.mxu0 %v1139
    %1193 = vmatprep.subr.mxu0 %v1144
    %1194 = vmatpush1.msra.mxu0 %v1143
    %1195 = vmatprep.subr.mxu0 %v1148
    %1196 = vmatpush1.msra.mxu0 %v1147
    %1197 = vmatprep.subr.mxu0 %v1152
    %1198 = vmatpush1.msra.mxu0 %v1151
    %1199 = vmatprep.subr.mxu0 %v1156
    %1200 = vmatpush1.msra.mxu0 %v1155
    %1201 = vmatprep.subr.mxu0 %v1160
    %1202 = vmatpush1.msra.mxu0 %v1159
    %1203 = vmatprep.subr.mxu0 %v1164
    %1204 = vmatpush1.msra.mxu0 %v1163
    %1205 = vmatprep.subr.mxu0 %v1168
    %1206 = vmatpush1.msra.mxu0 %v1167
    %1207 = vmatprep.subr.mxu0 %v1172
    %1208 = vmatpush1.msra.mxu0 %v1171
    %1209 = vmatprep.subr.mxu0 %v1176
    %1210 = vmatpush1.msra.mxu0 %v1175
    %1211 = vmatprep.subr.mxu0 0.0
    %1212 = vmatpush1.msra.mxu0 0.0
    %1213 = vmatprep.subr.mxu0 0.0
    %1214 = vmatpush1.msra.mxu0 0.0
    %1215 = vmatprep.subr.mxu0 0.0
    %1216 = vmatpush1.msra.mxu0 0.0
    %1217 = vmatprep.subr.mxu0 0.0
    %1218 = vmatpush1.msra.mxu0 0.0
    %1219 = vmatprep.subr.mxu0 0.0
    %1220 = vmatpush1.msra.mxu0 0.0
    %1221 = vmatprep.subr.mxu0 0.0
    %1222 = vmatpush1.msra.mxu0 0.0
    %1223 = vmatprep.subr.mxu0 0.0
    %1224 = vmatpush1.msra.mxu0 0.0
    %1225 = vmatprep.subr.mxu0 0.0
    %1226 = vmatpush1.msra.mxu0 0.0
    %1227 = vmatprep.subr.mxu0 0.0
    %1228 = vmatpush1.msra.mxu0 0.0
    %1229 = vmatprep.subr.mxu0 0.0
    %1230 = vmatpush1.msra.mxu0 0.0
    %1231 = vmatprep.subr.mxu0 0.0
    %1232 = vmatpush1.msra.mxu0 0.0
    %1233 = vmatprep.subr.mxu0 0.0
    %1234 = vmatpush1.msra.mxu0 0.0
    %1235 = vmatprep.subr.mxu0 0.0
    %1236 = vmatpush1.msra.mxu0 0.0
    %1237 = vmatprep.subr.mxu0 0.0
    %1238 = vmatpush1.msra.mxu0 0.0
    %1239 = vmatprep.subr.mxu0 0.0
    %1240 = vmatpush1.msra.mxu0 0.0
    %1241 = vmatprep.subr.mxu0 0.0
    %1242 = vmatpush1.msra.mxu0 0.0
    %1243 = vmatprep.mubr.f32.mxu0 0.0
    %1244 = vmatmul.mubr.f32.gmra.mrb[0].mxu0 %v1109
    %v1245 = vpop.f32.mrb[0].mxu0
    %v1246 = vadd.f32 0.0, %v1245
    %v1247 = vpop.f32.mrb[0].mxu0
    %v1248 = vadd.f32 0.0, %v1247
    %1249 = vdwg.mxu0
    %1250 = vmatprep.subr.mxu0 %v1118
    %1251 = vmatpush1.msra.mxu0 %v1117
    %1252 = vmatprep.subr.mxu0 %v1122
    %1253 = vmatpush1.msra.mxu0 %v1121
    %1254 = vmatprep.subr.mxu0 %v1126
    %1255 = vmatpush1.msra.mxu0 %v1125
    %1256 = vmatprep.subr.mxu0 %v1130
    %1257 = vmatpush1.msra.mxu0 %v1129
    %1258 = vmatprep.subr.mxu0 %v1134
    %1259 = vmatpush1.msra.mxu0 %v1133
    %1260 = vmatprep.subr.mxu0 %v1138
    %1261 = vmatpush1.msra.mxu0 %v1137
    %1262 = vmatprep.subr.mxu0 %v1142
    %1263 = vmatpush1.msra.mxu0 %v1141
    %1264 = vmatprep.subr.mxu0 %v1146
    %1265 = vmatpush1.msra.mxu0 %v1145
    %1266 = vmatprep.subr.mxu0 %v1150
    %1267 = vmatpush1.msra.mxu0 %v1149
    %1268 = vmatprep.subr.mxu0 %v1154
    %1269 = vmatpush1.msra.mxu0 %v1153
    %1270 = vmatprep.subr.mxu0 %v1158
    %1271 = vmatpush1.msra.mxu0 %v1157
    %1272 = vmatprep.subr.mxu0 %v1162
    %1273 = vmatpush1.msra.mxu0 %v1161
    %1274 = vmatprep.subr.mxu0 %v1166
    %1275 = vmatpush1.msra.mxu0 %v1165
    %1276 = vmatprep.subr.mxu0 %v1170
    %1277 = vmatpush1.msra.mxu0 %v1169
    %1278 = vmatprep.subr.mxu0 %v1174
    %1279 = vmatpush1.msra.mxu0 %v1173
    %1280 = vmatprep.subr.mxu0 %v1178
    %1281 = vmatpush1.msra.mxu0 %v1177
    %1282 = vmatprep.subr.mxu0 0.0
    %1283 = vmatpush1.msra.mxu0 0.0
    %1284 = vmatprep.subr.mxu0 0.0
    %1285 = vmatpush1.msra.mxu0 0.0
    %1286 = vmatprep.subr.mxu0 0.0
    %1287 = vmatpush1.msra.mxu0 0.0
    %1288 = vmatprep.subr.mxu0 0.0
    %1289 = vmatpush1.msra.mxu0 0.0
    %1290 = vmatprep.subr.mxu0 0.0
    %1291 = vmatpush1.msra.mxu0 0.0
    %1292 = vmatprep.subr.mxu0 0.0
    %1293 = vmatpush1.msra.mxu0 0.0
    %1294 = vmatprep.subr.mxu0 0.0
    %1295 = vmatpush1.msra.mxu0 0.0
    %1296 = vmatprep.subr.mxu0 0.0
    %1297 = vmatpush1.msra.mxu0 0.0
    %1298 = vmatprep.subr.mxu0 0.0
    %1299 = vmatpush1.msra.mxu0 0.0
    %1300 = vmatprep.subr.mxu0 0.0
    %1301 = vmatpush1.msra.mxu0 0.0
    %1302 = vmatprep.subr.mxu0 0.0
    %1303 = vmatpush1.msra.mxu0 0.0
    %1304 = vmatprep.subr.mxu0 0.0
    %1305 = vmatpush1.msra.mxu0 0.0
    %1306 = vmatprep.subr.mxu0 0.0
    %1307 = vmatpush1.msra.mxu0 0.0
    %1308 = vmatprep.subr.mxu0 0.0
    %1309 = vmatpush1.msra.mxu0 0.0
    %1310 = vmatprep.subr.mxu0 0.0
    %1311 = vmatpush1.msra.mxu0 0.0
    %1312 = vmatprep.subr.mxu0 0.0
    %1313 = vmatpush1.msra.mxu0 0.0
    %1314 = vmatprep.mubr.f32.mxu0 0.0
    %1315 = vmatmul.mubr.f32.gmra.mrb[0].mxu0 %v1109
    %v1316 = vpop.f32.mrb[0].mxu0
    %v1317 = vadd.f32 0.0, %v1316
    %v1318 = vpop.f32.mrb[0].mxu0
    %v1319 = vadd.f32 0.0, %v1318
    %1320 = vdwg.mxu0
    %v1321 = vadd.f32 %v1111, %v1246
    %v1322 = vadd.f32 %v1112, %v1248
    %v1323 = vadd.f32 %v1113, %v1317
    %v1324 = vadd.f32 %v1114, %v1319
    %v1325 = vxor.u32 %v1321, 2147483648
    %v1326 = vmul.f32 %v1325, 1.442695
    %v1327 = vpow.pop %v1326
    %v1328 = vadd.f32 %v1327, 1.0
    %v1329 = vrcp.pop %v1328
    %v1330 = vmul.f32 1.0, %v1329
    %v1331 = vxor.u32 %v1322, 2147483648
    %v1332 = vmul.f32 %v1331, 1.442695
    %v1333 = vpow.pop %v1332
    %v1334 = vadd.f32 %v1333, 1.0
    %v1335 = vrcp.pop %v1334
    %v1336 = vmul.f32 1.0, %v1335
    %v1337 = vtanh.pop %v1323
    %v1338 = vxor.u32 %v1324, 2147483648
    %v1339 = vmul.f32 %v1338, 1.442695
    %v1340 = vpow.pop %v1339
    %v1341 = vadd.f32 %v1340, 1.0
    %v1342 = vrcp.pop %v1341
    %v1343 = vmul.f32 1.0, %v1342
    %v1344 = vmul.f32 %v1336, %v1107
    %v1345 = vmul.f32 %v1330, %v1337
    %v1346 = vadd.f32 %v1344, %v1345
    %v1347 = vtanh.pop %v1346
    %v1348 = vmul.f32 %v1343, %v1347
    %1349 = vst [vmem:[#allocation3 + $0x18] sm:$0xff] %v1348
    %v1350 = vld [vmem:[#allocation2 + $0x80] sm:$0xff]
    %v1351 = vld [vmem:[#allocation2 + $0x88] sm:$0xff]
    %v1352 = vld [vmem:[#allocation2 + $0x90] sm:$0xff]
    %v1353 = vld [vmem:[#allocation2 + $0x98] sm:$0xff]
    %v1354 = vld [vmem:[#allocation4] sm:$0xff]
    %v1355 = vld [vmem:[#allocation4 + $0x8] sm:$0xff]
    %v1356 = vld [vmem:[#allocation4 + $0x10] sm:$0xff]
    %v1357 = vld [vmem:[#allocation4 + $0x18] sm:$0xff]
    %v1358 = vld [vmem:[#allocation4 + $0x20] sm:$0xff]
    %v1359 = vld [vmem:[#allocation4 + $0x28] sm:$0xff]
    %v1360 = vld [vmem:[#allocation4 + $0x30] sm:$0xff]
    %v1361 = vld [vmem:[#allocation4 + $0x38] sm:$0xff]
    %v1362 = vld [vmem:[#allocation4 + $0x40] sm:$0xff]
    %v1363 = vld [vmem:[#allocation4 + $0x48] sm:$0xff]
    %v1364 = vld [vmem:[#allocation4 + $0x50] sm:$0xff]
    %v1365 = vld [vmem:[#allocation4 + $0x58] sm:$0xff]
    %v1366 = vld [vmem:[#allocation4 + $0x60] sm:$0xff]
    %v1367 = vld [vmem:[#allocation4 + $0x68] sm:$0xff]
    %v1368 = vld [vmem:[#allocation4 + $0x70] sm:$0xff]
    %v1369 = vld [vmem:[#allocation4 + $0x78] sm:$0xff]
    %v1370 = vld [vmem:[#allocation4 + $0x80] sm:$0xff]
    %v1371 = vld [vmem:[#allocation4 + $0x88] sm:$0xff]
    %v1372 = vld [vmem:[#allocation4 + $0x90] sm:$0xff]
    %v1373 = vld [vmem:[#allocation4 + $0x98] sm:$0xff]
    %v1374 = vld [vmem:[#allocation4 + $0xa0] sm:$0xff]
    %v1375 = vld [vmem:[#allocation4 + $0xa8] sm:$0xff]
    %v1376 = vld [vmem:[#allocation4 + $0xb0] sm:$0xff]
    %v1377 = vld [vmem:[#allocation4 + $0xb8] sm:$0xff]
    %v1378 = vld [vmem:[#allocation4 + $0xc0] sm:$0xff]
    %v1379 = vld [vmem:[#allocation4 + $0xc8] sm:$0xff]
    %v1380 = vld [vmem:[#allocation4 + $0xd0] sm:$0xff]
    %v1381 = vld [vmem:[#allocation4 + $0xd8] sm:$0xff]
    %v1382 = vld [vmem:[#allocation4 + $0xe0] sm:$0xff]
    %v1383 = vld [vmem:[#allocation4 + $0xe8] sm:$0xff]
    %v1384 = vld [vmem:[#allocation4 + $0xf0] sm:$0xff]
    %v1385 = vld [vmem:[#allocation4 + $0xf8] sm:$0xff]
    %v1386 = vld [vmem:[#allocation4 + $0x100] sm:$0xff]
    %v1387 = vld [vmem:[#allocation4 + $0x108] sm:$0xff]
    %v1388 = vld [vmem:[#allocation4 + $0x110] sm:$0xff]
    %v1389 = vld [vmem:[#allocation4 + $0x118] sm:$0xff]
    %v1390 = vld [vmem:[#allocation4 + $0x120] sm:$0xff]
    %v1391 = vld [vmem:[#allocation4 + $0x128] sm:$0xff]
    %v1392 = vld [vmem:[#allocation4 + $0x130] sm:$0xff]
    %v1393 = vld [vmem:[#allocation4 + $0x138] sm:$0xff]
    %v1394 = vld [vmem:[#allocation4 + $0x140] sm:$0xff]
    %v1395 = vld [vmem:[#allocation4 + $0x148] sm:$0xff]
    %v1396 = vld [vmem:[#allocation4 + $0x150] sm:$0xff]
    %v1397 = vld [vmem:[#allocation4 + $0x158] sm:$0xff]
    %v1398 = vld [vmem:[#allocation4 + $0x160] sm:$0xff]
    %v1399 = vld [vmem:[#allocation4 + $0x168] sm:$0xff]
    %v1400 = vld [vmem:[#allocation4 + $0x170] sm:$0xff]
    %v1401 = vld [vmem:[#allocation4 + $0x178] sm:$0xff]
    %v1402 = vld [vmem:[#allocation4 + $0x180] sm:$0xff]
    %v1403 = vld [vmem:[#allocation4 + $0x188] sm:$0xff]
    %v1404 = vld [vmem:[#allocation4 + $0x190] sm:$0xff]
    %v1405 = vld [vmem:[#allocation4 + $0x198] sm:$0xff]
    %v1406 = vld [vmem:[#allocation4 + $0x1a0] sm:$0xff]
    %v1407 = vld [vmem:[#allocation4 + $0x1a8] sm:$0xff]
    %v1408 = vld [vmem:[#allocation4 + $0x1b0] sm:$0xff]
    %v1409 = vld [vmem:[#allocation4 + $0x1b8] sm:$0xff]
    %v1410 = vld [vmem:[#allocation4 + $0x1c0] sm:$0xff]
    %v1411 = vld [vmem:[#allocation4 + $0x1c8] sm:$0xff]
    %v1412 = vld [vmem:[#allocation4 + $0x1d0] sm:$0xff]
    %v1413 = vld [vmem:[#allocation4 + $0x1d8] sm:$0xff]
    %v1414 = vld [vmem:[#allocation4 + $0x1e0] sm:$0xff]
    %v1415 = vld [vmem:[#allocation4 + $0x1e8] sm:$0xff]
    %v1416 = vld [vmem:[#allocation4 + $0x1f0] sm:$0xff]
    %v1417 = vld [vmem:[#allocation4 + $0x1f8] sm:$0xff]
    %1418 = vmatprep.subr.mxu0 %v1355
    %1419 = vmatpush1.msra.mxu0 %v1354
    %1420 = vmatprep.subr.mxu0 %v1359
    %1421 = vmatpush1.msra.mxu0 %v1358
    %1422 = vmatprep.subr.mxu0 %v1363
    %1423 = vmatpush1.msra.mxu0 %v1362
    %1424 = vmatprep.subr.mxu0 %v1367
    %1425 = vmatpush1.msra.mxu0 %v1366
    %1426 = vmatprep.subr.mxu0 %v1371
    %1427 = vmatpush1.msra.mxu0 %v1370
    %1428 = vmatprep.subr.mxu0 %v1375
    %1429 = vmatpush1.msra.mxu0 %v1374
    %1430 = vmatprep.subr.mxu0 %v1379
    %1431 = vmatpush1.msra.mxu0 %v1378
    %1432 = vmatprep.subr.mxu0 %v1383
    %1433 = vmatpush1.msra.mxu0 %v1382
    %1434 = vmatprep.subr.mxu0 %v1387
    %1435 = vmatpush1.msra.mxu0 %v1386
    %1436 = vmatprep.subr.mxu0 %v1391
    %1437 = vmatpush1.msra.mxu0 %v1390
    %1438 = vmatprep.subr.mxu0 %v1395
    %1439 = vmatpush1.msra.mxu0 %v1394
    %1440 = vmatprep.subr.mxu0 %v1399
    %1441 = vmatpush1.msra.mxu0 %v1398
    %1442 = vmatprep.subr.mxu0 %v1403
    %1443 = vmatpush1.msra.mxu0 %v1402
    %1444 = vmatprep.subr.mxu0 %v1407
    %1445 = vmatpush1.msra.mxu0 %v1406
    %1446 = vmatprep.subr.mxu0 %v1411
    %1447 = vmatpush1.msra.mxu0 %v1410
    %1448 = vmatprep.subr.mxu0 %v1415
    %1449 = vmatpush1.msra.mxu0 %v1414
    %1450 = vmatprep.subr.mxu0 0.0
    %1451 = vmatpush1.msra.mxu0 0.0
    %1452 = vmatprep.subr.mxu0 0.0
    %1453 = vmatpush1.msra.mxu0 0.0
    %1454 = vmatprep.subr.mxu0 0.0
    %1455 = vmatpush1.msra.mxu0 0.0
    %1456 = vmatprep.subr.mxu0 0.0
    %1457 = vmatpush1.msra.mxu0 0.0
    %1458 = vmatprep.subr.mxu0 0.0
    %1459 = vmatpush1.msra.mxu0 0.0
    %1460 = vmatprep.subr.mxu0 0.0
    %1461 = vmatpush1.msra.mxu0 0.0
    %1462 = vmatprep.subr.mxu0 0.0
    %1463 = vmatpush1.msra.mxu0 0.0
    %1464 = vmatprep.subr.mxu0 0.0
    %1465 = vmatpush1.msra.mxu0 0.0
    %1466 = vmatprep.subr.mxu0 0.0
    %1467 = vmatpush1.msra.mxu0 0.0
    %1468 = vmatprep.subr.mxu0 0.0
    %1469 = vmatpush1.msra.mxu0 0.0
    %1470 = vmatprep.subr.mxu0 0.0
    %1471 = vmatpush1.msra.mxu0 0.0
    %1472 = vmatprep.subr.mxu0 0.0
    %1473 = vmatpush1.msra.mxu0 0.0
    %1474 = vmatprep.subr.mxu0 0.0
    %1475 = vmatpush1.msra.mxu0 0.0
    %1476 = vmatprep.subr.mxu0 0.0
    %1477 = vmatpush1.msra.mxu0 0.0
    %1478 = vmatprep.subr.mxu0 0.0
    %1479 = vmatpush1.msra.mxu0 0.0
    %1480 = vmatprep.subr.mxu0 0.0
    %1481 = vmatpush1.msra.mxu0 0.0
    %1482 = vmatprep.mubr.f32.mxu0 0.0
    %1483 = vmatmul.mubr.f32.gmra.mrb[0].mxu0 %v1348
    %v1484 = vpop.f32.mrb[0].mxu0
    %v1485 = vadd.f32 0.0, %v1484
    %v1486 = vpop.f32.mrb[0].mxu0
    %v1487 = vadd.f32 0.0, %v1486
    %1488 = vdwg.mxu0
    %1489 = vmatprep.subr.mxu0 %v1357
    %1490 = vmatpush1.msra.mxu0 %v1356
    %1491 = vmatprep.subr.mxu0 %v1361
    %1492 = vmatpush1.msra.mxu0 %v1360
    %1493 = vmatprep.subr.mxu0 %v1365
    %1494 = vmatpush1.msra.mxu0 %v1364
    %1495 = vmatprep.subr.mxu0 %v1369
    %1496 = vmatpush1.msra.mxu0 %v1368
    %1497 = vmatprep.subr.mxu0 %v1373
    %1498 = vmatpush1.msra.mxu0 %v1372
    %1499 = vmatprep.subr.mxu0 %v1377
    %1500 = vmatpush1.msra.mxu0 %v1376
    %1501 = vmatprep.subr.mxu0 %v1381
    %1502 = vmatpush1.msra.mxu0 %v1380
    %1503 = vmatprep.subr.mxu0 %v1385
    %1504 = vmatpush1.msra.mxu0 %v1384
    %1505 = vmatprep.subr.mxu0 %v1389
    %1506 = vmatpush1.msra.mxu0 %v1388
    %1507 = vmatprep.subr.mxu0 %v1393
    %1508 = vmatpush1.msra.mxu0 %v1392
    %1509 = vmatprep.subr.mxu0 %v1397
    %1510 = vmatpush1.msra.mxu0 %v1396
    %1511 = vmatprep.subr.mxu0 %v1401
    %1512 = vmatpush1.msra.mxu0 %v1400
    %1513 = vmatprep.subr.mxu0 %v1405
    %1514 = vmatpush1.msra.mxu0 %v1404
    %1515 = vmatprep.subr.mxu0 %v1409
    %1516 = vmatpush1.msra.mxu0 %v1408
    %1517 = vmatprep.subr.mxu0 %v1413
    %1518 = vmatpush1.msra.mxu0 %v1412
    %1519 = vmatprep.subr.mxu0 %v1417
    %1520 = vmatpush1.msra.mxu0 %v1416
    %1521 = vmatprep.subr.mxu0 0.0
    %1522 = vmatpush1.msra.mxu0 0.0
    %1523 = vmatprep.subr.mxu0 0.0
    %1524 = vmatpush1.msra.mxu0 0.0
    %1525 = vmatprep.subr.mxu0 0.0
    %1526 = vmatpush1.msra.mxu0 0.0
    %1527 = vmatprep.subr.mxu0 0.0
    %1528 = vmatpush1.msra.mxu0 0.0
    %1529 = vmatprep.subr.mxu0 0.0
    %1530 = vmatpush1.msra.mxu0 0.0
    %1531 = vmatprep.subr.mxu0 0.0
    %1532 = vmatpush1.msra.mxu0 0.0
    %1533 = vmatprep.subr.mxu0 0.0
    %1534 = vmatpush1.msra.mxu0 0.0
    %1535 = vmatprep.subr.mxu0 0.0
    %1536 = vmatpush1.msra.mxu0 0.0
    %1537 = vmatprep.subr.mxu0 0.0
    %1538 = vmatpush1.msra.mxu0 0.0
    %1539 = vmatprep.subr.mxu0 0.0
    %1540 = vmatpush1.msra.mxu0 0.0
    %1541 = vmatprep.subr.mxu0 0.0
    %1542 = vmatpush1.msra.mxu0 0.0
    %1543 = vmatprep.subr.mxu0 0.0
    %1544 = vmatpush1.msra.mxu0 0.0
    %1545 = vmatprep.subr.mxu0 0.0
    %1546 = vmatpush1.msra.mxu0 0.0
    %1547 = vmatprep.subr.mxu0 0.0
    %1548 = vmatpush1.msra.mxu0 0.0
    %1549 = vmatprep.subr.mxu0 0.0
    %1550 = vmatpush1.msra.mxu0 0.0
    %1551 = vmatprep.subr.mxu0 0.0
    %1552 = vmatpush1.msra.mxu0 0.0
    %1553 = vmatprep.mubr.f32.mxu0 0.0
    %1554 = vmatmul.mubr.f32.gmra.mrb[0].mxu0 %v1348
    %v1555 = vpop.f32.mrb[0].mxu0
    %v1556 = vadd.f32 0.0, %v1555
    %v1557 = vpop.f32.mrb[0].mxu0
    %v1558 = vadd.f32 0.0, %v1557
    %1559 = vdwg.mxu0
    %v1560 = vadd.f32 %v1350, %v1485
    %v1561 = vadd.f32 %v1351, %v1487
    %v1562 = vadd.f32 %v1352, %v1556
    %v1563 = vadd.f32 %v1353, %v1558
    %v1564 = vxor.u32 %v1560, 2147483648
    %v1565 = vmul.f32 %v1564, 1.442695
    %v1566 = vpow.pop %v1565
    %v1567 = vadd.f32 %v1566, 1.0
    %v1568 = vrcp.pop %v1567
    %v1569 = vmul.f32 1.0, %v1568
    %v1570 = vxor.u32 %v1561, 2147483648
    %v1571 = vmul.f32 %v1570, 1.442695
    %v1572 = vpow.pop %v1571
    %v1573 = vadd.f32 %v1572, 1.0
    %v1574 = vrcp.pop %v1573
    %v1575 = vmul.f32 1.0, %v1574
    %v1576 = vtanh.pop %v1562
    %v1577 = vxor.u32 %v1563, 2147483648
    %v1578 = vmul.f32 %v1577, 1.442695
    %v1579 = vpow.pop %v1578
    %v1580 = vadd.f32 %v1579, 1.0
    %v1581 = vrcp.pop %v1580
    %v1582 = vmul.f32 1.0, %v1581
    %v1583 = vmul.f32 %v1575, %v1346
    %v1584 = vmul.f32 %v1569, %v1576
    %v1585 = vadd.f32 %v1583, %v1584
    %v1586 = vtanh.pop %v1585
    %v1587 = vmul.f32 %v1582, %v1586
    %1588 = vst [vmem:[#allocation3 + $0x20] sm:$0xff] %v1587
    %v1589 = vld [vmem:[#allocation2 + $0xa0] sm:$0xff]
    %v1590 = vld [vmem:[#allocation2 + $0xa8] sm:$0xff]
    %v1591 = vld [vmem:[#allocation2 + $0xb0] sm:$0xff]
    %v1592 = vld [vmem:[#allocation2 + $0xb8] sm:$0xff]
    %v1593 = vld [vmem:[#allocation4] sm:$0xff]
    %v1594 = vld [vmem:[#allocation4 + $0x8] sm:$0xff]
    %v1595 = vld [vmem:[#allocation4 + $0x10] sm:$0xff]
    %v1596 = vld [vmem:[#allocation4 + $0x18] sm:$0xff]
    %v1597 = vld [vmem:[#allocation4 + $0x20] sm:$0xff]
    %v1598 = vld [vmem:[#allocation4 + $0x28] sm:$0xff]
    %v1599 = vld [vmem:[#allocation4 + $0x30] sm:$0xff]
    %v1600 = vld [vmem:[#allocation4 + $0x38] sm:$0xff]
    %v1601 = vld [vmem:[#allocation4 + $0x40] sm:$0xff]
    %v1602 = vld [vmem:[#allocation4 + $0x48] sm:$0xff]
    %v1603 = vld [vmem:[#allocation4 + $0x50] sm:$0xff]
    %v1604 = vld [vmem:[#allocation4 + $0x58] sm:$0xff]
    %v1605 = vld [vmem:[#allocation4 + $0x60] sm:$0xff]
    %v1606 = vld [vmem:[#allocation4 + $0x68] sm:$0xff]
    %v1607 = vld [vmem:[#allocation4 + $0x70] sm:$0xff]
    %v1608 = vld [vmem:[#allocation4 + $0x78] sm:$0xff]
    %v1609 = vld [vmem:[#allocation4 + $0x80] sm:$0xff]
    %v1610 = vld [vmem:[#allocation4 + $0x88] sm:$0xff]
    %v1611 = vld [vmem:[#allocation4 + $0x90] sm:$0xff]
    %v1612 = vld [vmem:[#allocation4 + $0x98] sm:$0xff]
    %v1613 = vld [vmem:[#allocation4 + $0xa0] sm:$0xff]
    %v1614 = vld [vmem:[#allocation4 + $0xa8] sm:$0xff]
    %v1615 = vld [vmem:[#allocation4 + $0xb0] sm:$0xff]
    %v1616 = vld [vmem:[#allocation4 + $0xb8] sm:$0xff]
    %v1617 = vld [vmem:[#allocation4 + $0xc0] sm:$0xff]
    %v1618 = vld [vmem:[#allocation4 + $0xc8] sm:$0xff]
    %v1619 = vld [vmem:[#allocation4 + $0xd0] sm:$0xff]
    %v1620 = vld [vmem:[#allocation4 + $0xd8] sm:$0xff]
    %v1621 = vld [vmem:[#allocation4 + $0xe0] sm:$0xff]
    %v1622 = vld [vmem:[#allocation4 + $0xe8] sm:$0xff]
    %v1623 = vld [vmem:[#allocation4 + $0xf0] sm:$0xff]
    %v1624 = vld [vmem:[#allocation4 + $0xf8] sm:$0xff]
    %v1625 = vld [vmem:[#allocation4 + $0x100] sm:$0xff]
    %v1626 = vld [vmem:[#allocation4 + $0x108] sm:$0xff]
    %v1627 = vld [vmem:[#allocation4 + $0x110] sm:$0xff]
    %v1628 = vld [vmem:[#allocation4 + $0x118] sm:$0xff]
    %v1629 = vld [vmem:[#allocation4 + $0x120] sm:$0xff]
    %v1630 = vld [vmem:[#allocation4 + $0x128] sm:$0xff]
    %v1631 = vld [vmem:[#allocation4 + $0x130] sm:$0xff]
    %v1632 = vld [vmem:[#allocation4 + $0x138] sm:$0xff]
    %v1633 = vld [vmem:[#allocation4 + $0x140] sm:$0xff]
    %v1634 = vld [vmem:[#allocation4 + $0x148] sm:$0xff]
    %v1635 = vld [vmem:[#allocation4 + $0x150] sm:$0xff]
    %v1636 = vld [vmem:[#allocation4 + $0x158] sm:$0xff]
    %v1637 = vld [vmem:[#allocation4 + $0x160] sm:$0xff]
    %v1638 = vld [vmem:[#allocation4 + $0x168] sm:$0xff]
    %v1639 = vld [vmem:[#allocation4 + $0x170] sm:$0xff]
    %v1640 = vld [vmem:[#allocation4 + $0x178] sm:$0xff]
    %v1641 = vld [vmem:[#allocation4 + $0x180] sm:$0xff]
    %v1642 = vld [vmem:[#allocation4 + $0x188] sm:$0xff]
    %v1643 = vld [vmem:[#allocation4 + $0x190] sm:$0xff]
    %v1644 = vld [vmem:[#allocation4 + $0x198] sm:$0xff]
    %v1645 = vld [vmem:[#allocation4 + $0x1a0] sm:$0xff]
    %v1646 = vld [vmem:[#allocation4 + $0x1a8] sm:$0xff]
    %v1647 = vld [vmem:[#allocation4 + $0x1b0] sm:$0xff]
    %v1648 = vld [vmem:[#allocation4 + $0x1b8] sm:$0xff]
    %v1649 = vld [vmem:[#allocation4 + $0x1c0] sm:$0xff]
    %v1650 = vld [vmem:[#allocation4 + $0x1c8] sm:$0xff]
    %v1651 = vld [vmem:[#allocation4 + $0x1d0] sm:$0xff]
    %v1652 = vld [vmem:[#allocation4 + $0x1d8] sm:$0xff]
    %v1653 = vld [vmem:[#allocation4 + $0x1e0] sm:$0xff]
    %v1654 = vld [vmem:[#allocation4 + $0x1e8] sm:$0xff]
    %v1655 = vld [vmem:[#allocation4 + $0x1f0] sm:$0xff]
    %v1656 = vld [vmem:[#allocation4 + $0x1f8] sm:$0xff]
    %1657 = vmatprep.subr.mxu0 %v1594
    %1658 = vmatpush1.msra.mxu0 %v1593
    %1659 = vmatprep.subr.mxu0 %v1598
    %1660 = vmatpush1.msra.mxu0 %v1597
    %1661 = vmatprep.subr.mxu0 %v1602
    %1662 = vmatpush1.msra.mxu0 %v1601
    %1663 = vmatprep.subr.mxu0 %v1606
    %1664 = vmatpush1.msra.mxu0 %v1605
    %1665 = vmatprep.subr.mxu0 %v1610
    %1666 = vmatpush1.msra.mxu0 %v1609
    %1667 = vmatprep.subr.mxu0 %v1614
    %1668 = vmatpush1.msra.mxu0 %v1613
    %1669 = vmatprep.subr.mxu0 %v1618
    %1670 = vmatpush1.msra.mxu0 %v1617
    %1671 = vmatprep.subr.mxu0 %v1622
    %1672 = vmatpush1.msra.mxu0 %v1621
    %1673 = vmatprep.subr.mxu0 %v1626
    %1674 = vmatpush1.msra.mxu0 %v1625
    %1675 = vmatprep.subr.mxu0 %v1630
    %1676 = vmatpush1.msra.mxu0 %v1629
    %1677 = vmatprep.subr.mxu0 %v1634
    %1678 = vmatpush1.msra.mxu0 %v1633
    %1679 = vmatprep.subr.mxu0 %v1638
    %1680 = vmatpush1.msra.mxu0 %v1637
    %1681 = vmatprep.subr.mxu0 %v1642
    %1682 = vmatpush1.msra.mxu0 %v1641
    %1683 = vmatprep.subr.mxu0 %v1646
    %1684 = vmatpush1.msra.mxu0 %v1645
    %1685 = vmatprep.subr.mxu0 %v1650
    %1686 = vmatpush1.msra.mxu0 %v1649
    %1687 = vmatprep.subr.mxu0 %v1654
    %1688 = vmatpush1.msra.mxu0 %v1653
    %1689 = vmatprep.subr.mxu0 0.0
    %1690 = vmatpush1.msra.mxu0 0.0
    %1691 = vmatprep.subr.mxu0 0.0
    %1692 = vmatpush1.msra.mxu0 0.0
    %1693 = vmatprep.subr.mxu0 0.0
    %1694 = vmatpush1.msra.mxu0 0.0
    %1695 = vmatprep.subr.mxu0 0.0
    %1696 = vmatpush1.msra.mxu0 0.0
    %1697 = vmatprep.subr.mxu0 0.0
    %1698 = vmatpush1.msra.mxu0 0.0
    %1699 = vmatprep.subr.mxu0 0.0
    %1700 = vmatpush1.msra.mxu0 0.0
    %1701 = vmatprep.subr.mxu0 0.0
    %1702 = vmatpush1.msra.mxu0 0.0
    %1703 = vmatprep.subr.mxu0 0.0
    %1704 = vmatpush1.msra.mxu0 0.0
    %1705 = vmatprep.subr.mxu0 0.0
    %1706 = vmatpush1.msra.mxu0 0.0
    %1707 = vmatprep.subr.mxu0 0.0
    %1708 = vmatpush1.msra.mxu0 0.0
    %1709 = vmatprep.subr.mxu0 0.0
    %1710 = vmatpush1.msra.mxu0 0.0
    %1711 = vmatprep.subr.mxu0 0.0
    %1712 = vmatpush1.msra.mxu0 0.0
    %1713 = vmatprep.subr.mxu0 0.0
    %1714 = vmatpush1.msra.mxu0 0.0
    %1715 = vmatprep.subr.mxu0 0.0
    %1716 = vmatpush1.msra.mxu0 0.0
    %1717 = vmatprep.subr.mxu0 0.0
    %1718 = vmatpush1.msra.mxu0 0.0
    %1719 = vmatprep.subr.mxu0 0.0
    %1720 = vmatpush1.msra.mxu0 0.0
    %1721 = vmatprep.mubr.f32.mxu0 0.0
    %1722 = vmatmul.mubr.f32.gmra.mrb[0].mxu0 %v1587
    %v1723 = vpop.f32.mrb[0].mxu0
    %v1724 = vadd.f32 0.0, %v1723
    %v1725 = vpop.f32.mrb[0].mxu0
    %v1726 = vadd.f32 0.0, %v1725
    %1727 = vdwg.mxu0
    %1728 = vmatprep.subr.mxu0 %v1596
    %1729 = vmatpush1.msra.mxu0 %v1595
    %1730 = vmatprep.subr.mxu0 %v1600
    %1731 = vmatpush1.msra.mxu0 %v1599
    %1732 = vmatprep.subr.mxu0 %v1604
    %1733 = vmatpush1.msra.mxu0 %v1603
    %1734 = vmatprep.subr.mxu0 %v1608
    %1735 = vmatpush1.msra.mxu0 %v1607
    %1736 = vmatprep.subr.mxu0 %v1612
    %1737 = vmatpush1.msra.mxu0 %v1611
    %1738 = vmatprep.subr.mxu0 %v1616
    %1739 = vmatpush1.msra.mxu0 %v1615
    %1740 = vmatprep.subr.mxu0 %v1620
    %1741 = vmatpush1.msra.mxu0 %v1619
    %1742 = vmatprep.subr.mxu0 %v1624
    %1743 = vmatpush1.msra.mxu0 %v1623
    %1744 = vmatprep.subr.mxu0 %v1628
    %1745 = vmatpush1.msra.mxu0 %v1627
    %1746 = vmatprep.subr.mxu0 %v1632
    %1747 = vmatpush1.msra.mxu0 %v1631
    %1748 = vmatprep.subr.mxu0 %v1636
    %1749 = vmatpush1.msra.mxu0 %v1635
    %1750 = vmatprep.subr.mxu0 %v1640
    %1751 = vmatpush1.msra.mxu0 %v1639
    %1752 = vmatprep.subr.mxu0 %v1644
    %1753 = vmatpush1.msra.mxu0 %v1643
    %1754 = vmatprep.subr.mxu0 %v1648
    %1755 = vmatpush1.msra.mxu0 %v1647
    %1756 = vmatprep.subr.mxu0 %v1652
    %1757 = vmatpush1.msra.mxu0 %v1651
    %1758 = vmatprep.subr.mxu0 %v1656
    %1759 = vmatpush1.msra.mxu0 %v1655
    %1760 = vmatprep.subr.mxu0 0.0
    %1761 = vmatpush1.msra.mxu0 0.0
    %1762 = vmatprep.subr.mxu0 0.0
    %1763 = vmatpush1.msra.mxu0 0.0
    %1764 = vmatprep.subr.mxu0 0.0
    %1765 = vmatpush1.msra.mxu0 0.0
    %1766 = vmatprep.subr.mxu0 0.0
    %1767 = vmatpush1.msra.mxu0 0.0
    %1768 = vmatprep.subr.mxu0 0.0
    %1769 = vmatpush1.msra.mxu0 0.0
    %1770 = vmatprep.subr.mxu0 0.0
    %1771 = vmatpush1.msra.mxu0 0.0
    %1772 = vmatprep.subr.mxu0 0.0
    %1773 = vmatpush1.msra.mxu0 0.0
    %1774 = vmatprep.subr.mxu0 0.0
    %1775 = vmatpush1.msra.mxu0 0.0
    %1776 = vmatprep.subr.mxu0 0.0
    %1777 = vmatpush1.msra.mxu0 0.0
    %1778 = vmatprep.subr.mxu0 0.0
    %1779 = vmatpush1.msra.mxu0 0.0
    %1780 = vmatprep.subr.mxu0 0.0
    %1781 = vmatpush1.msra.mxu0 0.0
    %1782 = vmatprep.subr.mxu0 0.0
    %1783 = vmatpush1.msra.mxu0 0.0
    %1784 = vmatprep.subr.mxu0 0.0
    %1785 = vmatpush1.msra.mxu0 0.0
    %1786 = vmatprep.subr.mxu0 0.0
    %1787 = vmatpush1.msra.mxu0 0.0
    %1788 = vmatprep.subr.mxu0 0.0
    %1789 = vmatpush1.msra.mxu0 0.0
    %1790 = vmatprep.subr.mxu0 0.0
    %1791 = vmatpush1.msra.mxu0 0.0
    %1792 = vmatprep.mubr.f32.mxu0 0.0
    %1793 = vmatmul.mubr.f32.gmra.mrb[0].mxu0 %v1587
    %v1794 = vpop.f32.mrb[0].mxu0
    %v1795 = vadd.f32 0.0, %v1794
    %v1796 = vpop.f32.mrb[0].mxu0
    %v1797 = vadd.f32 0.0, %v1796
    %1798 = vdwg.mxu0
    %v1799 = vadd.f32 %v1589, %v1724
    %v1800 = vadd.f32 %v1590, %v1726
    %v1801 = vadd.f32 %v1591, %v1795
    %v1802 = vadd.f32 %v1592, %v1797
    %v1803 = vxor.u32 %v1799, 2147483648
    %v1804 = vmul.f32 %v1803, 1.442695
    %v1805 = vpow.pop %v1804
    %v1806 = vadd.f32 %v1805, 1.0
    %v1807 = vrcp.pop %v1806
    %v1808 = vmul.f32 1.0, %v1807
    %v1809 = vxor.u32 %v1800, 2147483648
    %v1810 = vmul.f32 %v1809, 1.442695
    %v1811 = vpow.pop %v1810
    %v1812 = vadd.f32 %v1811, 1.0
    %v1813 = vrcp.pop %v1812
    %v1814 = vmul.f32 1.0, %v1813
    %v1815 = vtanh.pop %v1801
    %v1816 = vxor.u32 %v1802, 2147483648
    %v1817 = vmul.f32 %v1816, 1.442695
    %v1818 = vpow.pop %v1817
    %v1819 = vadd.f32 %v1818, 1.0
    %v1820 = vrcp.pop %v1819
    %v1821 = vmul.f32 1.0, %v1820
    %v1822 = vmul.f32 %v1814, %v1585
    %v1823 = vmul.f32 %v1808, %v1815
    %v1824 = vadd.f32 %v1822, %v1823
    %v1825 = vtanh.pop %v1824
    %v1826 = vmul.f32 %v1821, %v1825
    %1827 = vst [vmem:[#allocation3 + $0x28] sm:$0xff] %v1826
    %v1828 = vld [vmem:[#allocation2 + $0xc0] sm:$0xff]
    %v1829 = vld [vmem:[#allocation2 + $0xc8] sm:$0xff]
    %v1830 = vld [vmem:[#allocation2 + $0xd0] sm:$0xff]
    %v1831 = vld [vmem:[#allocation2 + $0xd8] sm:$0xff]
    %v1832 = vld [vmem:[#allocation4] sm:$0xff]
    %v1833 = vld [vmem:[#allocation4 + $0x8] sm:$0xff]
    %v1834 = vld [vmem:[#allocation4 + $0x10] sm:$0xff]
    %v1835 = vld [vmem:[#allocation4 + $0x18] sm:$0xff]
    %v1836 = vld [vmem:[#allocation4 + $0x20] sm:$0xff]
    %v1837 = vld [vmem:[#allocation4 + $0x28] sm:$0xff]
    %v1838 = vld [vmem:[#allocation4 + $0x30] sm:$0xff]
    %v1839 = vld [vmem:[#allocation4 + $0x38] sm:$0xff]
    %v1840 = vld [vmem:[#allocation4 + $0x40] sm:$0xff]
    %v1841 = vld [vmem:[#allocation4 + $0x48] sm:$0xff]
    %v1842 = vld [vmem:[#allocation4 + $0x50] sm:$0xff]
    %v1843 = vld [vmem:[#allocation4 + $0x58] sm:$0xff]
    %v1844 = vld [vmem:[#allocation4 + $0x60] sm:$0xff]
    %v1845 = vld [vmem:[#allocation4 + $0x68] sm:$0xff]
    %v1846 = vld [vmem:[#allocation4 + $0x70] sm:$0xff]
    %v1847 = vld [vmem:[#allocation4 + $0x78] sm:$0xff]
    %v1848 = vld [vmem:[#allocation4 + $0x80] sm:$0xff]
    %v1849 = vld [vmem:[#allocation4 + $0x88] sm:$0xff]
    %v1850 = vld [vmem:[#allocation4 + $0x90] sm:$0xff]
    %v1851 = vld [vmem:[#allocation4 + $0x98] sm:$0xff]
    %v1852 = vld [vmem:[#allocation4 + $0xa0] sm:$0xff]
    %v1853 = vld [vmem:[#allocation4 + $0xa8] sm:$0xff]
    %v1854 = vld [vmem:[#allocation4 + $0xb0] sm:$0xff]
    %v1855 = vld [vmem:[#allocation4 + $0xb8] sm:$0xff]
    %v1856 = vld [vmem:[#allocation4 + $0xc0] sm:$0xff]
    %v1857 = vld [vmem:[#allocation4 + $0xc8] sm:$0xff]
    %v1858 = vld [vmem:[#allocation4 + $0xd0] sm:$0xff]
    %v1859 = vld [vmem:[#allocation4 + $0xd8] sm:$0xff]
    %v1860 = vld [vmem:[#allocation4 + $0xe0] sm:$0xff]
    %v1861 = vld [vmem:[#allocation4 + $0xe8] sm:$0xff]
    %v1862 = vld [vmem:[#allocation4 + $0xf0] sm:$0xff]
    %v1863 = vld [vmem:[#allocation4 + $0xf8] sm:$0xff]
    %v1864 = vld [vmem:[#allocation4 + $0x100] sm:$0xff]
    %v1865 = vld [vmem:[#allocation4 + $0x108] sm:$0xff]
    %v1866 = vld [vmem:[#allocation4 + $0x110] sm:$0xff]
    %v1867 = vld [vmem:[#allocation4 + $0x118] sm:$0xff]
    %v1868 = vld [vmem:[#allocation4 + $0x120] sm:$0xff]
    %v1869 = vld [vmem:[#allocation4 + $0x128] sm:$0xff]
    %v1870 = vld [vmem:[#allocation4 + $0x130] sm:$0xff]
    %v1871 = vld [vmem:[#allocation4 + $0x138] sm:$0xff]
    %v1872 = vld [vmem:[#allocation4 + $0x140] sm:$0xff]
    %v1873 = vld [vmem:[#allocation4 + $0x148] sm:$0xff]
    %v1874 = vld [vmem:[#allocation4 + $0x150] sm:$0xff]
    %v1875 = vld [vmem:[#allocation4 + $0x158] sm:$0xff]
    %v1876 = vld [vmem:[#allocation4 + $0x160] sm:$0xff]
    %v1877 = vld [vmem:[#allocation4 + $0x168] sm:$0xff]
    %v1878 = vld [vmem:[#allocation4 + $0x170] sm:$0xff]
    %v1879 = vld [vmem:[#allocation4 + $0x178] sm:$0xff]
    %v1880 = vld [vmem:[#allocation4 + $0x180] sm:$0xff]
    %v1881 = vld [vmem:[#allocation4 + $0x188] sm:$0xff]
    %v1882 = vld [vmem:[#allocation4 + $0x190] sm:$0xff]
    %v1883 = vld [vmem:[#allocation4 + $0x198] sm:$0xff]
    %v1884 = vld [vmem:[#allocation4 + $0x1a0] sm:$0xff]
    %v1885 = vld [vmem:[#allocation4 + $0x1a8] sm:$0xff]
    %v1886 = vld [vmem:[#allocation4 + $0x1b0] sm:$0xff]
    %v1887 = vld [vmem:[#allocation4 + $0x1b8] sm:$0xff]
    %v1888 = vld [vmem:[#allocation4 + $0x1c0] sm:$0xff]
    %v1889 = vld [vmem:[#allocation4 + $0x1c8] sm:$0xff]
    %v1890 = vld [vmem:[#allocation4 + $0x1d0] sm:$0xff]
    %v1891 = vld [vmem:[#allocation4 + $0x1d8] sm:$0xff]
    %v1892 = vld [vmem:[#allocation4 + $0x1e0] sm:$0xff]
    %v1893 = vld [vmem:[#allocation4 + $0x1e8] sm:$0xff]
    %v1894 = vld [vmem:[#allocation4 + $0x1f0] sm:$0xff]
    %v1895 = vld [vmem:[#allocation4 + $0x1f8] sm:$0xff]
    %1896 = vmatprep.subr.mxu0 %v1833
    %1897 = vmatpush1.msra.mxu0 %v1832
    %1898 = vmatprep.subr.mxu0 %v1837
    %1899 = vmatpush1.msra.mxu0 %v1836
    %1900 = vmatprep.subr.mxu0 %v1841
    %1901 = vmatpush1.msra.mxu0 %v1840
    %1902 = vmatprep.subr.mxu0 %v1845
    %1903 = vmatpush1.msra.mxu0 %v1844
    %1904 = vmatprep.subr.mxu0 %v1849
    %1905 = vmatpush1.msra.mxu0 %v1848
    %1906 = vmatprep.subr.mxu0 %v1853
    %1907 = vmatpush1.msra.mxu0 %v1852
    %1908 = vmatprep.subr.mxu0 %v1857
    %1909 = vmatpush1.msra.mxu0 %v1856
    %1910 = vmatprep.subr.mxu0 %v1861
    %1911 = vmatpush1.msra.mxu0 %v1860
    %1912 = vmatprep.subr.mxu0 %v1865
    %1913 = vmatpush1.msra.mxu0 %v1864
    %1914 = vmatprep.subr.mxu0 %v1869
    %1915 = vmatpush1.msra.mxu0 %v1868
    %1916 = vmatprep.subr.mxu0 %v1873
    %1917 = vmatpush1.msra.mxu0 %v1872
    %1918 = vmatprep.subr.mxu0 %v1877
    %1919 = vmatpush1.msra.mxu0 %v1876
    %1920 = vmatprep.subr.mxu0 %v1881
    %1921 = vmatpush1.msra.mxu0 %v1880
    %1922 = vmatprep.subr.mxu0 %v1885
    %1923 = vmatpush1.msra.mxu0 %v1884
    %1924 = vmatprep.subr.mxu0 %v1889
    %1925 = vmatpush1.msra.mxu0 %v1888
    %1926 = vmatprep.subr.mxu0 %v1893
    %1927 = vmatpush1.msra.mxu0 %v1892
    %1928 = vmatprep.subr.mxu0 0.0
    %1929 = vmatpush1.msra.mxu0 0.0
    %1930 = vmatprep.subr.mxu0 0.0
    %1931 = vmatpush1.msra.mxu0 0.0
    %1932 = vmatprep.subr.mxu0 0.0
    %1933 = vmatpush1.msra.mxu0 0.0
    %1934 = vmatprep.subr.mxu0 0.0
    %1935 = vmatpush1.msra.mxu0 0.0
    %1936 = vmatprep.subr.mxu0 0.0
    %1937 = vmatpush1.msra.mxu0 0.0
    %1938 = vmatprep.subr.mxu0 0.0
    %1939 = vmatpush1.msra.mxu0 0.0
    %1940 = vmatprep.subr.mxu0 0.0
    %1941 = vmatpush1.msra.mxu0 0.0
    %1942 = vmatprep.subr.mxu0 0.0
    %1943 = vmatpush1.msra.mxu0 0.0
    %1944 = vmatprep.subr.mxu0 0.0
    %1945 = vmatpush1.msra.mxu0 0.0
    %1946 = vmatprep.subr.mxu0 0.0
    %1947 = vmatpush1.msra.mxu0 0.0
    %1948 = vmatprep.subr.mxu0 0.0
    %1949 = vmatpush1.msra.mxu0 0.0
    %1950 = vmatprep.subr.mxu0 0.0
    %1951 = vmatpush1.msra.mxu0 0.0
    %1952 = vmatprep.subr.mxu0 0.0
    %1953 = vmatpush1.msra.mxu0 0.0
    %1954 = vmatprep.subr.mxu0 0.0
    %1955 = vmatpush1.msra.mxu0 0.0
    %1956 = vmatprep.subr.mxu0 0.0
    %1957 = vmatpush1.msra.mxu0 0.0
    %1958 = vmatprep.subr.mxu0 0.0
    %1959 = vmatpush1.msra.mxu0 0.0
    %1960 = vmatprep.mubr.f32.mxu0 0.0
    %1961 = vmatmul.mubr.f32.gmra.mrb[0].mxu0 %v1826
    %v1962 = vpop.f32.mrb[0].mxu0
    %v1963 = vadd.f32 0.0, %v1962
    %v1964 = vpop.f32.mrb[0].mxu0
    %v1965 = vadd.f32 0.0, %v1964
    %1966 = vdwg.mxu0
    %1967 = vmatprep.subr.mxu0 %v1835
    %1968 = vmatpush1.msra.mxu0 %v1834
    %1969 = vmatprep.subr.mxu0 %v1839
    %1970 = vmatpush1.msra.mxu0 %v1838
    %1971 = vmatprep.subr.mxu0 %v1843
    %1972 = vmatpush1.msra.mxu0 %v1842
    %1973 = vmatprep.subr.mxu0 %v1847
    %1974 = vmatpush1.msra.mxu0 %v1846
    %1975 = vmatprep.subr.mxu0 %v1851
    %1976 = vmatpush1.msra.mxu0 %v1850
    %1977 = vmatprep.subr.mxu0 %v1855
    %1978 = vmatpush1.msra.mxu0 %v1854
    %1979 = vmatprep.subr.mxu0 %v1859
    %1980 = vmatpush1.msra.mxu0 %v1858
    %1981 = vmatprep.subr.mxu0 %v1863
    %1982 = vmatpush1.msra.mxu0 %v1862
    %1983 = vmatprep.subr.mxu0 %v1867
    %1984 = vmatpush1.msra.mxu0 %v1866
    %1985 = vmatprep.subr.mxu0 %v1871
    %1986 = vmatpush1.msra.mxu0 %v1870
    %1987 = vmatprep.subr.mxu0 %v1875
    %1988 = vmatpush1.msra.mxu0 %v1874
    %1989 = vmatprep.subr.mxu0 %v1879
    %1990 = vmatpush1.msra.mxu0 %v1878
    %1991 = vmatprep.subr.mxu0 %v1883
    %1992 = vmatpush1.msra.mxu0 %v1882
    %1993 = vmatprep.subr.mxu0 %v1887
    %1994 = vmatpush1.msra.mxu0 %v1886
    %1995 = vmatprep.subr.mxu0 %v1891
    %1996 = vmatpush1.msra.mxu0 %v1890
    %1997 = vmatprep.subr.mxu0 %v1895
    %1998 = vmatpush1.msra.mxu0 %v1894
    %1999 = vmatprep.subr.mxu0 0.0
    %2000 = vmatpush1.msra.mxu0 0.0
    %2001 = vmatprep.subr.mxu0 0.0
    %2002 = vmatpush1.msra.mxu0 0.0
    %2003 = vmatprep.subr.mxu0 0.0
    %2004 = vmatpush1.msra.mxu0 0.0
    %2005 = vmatprep.subr.mxu0 0.0
    %2006 = vmatpush1.msra.mxu0 0.0
    %2007 = vmatprep.subr.mxu0 0.0
    %2008 = vmatpush1.msra.mxu0 0.0
    %2009 = vmatprep.subr.mxu0 0.0
    %2010 = vmatpush1.msra.mxu0 0.0
    %2011 = vmatprep.subr.mxu0 0.0
    %2012 = vmatpush1.msra.mxu0 0.0
    %2013 = vmatprep.subr.mxu0 0.0
    %2014 = vmatpush1.msra.mxu0 0.0
    %2015 = vmatprep.subr.mxu0 0.0
    %2016 = vmatpush1.msra.mxu0 0.0
    %2017 = vmatprep.subr.mxu0 0.0
    %2018 = vmatpush1.msra.mxu0 0.0
    %2019 = vmatprep.subr.mxu0 0.0
    %2020 = vmatpush1.msra.mxu0 0.0
    %2021 = vmatprep.subr.mxu0 0.0
    %2022 = vmatpush1.msra.mxu0 0.0
    %2023 = vmatprep.subr.mxu0 0.0
    %2024 = vmatpush1.msra.mxu0 0.0
    %2025 = vmatprep.subr.mxu0 0.0
    %2026 = vmatpush1.msra.mxu0 0.0
    %2027 = vmatprep.subr.mxu0 0.0
    %2028 = vmatpush1.msra.mxu0 0.0
    %2029 = vmatprep.subr.mxu0 0.0
    %2030 = vmatpush1.msra.mxu0 0.0
    %2031 = vmatprep.mubr.f32.mxu0 0.0
    %2032 = vmatmul.mubr.f32.gmra.mrb[0].mxu0 %v1826
    %v2033 = vpop.f32.mrb[0].mxu0
    %v2034 = vadd.f32 0.0, %v2033
    %v2035 = vpop.f32.mrb[0].mxu0
    %v2036 = vadd.f32 0.0, %v2035
    %2037 = vdwg.mxu0
    %v2038 = vadd.f32 %v1828, %v1963
    %v2039 = vadd.f32 %v1829, %v1965
    %v2040 = vadd.f32 %v1830, %v2034
    %v2041 = vadd.f32 %v1831, %v2036
    %v2042 = vxor.u32 %v2038, 2147483648
    %v2043 = vmul.f32 %v2042, 1.442695
    %v2044 = vpow.pop %v2043
    %v2045 = vadd.f32 %v2044, 1.0
    %v2046 = vrcp.pop %v2045
    %v2047 = vmul.f32 1.0, %v2046
    %v2048 = vxor.u32 %v2039, 2147483648
    %v2049 = vmul.f32 %v2048, 1.442695
    %v2050 = vpow.pop %v2049
    %v2051 = vadd.f32 %v2050, 1.0
    %v2052 = vrcp.pop %v2051
    %v2053 = vmul.f32 1.0, %v2052
    %v2054 = vtanh.pop %v2040
    %v2055 = vxor.u32 %v2041, 2147483648
    %v2056 = vmul.f32 %v2055, 1.442695
    %v2057 = vpow.pop %v2056
    %v2058 = vadd.f32 %v2057, 1.0
    %v2059 = vrcp.pop %v2058
    %v2060 = vmul.f32 1.0, %v2059
    %v2061 = vmul.f32 %v2053, %v1824
    %v2062 = vmul.f32 %v2047, %v2054
    %v2063 = vadd.f32 %v2061, %v2062
    %v2064 = vtanh.pop %v2063
    %v2065 = vmul.f32 %v2060, %v2064
    %2066 = vst [vmem:[#allocation3 + $0x30] sm:$0xff] %v2065
    %v2067 = vld [vmem:[#allocation2 + $0xe0] sm:$0xff]
    %v2068 = vld [vmem:[#allocation2 + $0xe8] sm:$0xff]
    %v2069 = vld [vmem:[#allocation2 + $0xf0] sm:$0xff]
    %v2070 = vld [vmem:[#allocation2 + $0xf8] sm:$0xff]
    %v2071 = vld [vmem:[#allocation4] sm:$0xff]
    %v2072 = vld [vmem:[#allocation4 + $0x8] sm:$0xff]
    %v2073 = vld [vmem:[#allocation4 + $0x10] sm:$0xff]
    %v2074 = vld [vmem:[#allocation4 + $0x18] sm:$0xff]
    %v2075 = vld [vmem:[#allocation4 + $0x20] sm:$0xff]
    %v2076 = vld [vmem:[#allocation4 + $0x28] sm:$0xff]
    %v2077 = vld [vmem:[#allocation4 + $0x30] sm:$0xff]
    %v2078 = vld [vmem:[#allocation4 + $0x38] sm:$0xff]
    %v2079 = vld [vmem:[#allocation4 + $0x40] sm:$0xff]
    %v2080 = vld [vmem:[#allocation4 + $0x48] sm:$0xff]
    %v2081 = vld [vmem:[#allocation4 + $0x50] sm:$0xff]
    %v2082 = vld [vmem:[#allocation4 + $0x58] sm:$0xff]
    %v2083 = vld [vmem:[#allocation4 + $0x60] sm:$0xff]
    %v2084 = vld [vmem:[#allocation4 + $0x68] sm:$0xff]
    %v2085 = vld [vmem:[#allocation4 + $0x70] sm:$0xff]
    %v2086 = vld [vmem:[#allocation4 + $0x78] sm:$0xff]
    %v2087 = vld [vmem:[#allocation4 + $0x80] sm:$0xff]
    %v2088 = vld [vmem:[#allocation4 + $0x88] sm:$0xff]
    %v2089 = vld [vmem:[#allocation4 + $0x90] sm:$0xff]
    %v2090 = vld [vmem:[#allocation4 + $0x98] sm:$0xff]
    %v2091 = vld [vmem:[#allocation4 + $0xa0] sm:$0xff]
    %v2092 = vld [vmem:[#allocation4 + $0xa8] sm:$0xff]
    %v2093 = vld [vmem:[#allocation4 + $0xb0] sm:$0xff]
    %v2094 = vld [vmem:[#allocation4 + $0xb8] sm:$0xff]
    %v2095 = vld [vmem:[#allocation4 + $0xc0] sm:$0xff]
    %v2096 = vld [vmem:[#allocation4 + $0xc8] sm:$0xff]
    %v2097 = vld [vmem:[#allocation4 + $0xd0] sm:$0xff]
    %v2098 = vld [vmem:[#allocation4 + $0xd8] sm:$0xff]
    %v2099 = vld [vmem:[#allocation4 + $0xe0] sm:$0xff]
    %v2100 = vld [vmem:[#allocation4 + $0xe8] sm:$0xff]
    %v2101 = vld [vmem:[#allocation4 + $0xf0] sm:$0xff]
    %v2102 = vld [vmem:[#allocation4 + $0xf8] sm:$0xff]
    %v2103 = vld [vmem:[#allocation4 + $0x100] sm:$0xff]
    %v2104 = vld [vmem:[#allocation4 + $0x108] sm:$0xff]
    %v2105 = vld [vmem:[#allocation4 + $0x110] sm:$0xff]
    %v2106 = vld [vmem:[#allocation4 + $0x118] sm:$0xff]
    %v2107 = vld [vmem:[#allocation4 + $0x120] sm:$0xff]
    %v2108 = vld [vmem:[#allocation4 + $0x128] sm:$0xff]
    %v2109 = vld [vmem:[#allocation4 + $0x130] sm:$0xff]
    %v2110 = vld [vmem:[#allocation4 + $0x138] sm:$0xff]
    %v2111 = vld [vmem:[#allocation4 + $0x140] sm:$0xff]
    %v2112 = vld [vmem:[#allocation4 + $0x148] sm:$0xff]
    %v2113 = vld [vmem:[#allocation4 + $0x150] sm:$0xff]
    %v2114 = vld [vmem:[#allocation4 + $0x158] sm:$0xff]
    %v2115 = vld [vmem:[#allocation4 + $0x160] sm:$0xff]
    %v2116 = vld [vmem:[#allocation4 + $0x168] sm:$0xff]
    %v2117 = vld [vmem:[#allocation4 + $0x170] sm:$0xff]
    %v2118 = vld [vmem:[#allocation4 + $0x178] sm:$0xff]
    %v2119 = vld [vmem:[#allocation4 + $0x180] sm:$0xff]
    %v2120 = vld [vmem:[#allocation4 + $0x188] sm:$0xff]
    %v2121 = vld [vmem:[#allocation4 + $0x190] sm:$0xff]
    %v2122 = vld [vmem:[#allocation4 + $0x198] sm:$0xff]
    %v2123 = vld [vmem:[#allocation4 + $0x1a0] sm:$0xff]
    %v2124 = vld [vmem:[#allocation4 + $0x1a8] sm:$0xff]
    %v2125 = vld [vmem:[#allocation4 + $0x1b0] sm:$0xff]
    %v2126 = vld [vmem:[#allocation4 + $0x1b8] sm:$0xff]
    %v2127 = vld [vmem:[#allocation4 + $0x1c0] sm:$0xff]
    %v2128 = vld [vmem:[#allocation4 + $0x1c8] sm:$0xff]
    %v2129 = vld [vmem:[#allocation4 + $0x1d0] sm:$0xff]
    %v2130 = vld [vmem:[#allocation4 + $0x1d8] sm:$0xff]
    %v2131 = vld [vmem:[#allocation4 + $0x1e0] sm:$0xff]
    %v2132 = vld [vmem:[#allocation4 + $0x1e8] sm:$0xff]
    %v2133 = vld [vmem:[#allocation4 + $0x1f0] sm:$0xff]
    %v2134 = vld [vmem:[#allocation4 + $0x1f8] sm:$0xff]
    %2135 = vmatprep.subr.mxu0 %v2072
    %2136 = vmatpush1.msra.mxu0 %v2071
    %2137 = vmatprep.subr.mxu0 %v2076
    %2138 = vmatpush1.msra.mxu0 %v2075
    %2139 = vmatprep.subr.mxu0 %v2080
    %2140 = vmatpush1.msra.mxu0 %v2079
    %2141 = vmatprep.subr.mxu0 %v2084
    %2142 = vmatpush1.msra.mxu0 %v2083
    %2143 = vmatprep.subr.mxu0 %v2088
    %2144 = vmatpush1.msra.mxu0 %v2087
    %2145 = vmatprep.subr.mxu0 %v2092
    %2146 = vmatpush1.msra.mxu0 %v2091
    %2147 = vmatprep.subr.mxu0 %v2096
    %2148 = vmatpush1.msra.mxu0 %v2095
    %2149 = vmatprep.subr.mxu0 %v2100
    %2150 = vmatpush1.msra.mxu0 %v2099
    %2151 = vmatprep.subr.mxu0 %v2104
    %2152 = vmatpush1.msra.mxu0 %v2103
    %2153 = vmatprep.subr.mxu0 %v2108
    %2154 = vmatpush1.msra.mxu0 %v2107
    %2155 = vmatprep.subr.mxu0 %v2112
    %2156 = vmatpush1.msra.mxu0 %v2111
    %2157 = vmatprep.subr.mxu0 %v2116
    %2158 = vmatpush1.msra.mxu0 %v2115
    %2159 = vmatprep.subr.mxu0 %v2120
    %2160 = vmatpush1.msra.mxu0 %v2119
    %2161 = vmatprep.subr.mxu0 %v2124
    %2162 = vmatpush1.msra.mxu0 %v2123
    %2163 = vmatprep.subr.mxu0 %v2128
    %2164 = vmatpush1.msra.mxu0 %v2127
    %2165 = vmatprep.subr.mxu0 %v2132
    %2166 = vmatpush1.msra.mxu0 %v2131
    %2167 = vmatprep.subr.mxu0 0.0
    %2168 = vmatpush1.msra.mxu0 0.0
    %2169 = vmatprep.subr.mxu0 0.0
    %2170 = vmatpush1.msra.mxu0 0.0
    %2171 = vmatprep.subr.mxu0 0.0
    %2172 = vmatpush1.msra.mxu0 0.0
    %2173 = vmatprep.subr.mxu0 0.0
    %2174 = vmatpush1.msra.mxu0 0.0
    %2175 = vmatprep.subr.mxu0 0.0
    %2176 = vmatpush1.msra.mxu0 0.0
    %2177 = vmatprep.subr.mxu0 0.0
    %2178 = vmatpush1.msra.mxu0 0.0
    %2179 = vmatprep.subr.mxu0 0.0
    %2180 = vmatpush1.msra.mxu0 0.0
    %2181 = vmatprep.subr.mxu0 0.0
    %2182 = vmatpush1.msra.mxu0 0.0
    %2183 = vmatprep.subr.mxu0 0.0
    %2184 = vmatpush1.msra.mxu0 0.0
    %2185 = vmatprep.subr.mxu0 0.0
    %2186 = vmatpush1.msra.mxu0 0.0
    %2187 = vmatprep.subr.mxu0 0.0
    %2188 = vmatpush1.msra.mxu0 0.0
    %2189 = vmatprep.subr.mxu0 0.0
    %2190 = vmatpush1.msra.mxu0 0.0
    %2191 = vmatprep.subr.mxu0 0.0
    %2192 = vmatpush1.msra.mxu0 0.0
    %2193 = vmatprep.subr.mxu0 0.0
    %2194 = vmatpush1.msra.mxu0 0.0
    %2195 = vmatprep.subr.mxu0 0.0
    %2196 = vmatpush1.msra.mxu0 0.0
    %2197 = vmatprep.subr.mxu0 0.0
    %2198 = vmatpush1.msra.mxu0 0.0
    %2199 = vmatprep.mubr.f32.mxu0 0.0
    %2200 = vmatmul.mubr.f32.gmra.mrb[0].mxu0 %v2065
    %v2201 = vpop.f32.mrb[0].mxu0
    %v2202 = vadd.f32 0.0, %v2201
    %v2203 = vpop.f32.mrb[0].mxu0
    %v2204 = vadd.f32 0.0, %v2203
    %2205 = vdwg.mxu0
    %2206 = vmatprep.subr.mxu0 %v2074
    %2207 = vmatpush1.msra.mxu0 %v2073
    %2208 = vmatprep.subr.mxu0 %v2078
    %2209 = vmatpush1.msra.mxu0 %v2077
    %2210 = vmatprep.subr.mxu0 %v2082
    %2211 = vmatpush1.msra.mxu0 %v2081
    %2212 = vmatprep.subr.mxu0 %v2086
    %2213 = vmatpush1.msra.mxu0 %v2085
    %2214 = vmatprep.subr.mxu0 %v2090
    %2215 = vmatpush1.msra.mxu0 %v2089
    %2216 = vmatprep.subr.mxu0 %v2094
    %2217 = vmatpush1.msra.mxu0 %v2093
    %2218 = vmatprep.subr.mxu0 %v2098
    %2219 = vmatpush1.msra.mxu0 %v2097
    %2220 = vmatprep.subr.mxu0 %v2102
    %2221 = vmatpush1.msra.mxu0 %v2101
    %2222 = vmatprep.subr.mxu0 %v2106
    %2223 = vmatpush1.msra.mxu0 %v2105
    %2224 = vmatprep.subr.mxu0 %v2110
    %2225 = vmatpush1.msra.mxu0 %v2109
    %2226 = vmatprep.subr.mxu0 %v2114
    %2227 = vmatpush1.msra.mxu0 %v2113
    %2228 = vmatprep.subr.mxu0 %v2118
    %2229 = vmatpush1.msra.mxu0 %v2117
    %2230 = vmatprep.subr.mxu0 %v2122
    %2231 = vmatpush1.msra.mxu0 %v2121
    %2232 = vmatprep.subr.mxu0 %v2126
    %2233 = vmatpush1.msra.mxu0 %v2125
    %2234 = vmatprep.subr.mxu0 %v2130
    %2235 = vmatpush1.msra.mxu0 %v2129
    %2236 = vmatprep.subr.mxu0 %v2134
    %2237 = vmatpush1.msra.mxu0 %v2133
    %2238 = vmatprep.subr.mxu0 0.0
    %2239 = vmatpush1.msra.mxu0 0.0
    %2240 = vmatprep.subr.mxu0 0.0
    %2241 = vmatpush1.msra.mxu0 0.0
    %2242 = vmatprep.subr.mxu0 0.0
    %2243 = vmatpush1.msra.mxu0 0.0
    %2244 = vmatprep.subr.mxu0 0.0
    %2245 = vmatpush1.msra.mxu0 0.0
    %2246 = vmatprep.subr.mxu0 0.0
    %2247 = vmatpush1.msra.mxu0 0.0
    %2248 = vmatprep.subr.mxu0 0.0
    %2249 = vmatpush1.msra.mxu0 0.0
    %2250 = vmatprep.subr.mxu0 0.0
    %2251 = vmatpush1.msra.mxu0 0.0
    %2252 = vmatprep.subr.mxu0 0.0
    %2253 = vmatpush1.msra.mxu0 0.0
    %2254 = vmatprep.subr.mxu0 0.0
    %2255 = vmatpush1.msra.mxu0 0.0
    %2256 = vmatprep.subr.mxu0 0.0
    %2257 = vmatpush1.msra.mxu0 0.0
    %2258 = vmatprep.subr.mxu0 0.0
    %2259 = vmatpush1.msra.mxu0 0.0
    %2260 = vmatprep.subr.mxu0 0.0
    %2261 = vmatpush1.msra.mxu0 0.0
    %2262 = vmatprep.subr.mxu0 0.0
    %2263 = vmatpush1.msra.mxu0 0.0
    %2264 = vmatprep.subr.mxu0 0.0
    %2265 = vmatpush1.msra.mxu0 0.0
    %2266 = vmatprep.subr.mxu0 0.0
    %2267 = vmatpush1.msra.mxu0 0.0
    %2268 = vmatprep.subr.mxu0 0.0
    %2269 = vmatpush1.msra.mxu0 0.0
    %2270 = vmatprep.mubr.f32.mxu0 0.0
    %2271 = vmatmul.mubr.f32.gmra.mrb[0].mxu0 %v2065
    %v2272 = vpop.f32.mrb[0].mxu0
    %v2273 = vadd.f32 0.0, %v2272
    %v2274 = vpop.f32.mrb[0].mxu0
    %v2275 = vadd.f32 0.0, %v2274
    %2276 = vdwg.mxu0
    %v2277 = vadd.f32 %v2067, %v2202
    %v2278 = vadd.f32 %v2068, %v2204
    %v2279 = vadd.f32 %v2069, %v2273
    %v2280 = vadd.f32 %v2070, %v2275
    %v2281 = vxor.u32 %v2277, 2147483648
    %v2282 = vmul.f32 %v2281, 1.442695
    %v2283 = vpow.pop %v2282
    %v2284 = vadd.f32 %v2283, 1.0
    %v2285 = vrcp.pop %v2284
    %v2286 = vmul.f32 1.0, %v2285
    %v2287 = vxor.u32 %v2278, 2147483648
    %v2288 = vmul.f32 %v2287, 1.442695
    %v2289 = vpow.pop %v2288
    %v2290 = vadd.f32 %v2289, 1.0
    %v2291 = vrcp.pop %v2290
    %v2292 = vmul.f32 1.0, %v2291
    %v2293 = vtanh.pop %v2279
    %v2294 = vxor.u32 %v2280, 2147483648
    %v2295 = vmul.f32 %v2294, 1.442695
    %v2296 = vpow.pop %v2295
    %v2297 = vadd.f32 %v2296, 1.0
    %v2298 = vrcp.pop %v2297
    %v2299 = vmul.f32 1.0, %v2298
    %v2300 = vmul.f32 %v2292, %v2063
    %v2301 = vmul.f32 %v2286, %v2293
    %v2302 = vadd.f32 %v2300, %v2301
    %v2303 = vtanh.pop %v2302
    %v2304 = vmul.f32 %v2299, %v2303
    %2305 = vst [vmem:[#allocation3 + $0x38] sm:$0xff] %v2304
    %v2306 = vld [vmem:[#allocation3] sm:$0xff]
    %v2307 = vld [vmem:[#allocation3 + $0x8] sm:$0xff]
    %v2308 = vld [vmem:[#allocation3 + $0x10] sm:$0xff]
    %v2309 = vld [vmem:[#allocation3 + $0x18] sm:$0xff]
    %v2310 = vld [vmem:[#allocation3 + $0x20] sm:$0xff]
    %v2311 = vld [vmem:[#allocation3 + $0x28] sm:$0xff]
    %v2312 = vld [vmem:[#allocation3 + $0x30] sm:$0xff]
    %v2313 = vld [vmem:[#allocation3 + $0x38] sm:$0xff]
    %v2314 = vld [vmem:[#allocation6] sm:$0xff]
    %v2315 = vld [vmem:[#allocation6 + $0x8] sm:$0xff]
    %v2316 = vld [vmem:[#allocation6 + $0x10] sm:$0xff]
    %v2317 = vld [vmem:[#allocation6 + $0x18] sm:$0xff]
    %v2318 = vld [vmem:[#allocation6 + $0x20] sm:$0xff]
    %v2319 = vld [vmem:[#allocation6 + $0x28] sm:$0xff]
    %v2320 = vld [vmem:[#allocation6 + $0x30] sm:$0xff]
    %v2321 = vld [vmem:[#allocation6 + $0x38] sm:$0xff]
    %v2322 = vld [vmem:[#allocation6 + $0x40] sm:$0xff]
    %v2323 = vld [vmem:[#allocation6 + $0x48] sm:$0xff]
    %v2324 = vld [vmem:[#allocation6 + $0x50] sm:$0xff]
    %v2325 = vld [vmem:[#allocation6 + $0x58] sm:$0xff]
    %v2326 = vld [vmem:[#allocation6 + $0x60] sm:$0xff]
    %v2327 = vld [vmem:[#allocation6 + $0x68] sm:$0xff]
    %v2328 = vld [vmem:[#allocation6 + $0x70] sm:$0xff]
    %v2329 = vld [vmem:[#allocation6 + $0x78] sm:$0xff]
    %v2330 = vld [vmem:[#allocation6 + $0x80] sm:$0xff]
    %v2331 = vld [vmem:[#allocation6 + $0x88] sm:$0xff]
    %v2332 = vld [vmem:[#allocation6 + $0x90] sm:$0xff]
    %v2333 = vld [vmem:[#allocation6 + $0x98] sm:$0xff]
    %v2334 = vld [vmem:[#allocation6 + $0xa0] sm:$0xff]
    %v2335 = vld [vmem:[#allocation6 + $0xa8] sm:$0xff]
    %v2336 = vld [vmem:[#allocation6 + $0xb0] sm:$0xff]
    %v2337 = vld [vmem:[#allocation6 + $0xb8] sm:$0xff]
    %v2338 = vld [vmem:[#allocation6 + $0xc0] sm:$0xff]
    %v2339 = vld [vmem:[#allocation6 + $0xc8] sm:$0xff]
    %v2340 = vld [vmem:[#allocation6 + $0xd0] sm:$0xff]
    %v2341 = vld [vmem:[#allocation6 + $0xd8] sm:$0xff]
    %v2342 = vld [vmem:[#allocation6 + $0xe0] sm:$0xff]
    %v2343 = vld [vmem:[#allocation6 + $0xe8] sm:$0xff]
    %v2344 = vld [vmem:[#allocation6 + $0xf0] sm:$0xff]
    %v2345 = vld [vmem:[#allocation6 + $0xf8] sm:$0xff]
    %v2346 = vld [vmem:[#allocation6 + $0x100] sm:$0xff]
    %v2347 = vld [vmem:[#allocation6 + $0x108] sm:$0xff]
    %v2348 = vld [vmem:[#allocation6 + $0x110] sm:$0xff]
    %v2349 = vld [vmem:[#allocation6 + $0x118] sm:$0xff]
    %v2350 = vld [vmem:[#allocation6 + $0x120] sm:$0xff]
    %v2351 = vld [vmem:[#allocation6 + $0x128] sm:$0xff]
    %v2352 = vld [vmem:[#allocation6 + $0x130] sm:$0xff]
    %v2353 = vld [vmem:[#allocation6 + $0x138] sm:$0xff]
    %v2354 = vld [vmem:[#allocation6 + $0x140] sm:$0xff]
    %v2355 = vld [vmem:[#allocation6 + $0x148] sm:$0xff]
    %v2356 = vld [vmem:[#allocation6 + $0x150] sm:$0xff]
    %v2357 = vld [vmem:[#allocation6 + $0x158] sm:$0xff]
    %v2358 = vld [vmem:[#allocation6 + $0x160] sm:$0xff]
    %v2359 = vld [vmem:[#allocation6 + $0x168] sm:$0xff]
    %v2360 = vld [vmem:[#allocation6 + $0x170] sm:$0xff]
    %v2361 = vld [vmem:[#allocation6 + $0x178] sm:$0xff]
    %v2362 = vld [vmem:[#allocation6 + $0x180] sm:$0xff]
    %v2363 = vld [vmem:[#allocation6 + $0x188] sm:$0xff]
    %v2364 = vld [vmem:[#allocation6 + $0x190] sm:$0xff]
    %v2365 = vld [vmem:[#allocation6 + $0x198] sm:$0xff]
    %v2366 = vld [vmem:[#allocation6 + $0x1a0] sm:$0xff]
    %v2367 = vld [vmem:[#allocation6 + $0x1a8] sm:$0xff]
    %v2368 = vld [vmem:[#allocation6 + $0x1b0] sm:$0xff]
    %v2369 = vld [vmem:[#allocation6 + $0x1b8] sm:$0xff]
    %v2370 = vld [vmem:[#allocation6 + $0x1c0] sm:$0xff]
    %v2371 = vld [vmem:[#allocation6 + $0x1c8] sm:$0xff]
    %v2372 = vld [vmem:[#allocation6 + $0x1d0] sm:$0xff]
    %v2373 = vld [vmem:[#allocation6 + $0x1d8] sm:$0xff]
    %v2374 = vld [vmem:[#allocation6 + $0x1e0] sm:$0xff]
    %v2375 = vld [vmem:[#allocation6 + $0x1e8] sm:$0xff]
    %v2376 = vld [vmem:[#allocation6 + $0x1f0] sm:$0xff]
    %v2377 = vld [vmem:[#allocation6 + $0x1f8] sm:$0xff]
    %v2378 = vld [vmem:[%s6] sm:$0xf]
    %v2380 = vlaneseq
    %v2381 = vshrl.u32 %v2380, 7
    %v2382 = vsub.s32 0, %v2381
    %v2383 = vrot.slane %v2378, %v2382
    %v2384 = vlaneseq
    %v2385 = vshrl.u32 %v2384, 7
    %v2386 = vsub.s32 1, %v2385
    %v2387 = vrot.slane %v2378, %v2386
    %v2388 = vlaneseq
    %v2389 = vshrl.u32 %v2388, 7
    %v2390 = vsub.s32 2, %v2389
    %v2391 = vrot.slane %v2378, %v2390
    %v2392 = vlaneseq
    %v2393 = vshrl.u32 %v2392, 7
    %v2394 = vsub.s32 3, %v2393
    %v2395 = vrot.slane %v2378, %v2394
    %2400 = vmatprep.subr.mxu0 %v2315
    %2401 = vmatpush1.msra.mxu0 %v2314
    %2402 = vmatprep.subr.mxu0 %v2319
    %2403 = vmatpush1.msra.mxu0 %v2318
    %2404 = vmatprep.subr.mxu0 %v2323
    %2405 = vmatpush1.msra.mxu0 %v2322
    %2406 = vmatprep.subr.mxu0 %v2327
    %2407 = vmatpush1.msra.mxu0 %v2326
    %2408 = vmatprep.subr.mxu0 %v2331
    %2409 = vmatpush1.msra.mxu0 %v2330
    %2410 = vmatprep.subr.mxu0 %v2335
    %2411 = vmatpush1.msra.mxu0 %v2334
    %2412 = vmatprep.subr.mxu0 %v2339
    %2413 = vmatpush1.msra.mxu0 %v2338
    %2414 = vmatprep.subr.mxu0 %v2343
    %2415 = vmatpush1.msra.mxu0 %v2342
    %2416 = vmatprep.subr.mxu0 %v2347
    %2417 = vmatpush1.msra.mxu0 %v2346
    %2418 = vmatprep.subr.mxu0 %v2351
    %2419 = vmatpush1.msra.mxu0 %v2350
    %2420 = vmatprep.subr.mxu0 %v2355
    %2421 = vmatpush1.msra.mxu0 %v2354
    %2422 = vmatprep.subr.mxu0 %v2359
    %2423 = vmatpush1.msra.mxu0 %v2358
    %2424 = vmatprep.subr.mxu0 %v2363
    %2425 = vmatpush1.msra.mxu0 %v2362
    %2426 = vmatprep.subr.mxu0 %v2367
    %2427 = vmatpush1.msra.mxu0 %v2366
    %2428 = vmatprep.subr.mxu0 %v2371
    %2429 = vmatpush1.msra.mxu0 %v2370
    %2430 = vmatprep.subr.mxu0 %v2375
    %2431 = vmatpush1.msra.mxu0 %v2374
    %2432 = vmatprep.subr.mxu0 0.0
    %2433 = vmatpush1.msra.mxu0 0.0
    %2434 = vmatprep.subr.mxu0 0.0
    %2435 = vmatpush1.msra.mxu0 0.0
    %2436 = vmatprep.subr.mxu0 0.0
    %2437 = vmatpush1.msra.mxu0 0.0
    %2438 = vmatprep.subr.mxu0 0.0
    %2439 = vmatpush1.msra.mxu0 0.0
    %2440 = vmatprep.subr.mxu0 0.0
    %2441 = vmatpush1.msra.mxu0 0.0
    %2442 = vmatprep.subr.mxu0 0.0
    %2443 = vmatpush1.msra.mxu0 0.0
    %2444 = vmatprep.subr.mxu0 0.0
    %2445 = vmatpush1.msra.mxu0 0.0
    %2446 = vmatprep.subr.mxu0 0.0
    %2447 = vmatpush1.msra.mxu0 0.0
    %2448 = vmatprep.subr.mxu0 0.0
    %2449 = vmatpush1.msra.mxu0 0.0
    %2450 = vmatprep.subr.mxu0 0.0
    %2451 = vmatpush1.msra.mxu0 0.0
    %2452 = vmatprep.subr.mxu0 0.0
    %2453 = vmatpush1.msra.mxu0 0.0
    %2454 = vmatprep.subr.mxu0 0.0
    %2455 = vmatpush1.msra.mxu0 0.0
    %2456 = vmatprep.subr.mxu0 0.0
    %2457 = vmatpush1.msra.mxu0 0.0
    %2458 = vmatprep.subr.mxu0 0.0
    %2459 = vmatpush1.msra.mxu0 0.0
    %2460 = vmatprep.subr.mxu0 0.0
    %2461 = vmatpush1.msra.mxu0 0.0
    %2462 = vmatprep.subr.mxu0 0.0
    %2463 = vmatpush1.msra.mxu0 0.0
    %2464 = vmatprep.mubr.f32.mxu0 0.0
    %2465 = vmatmul.mubr.f32.gmra.mrb[0].mxu0 %v2306
    %v2466 = vpop.f32.mrb[0].mxu0
    %v2467 = vadd.f32 %v2383, %v2466
    %v2468 = vpop.f32.mrb[0].mxu0
    %v2469 = vadd.f32 %v2387, %v2468
    %2470 = vmatprep.mubr.f32.mxu0 0.0
    %2471 = vmatmul.mubr.f32.gmra.mrb[0].mxu0 %v2307
    %v2472 = vpop.f32.mrb[0].mxu0
    %v2473 = vadd.f32 %v2383, %v2472
    %v2474 = vpop.f32.mrb[0].mxu0
    %v2475 = vadd.f32 %v2387, %v2474
    %2476 = vmatprep.mubr.f32.mxu0 0.0
    %2477 = vmatmul.mubr.f32.gmra.mrb[0].mxu0 %v2308
    %v2478 = vpop.f32.mrb[0].mxu0
    %v2479 = vadd.f32 %v2383, %v2478
    %v2480 = vpop.f32.mrb[0].mxu0
    %v2481 = vadd.f32 %v2387, %v2480
    %2482 = vmatprep.mubr.f32.mxu0 0.0
    %2483 = vmatmul.mubr.f32.gmra.mrb[0].mxu0 %v2309
    %v2484 = vpop.f32.mrb[0].mxu0
    %v2485 = vadd.f32 %v2383, %v2484
    %v2486 = vpop.f32.mrb[0].mxu0
    %v2487 = vadd.f32 %v2387, %v2486
    %2488 = vmatprep.mubr.f32.mxu0 0.0
    %2489 = vmatmul.mubr.f32.gmra.mrb[0].mxu0 %v2310
    %v2490 = vpop.f32.mrb[0].mxu0
    %v2491 = vadd.f32 %v2383, %v2490
    %v2492 = vpop.f32.mrb[0].mxu0
    %v2493 = vadd.f32 %v2387, %v2492
    %2494 = vmatprep.mubr.f32.mxu0 0.0
    %2495 = vmatmul.mubr.f32.gmra.mrb[0].mxu0 %v2311
    %v2496 = vpop.f32.mrb[0].mxu0
    %v2497 = vadd.f32 %v2383, %v2496
    %v2498 = vpop.f32.mrb[0].mxu0
    %v2499 = vadd.f32 %v2387, %v2498
    %2500 = vmatprep.mubr.f32.mxu0 0.0
    %2501 = vmatmul.mubr.f32.gmra.mrb[0].mxu0 %v2312
    %v2502 = vpop.f32.mrb[0].mxu0
    %v2503 = vadd.f32 %v2383, %v2502
    %v2504 = vpop.f32.mrb[0].mxu0
    %v2505 = vadd.f32 %v2387, %v2504
    %2506 = vmatprep.mubr.f32.mxu0 0.0
    %2507 = vmatmul.mubr.f32.gmra.mrb[0].mxu0 %v2313
    %v2508 = vpop.f32.mrb[0].mxu0
    %v2509 = vadd.f32 %v2383, %v2508
    %v2510 = vpop.f32.mrb[0].mxu0
    %v2511 = vadd.f32 %v2387, %v2510
    %2512 = vdwg.mxu0
    %2513 = vmatprep.subr.mxu0 %v2317
    %2514 = vmatpush1.msra.mxu0 %v2316
    %2515 = vmatprep.subr.mxu0 %v2321
    %2516 = vmatpush1.msra.mxu0 %v2320
    %2517 = vmatprep.subr.mxu0 %v2325
    %2518 = vmatpush1.msra.mxu0 %v2324
    %2519 = vmatprep.subr.mxu0 %v2329
    %2520 = vmatpush1.msra.mxu0 %v2328
    %2521 = vmatprep.subr.mxu0 %v2333
    %2522 = vmatpush1.msra.mxu0 %v2332
    %2523 = vmatprep.subr.mxu0 %v2337
    %2524 = vmatpush1.msra.mxu0 %v2336
    %2525 = vmatprep.subr.mxu0 %v2341
    %2526 = vmatpush1.msra.mxu0 %v2340
    %2527 = vmatprep.subr.mxu0 %v2345
    %2528 = vmatpush1.msra.mxu0 %v2344
    %2529 = vmatprep.subr.mxu0 %v2349
    %2530 = vmatpush1.msra.mxu0 %v2348
    %2531 = vmatprep.subr.mxu0 %v2353
    %2532 = vmatpush1.msra.mxu0 %v2352
    %2533 = vmatprep.subr.mxu0 %v2357
    %2534 = vmatpush1.msra.mxu0 %v2356
    %2535 = vmatprep.subr.mxu0 %v2361
    %2536 = vmatpush1.msra.mxu0 %v2360
    %2537 = vmatprep.subr.mxu0 %v2365
    %2538 = vmatpush1.msra.mxu0 %v2364
    %2539 = vmatprep.subr.mxu0 %v2369
    %2540 = vmatpush1.msra.mxu0 %v2368
    %2541 = vmatprep.subr.mxu0 %v2373
    %2542 = vmatpush1.msra.mxu0 %v2372
    %2543 = vmatprep.subr.mxu0 %v2377
    %2544 = vmatpush1.msra.mxu0 %v2376
    %2545 = vmatprep.subr.mxu0 0.0
    %2546 = vmatpush1.msra.mxu0 0.0
    %2547 = vmatprep.subr.mxu0 0.0
    %2548 = vmatpush1.msra.mxu0 0.0
    %2549 = vmatprep.subr.mxu0 0.0
    %2550 = vmatpush1.msra.mxu0 0.0
    %2551 = vmatprep.subr.mxu0 0.0
    %2552 = vmatpush1.msra.mxu0 0.0
    %2553 = vmatprep.subr.mxu0 0.0
    %2554 = vmatpush1.msra.mxu0 0.0
    %2555 = vmatprep.subr.mxu0 0.0
    %2556 = vmatpush1.msra.mxu0 0.0
    %2557 = vmatprep.subr.mxu0 0.0
    %2558 = vmatpush1.msra.mxu0 0.0
    %2559 = vmatprep.subr.mxu0 0.0
    %2560 = vmatpush1.msra.mxu0 0.0
    %2561 = vmatprep.subr.mxu0 0.0
    %2562 = vmatpush1.msra.mxu0 0.0
    %2563 = vmatprep.subr.mxu0 0.0
    %2564 = vmatpush1.msra.mxu0 0.0
    %2565 = vmatprep.subr.mxu0 0.0
    %2566 = vmatpush1.msra.mxu0 0.0
    %2567 = vmatprep.subr.mxu0 0.0
    %2568 = vmatpush1.msra.mxu0 0.0
    %2569 = vmatprep.subr.mxu0 0.0
    %2570 = vmatpush1.msra.mxu0 0.0
    %2571 = vmatprep.subr.mxu0 0.0
    %2572 = vmatpush1.msra.mxu0 0.0
    %2573 = vmatprep.subr.mxu0 0.0
    %2574 = vmatpush1.msra.mxu0 0.0
    %2575 = vmatprep.subr.mxu0 0.0
    %2576 = vmatpush1.msra.mxu0 0.0
    %2577 = vmatprep.mubr.f32.mxu0 0.0
    %2578 = vmatmul.mubr.f32.gmra.mrb[0].mxu0 %v2306
    %v2579 = vpop.f32.mrb[0].mxu0
    %v2580 = vadd.f32 %v2391, %v2579
    %v2581 = vpop.f32.mrb[0].mxu0
    %v2582 = vadd.f32 %v2395, %v2581
    %2583 = vmatprep.mubr.f32.mxu0 0.0
    %2584 = vmatmul.mubr.f32.gmra.mrb[0].mxu0 %v2307
    %v2585 = vpop.f32.mrb[0].mxu0
    %v2586 = vadd.f32 %v2391, %v2585
    %v2587 = vpop.f32.mrb[0].mxu0
    %v2588 = vadd.f32 %v2395, %v2587
    %2589 = vmatprep.mubr.f32.mxu0 0.0
    %2590 = vmatmul.mubr.f32.gmra.mrb[0].mxu0 %v2308
    %v2591 = vpop.f32.mrb[0].mxu0
    %v2592 = vadd.f32 %v2391, %v2591
    %v2593 = vpop.f32.mrb[0].mxu0
    %v2594 = vadd.f32 %v2395, %v2593
    %2595 = vmatprep.mubr.f32.mxu0 0.0
    %2596 = vmatmul.mubr.f32.gmra.mrb[0].mxu0 %v2309
    %v2597 = vpop.f32.mrb[0].mxu0
    %v2598 = vadd.f32 %v2391, %v2597
    %v2599 = vpop.f32.mrb[0].mxu0
    %v2600 = vadd.f32 %v2395, %v2599
    %2601 = vmatprep.mubr.f32.mxu0 0.0
    %2602 = vmatmul.mubr.f32.gmra.mrb[0].mxu0 %v2310
    %v2603 = vpop.f32.mrb[0].mxu0
    %v2604 = vadd.f32 %v2391, %v2603
    %v2605 = vpop.f32.mrb[0].mxu0
    %v2606 = vadd.f32 %v2395, %v2605
    %2607 = vmatprep.mubr.f32.mxu0 0.0
    %2608 = vmatmul.mubr.f32.gmra.mrb[0].mxu0 %v2311
    %v2609 = vpop.f32.mrb[0].mxu0
    %v2610 = vadd.f32 %v2391, %v2609
    %v2611 = vpop.f32.mrb[0].mxu0
    %v2612 = vadd.f32 %v2395, %v2611
    %2613 = vmatprep.mubr.f32.mxu0 0.0
    %2614 = vmatmul.mubr.f32.gmra.mrb[0].mxu0 %v2312
    %v2615 = vpop.f32.mrb[0].mxu0
    %v2616 = vadd.f32 %v2391, %v2615
    %v2617 = vpop.f32.mrb[0].mxu0
    %v2618 = vadd.f32 %v2395, %v2617
    %2619 = vmatprep.mubr.f32.mxu0 0.0
    %2620 = vmatmul.mubr.f32.gmra.mrb[0].mxu0 %v2313
    %v2621 = vpop.f32.mrb[0].mxu0
    %v2622 = vadd.f32 %v2391, %v2621
    %v2623 = vpop.f32.mrb[0].mxu0
    %v2624 = vadd.f32 %v2395, %v2623
    %2625 = vdwg.mxu0
    %2626 = vst [vmem:[#allocation2] sm:$0xff] %v2467
    %2627 = vst [vmem:[#allocation2 + $0x8] sm:$0xff] %v2469
    %2628 = vst [vmem:[#allocation2 + $0x10] sm:$0xff] %v2580
    %2629 = vst [vmem:[#allocation2 + $0x18] sm:$0xff] %v2582
    %2630 = vst [vmem:[#allocation2 + $0x20] sm:$0xff] %v2473
    %2631 = vst [vmem:[#allocation2 + $0x28] sm:$0xff] %v2475
    %2632 = vst [vmem:[#allocation2 + $0x30] sm:$0xff] %v2586
    %2633 = vst [vmem:[#allocation2 + $0x38] sm:$0xff] %v2588
    %2634 = vst [vmem:[#allocation2 + $0x40] sm:$0xff] %v2479
    %2635 = vst [vmem:[#allocation2 + $0x48] sm:$0xff] %v2481
    %2636 = vst [vmem:[#allocation2 + $0x50] sm:$0xff] %v2592
    %2637 = vst [vmem:[#allocation2 + $0x58] sm:$0xff] %v2594
    %2638 = vst [vmem:[#allocation2 + $0x60] sm:$0xff] %v2485
    %2639 = vst [vmem:[#allocation2 + $0x68] sm:$0xff] %v2487
    %2640 = vst [vmem:[#allocation2 + $0x70] sm:$0xff] %v2598
    %2641 = vst [vmem:[#allocation2 + $0x78] sm:$0xff] %v2600
    %2642 = vst [vmem:[#allocation2 + $0x80] sm:$0xff] %v2491
    %2643 = vst [vmem:[#allocation2 + $0x88] sm:$0xff] %v2493
    %2644 = vst [vmem:[#allocation2 + $0x90] sm:$0xff] %v2604
    %2645 = vst [vmem:[#allocation2 + $0x98] sm:$0xff] %v2606
    %2646 = vst [vmem:[#allocation2 + $0xa0] sm:$0xff] %v2497
    %2647 = vst [vmem:[#allocation2 + $0xa8] sm:$0xff] %v2499
    %2648 = vst [vmem:[#allocation2 + $0xb0] sm:$0xff] %v2610
    %2649 = vst [vmem:[#allocation2 + $0xb8] sm:$0xff] %v2612
    %2650 = vst [vmem:[#allocation2 + $0xc0] sm:$0xff] %v2503
    %2651 = vst [vmem:[#allocation2 + $0xc8] sm:$0xff] %v2505
    %2652 = vst [vmem:[#allocation2 + $0xd0] sm:$0xff] %v2616
    %2653 = vst [vmem:[#allocation2 + $0xd8] sm:$0xff] %v2618
    %2654 = vst [vmem:[#allocation2 + $0xe0] sm:$0xff] %v2509
    %2655 = vst [vmem:[#allocation2 + $0xe8] sm:$0xff] %v2511
    %2656 = vst [vmem:[#allocation2 + $0xf0] sm:$0xff] %v2622
    %2657 = vst [vmem:[#allocation2 + $0xf8] sm:$0xff] %v2624
    %v2658 = vld [vmem:[#allocation2] sm:$0xff]
    %v2659 = vld [vmem:[#allocation2 + $0x8] sm:$0xff]
    %v2660 = vld [vmem:[#allocation2 + $0x10] sm:$0xff]
    %v2661 = vld [vmem:[#allocation2 + $0x18] sm:$0xff]
    %v2662 = vld [vmem:[#allocation8] sm:$0xff]
    %v2663 = vld [vmem:[#allocation8 + $0x8] sm:$0xff]
    %v2664 = vld [vmem:[#allocation8 + $0x10] sm:$0xff]
    %v2665 = vld [vmem:[#allocation8 + $0x18] sm:$0xff]
    %v2666 = vld [vmem:[#allocation8 + $0x20] sm:$0xff]
    %v2667 = vld [vmem:[#allocation8 + $0x28] sm:$0xff]
    %v2668 = vld [vmem:[#allocation8 + $0x30] sm:$0xff]
    %v2669 = vld [vmem:[#allocation8 + $0x38] sm:$0xff]
    %v2670 = vld [vmem:[#allocation8 + $0x40] sm:$0xff]
    %v2671 = vld [vmem:[#allocation8 + $0x48] sm:$0xff]
    %v2672 = vld [vmem:[#allocation8 + $0x50] sm:$0xff]
    %v2673 = vld [vmem:[#allocation8 + $0x58] sm:$0xff]
    %v2674 = vld [vmem:[#allocation8 + $0x60] sm:$0xff]
    %v2675 = vld [vmem:[#allocation8 + $0x68] sm:$0xff]
    %v2676 = vld [vmem:[#allocation8 + $0x70] sm:$0xff]
    %v2677 = vld [vmem:[#allocation8 + $0x78] sm:$0xff]
    %v2678 = vld [vmem:[#allocation8 + $0x80] sm:$0xff]
    %v2679 = vld [vmem:[#allocation8 + $0x88] sm:$0xff]
    %v2680 = vld [vmem:[#allocation8 + $0x90] sm:$0xff]
    %v2681 = vld [vmem:[#allocation8 + $0x98] sm:$0xff]
    %v2682 = vld [vmem:[#allocation8 + $0xa0] sm:$0xff]
    %v2683 = vld [vmem:[#allocation8 + $0xa8] sm:$0xff]
    %v2684 = vld [vmem:[#allocation8 + $0xb0] sm:$0xff]
    %v2685 = vld [vmem:[#allocation8 + $0xb8] sm:$0xff]
    %v2686 = vld [vmem:[#allocation8 + $0xc0] sm:$0xff]
    %v2687 = vld [vmem:[#allocation8 + $0xc8] sm:$0xff]
    %v2688 = vld [vmem:[#allocation8 + $0xd0] sm:$0xff]
    %v2689 = vld [vmem:[#allocation8 + $0xd8] sm:$0xff]
    %v2690 = vld [vmem:[#allocation8 + $0xe0] sm:$0xff]
    %v2691 = vld [vmem:[#allocation8 + $0xe8] sm:$0xff]
    %v2692 = vld [vmem:[#allocation8 + $0xf0] sm:$0xff]
    %v2693 = vld [vmem:[#allocation8 + $0xf8] sm:$0xff]
    %v2694 = vld [vmem:[#allocation8 + $0x100] sm:$0xff]
    %v2695 = vld [vmem:[#allocation8 + $0x108] sm:$0xff]
    %v2696 = vld [vmem:[#allocation8 + $0x110] sm:$0xff]
    %v2697 = vld [vmem:[#allocation8 + $0x118] sm:$0xff]
    %v2698 = vld [vmem:[#allocation8 + $0x120] sm:$0xff]
    %v2699 = vld [vmem:[#allocation8 + $0x128] sm:$0xff]
    %v2700 = vld [vmem:[#allocation8 + $0x130] sm:$0xff]
    %v2701 = vld [vmem:[#allocation8 + $0x138] sm:$0xff]
    %v2702 = vld [vmem:[#allocation8 + $0x140] sm:$0xff]
    %v2703 = vld [vmem:[#allocation8 + $0x148] sm:$0xff]
    %v2704 = vld [vmem:[#allocation8 + $0x150] sm:$0xff]
    %v2705 = vld [vmem:[#allocation8 + $0x158] sm:$0xff]
    %v2706 = vld [vmem:[#allocation8 + $0x160] sm:$0xff]
    %v2707 = vld [vmem:[#allocation8 + $0x168] sm:$0xff]
    %v2708 = vld [vmem:[#allocation8 + $0x170] sm:$0xff]
    %v2709 = vld [vmem:[#allocation8 + $0x178] sm:$0xff]
    %v2710 = vld [vmem:[#allocation8 + $0x180] sm:$0xff]
    %v2711 = vld [vmem:[#allocation8 + $0x188] sm:$0xff]
    %v2712 = vld [vmem:[#allocation8 + $0x190] sm:$0xff]
    %v2713 = vld [vmem:[#allocation8 + $0x198] sm:$0xff]
    %v2714 = vld [vmem:[#allocation8 + $0x1a0] sm:$0xff]
    %v2715 = vld [vmem:[#allocation8 + $0x1a8] sm:$0xff]
    %v2716 = vld [vmem:[#allocation8 + $0x1b0] sm:$0xff]
    %v2717 = vld [vmem:[#allocation8 + $0x1b8] sm:$0xff]
    %v2718 = vld [vmem:[#allocation8 + $0x1c0] sm:$0xff]
    %v2719 = vld [vmem:[#allocation8 + $0x1c8] sm:$0xff]
    %v2720 = vld [vmem:[#allocation8 + $0x1d0] sm:$0xff]
    %v2721 = vld [vmem:[#allocation8 + $0x1d8] sm:$0xff]
    %v2722 = vld [vmem:[#allocation8 + $0x1e0] sm:$0xff]
    %v2723 = vld [vmem:[#allocation8 + $0x1e8] sm:$0xff]
    %v2724 = vld [vmem:[#allocation8 + $0x1f0] sm:$0xff]
    %v2725 = vld [vmem:[#allocation8 + $0x1f8] sm:$0xff]
    %2726 = vmatprep.subr.mxu0 %v2663
    %2727 = vmatpush1.msra.mxu0 %v2662
    %2728 = vmatprep.subr.mxu0 %v2667
    %2729 = vmatpush1.msra.mxu0 %v2666
    %2730 = vmatprep.subr.mxu0 %v2671
    %2731 = vmatpush1.msra.mxu0 %v2670
    %2732 = vmatprep.subr.mxu0 %v2675
    %2733 = vmatpush1.msra.mxu0 %v2674
    %2734 = vmatprep.subr.mxu0 %v2679
    %2735 = vmatpush1.msra.mxu0 %v2678
    %2736 = vmatprep.subr.mxu0 %v2683
    %2737 = vmatpush1.msra.mxu0 %v2682
    %2738 = vmatprep.subr.mxu0 %v2687
    %2739 = vmatpush1.msra.mxu0 %v2686
    %2740 = vmatprep.subr.mxu0 %v2691
    %2741 = vmatpush1.msra.mxu0 %v2690
    %2742 = vmatprep.subr.mxu0 %v2695
    %2743 = vmatpush1.msra.mxu0 %v2694
    %2744 = vmatprep.subr.mxu0 %v2699
    %2745 = vmatpush1.msra.mxu0 %v2698
    %2746 = vmatprep.subr.mxu0 %v2703
    %2747 = vmatpush1.msra.mxu0 %v2702
    %2748 = vmatprep.subr.mxu0 %v2707
    %2749 = vmatpush1.msra.mxu0 %v2706
    %2750 = vmatprep.subr.mxu0 %v2711
    %2751 = vmatpush1.msra.mxu0 %v2710
    %2752 = vmatprep.subr.mxu0 %v2715
    %2753 = vmatpush1.msra.mxu0 %v2714
    %2754 = vmatprep.subr.mxu0 %v2719
    %2755 = vmatpush1.msra.mxu0 %v2718
    %2756 = vmatprep.subr.mxu0 %v2723
    %2757 = vmatpush1.msra.mxu0 %v2722
    %2758 = vmatprep.subr.mxu0 0.0
    %2759 = vmatpush1.msra.mxu0 0.0
    %2760 = vmatprep.subr.mxu0 0.0
    %2761 = vmatpush1.msra.mxu0 0.0
    %2762 = vmatprep.subr.mxu0 0.0
    %2763 = vmatpush1.msra.mxu0 0.0
    %2764 = vmatprep.subr.mxu0 0.0
    %2765 = vmatpush1.msra.mxu0 0.0
    %2766 = vmatprep.subr.mxu0 0.0
    %2767 = vmatpush1.msra.mxu0 0.0
    %2768 = vmatprep.subr.mxu0 0.0
    %2769 = vmatpush1.msra.mxu0 0.0
    %2770 = vmatprep.subr.mxu0 0.0
    %2771 = vmatpush1.msra.mxu0 0.0
    %2772 = vmatprep.subr.mxu0 0.0
    %2773 = vmatpush1.msra.mxu0 0.0
    %2774 = vmatprep.subr.mxu0 0.0
    %2775 = vmatpush1.msra.mxu0 0.0
    %2776 = vmatprep.subr.mxu0 0.0
    %2777 = vmatpush1.msra.mxu0 0.0
    %2778 = vmatprep.subr.mxu0 0.0
    %2779 = vmatpush1.msra.mxu0 0.0
    %2780 = vmatprep.subr.mxu0 0.0
    %2781 = vmatpush1.msra.mxu0 0.0
    %2782 = vmatprep.subr.mxu0 0.0
    %2783 = vmatpush1.msra.mxu0 0.0
    %2784 = vmatprep.subr.mxu0 0.0
    %2785 = vmatpush1.msra.mxu0 0.0
    %2786 = vmatprep.subr.mxu0 0.0
    %2787 = vmatpush1.msra.mxu0 0.0
    %2788 = vmatprep.subr.mxu0 0.0
    %2789 = vmatpush1.msra.mxu0 0.0
    %2790 = vmatprep.mubr.f32.mxu0 0.0
    %2791 = vmatmul.mubr.f32.gmra.mrb[0].mxu0 0.0
    %v2792 = vpop.f32.mrb[0].mxu0
    %v2793 = vadd.f32 0.0, %v2792
    %v2794 = vpop.f32.mrb[0].mxu0
    %v2795 = vadd.f32 0.0, %v2794
    %2796 = vdwg.mxu0
    %2797 = vmatprep.subr.mxu0 %v2665
    %2798 = vmatpush1.msra.mxu0 %v2664
    %2799 = vmatprep.subr.mxu0 %v2669
    %2800 = vmatpush1.msra.mxu0 %v2668
    %2801 = vmatprep.subr.mxu0 %v2673
    %2802 = vmatpush1.msra.mxu0 %v2672
    %2803 = vmatprep.subr.mxu0 %v2677
    %2804 = vmatpush1.msra.mxu0 %v2676
    %2805 = vmatprep.subr.mxu0 %v2681
    %2806 = vmatpush1.msra.mxu0 %v2680
    %2807 = vmatprep.subr.mxu0 %v2685
    %2808 = vmatpush1.msra.mxu0 %v2684
    %2809 = vmatprep.subr.mxu0 %v2689
    %2810 = vmatpush1.msra.mxu0 %v2688
    %2811 = vmatprep.subr.mxu0 %v2693
    %2812 = vmatpush1.msra.mxu0 %v2692
    %2813 = vmatprep.subr.mxu0 %v2697
    %2814 = vmatpush1.msra.mxu0 %v2696
    %2815 = vmatprep.subr.mxu0 %v2701
    %2816 = vmatpush1.msra.mxu0 %v2700
    %2817 = vmatprep.subr.mxu0 %v2705
    %2818 = vmatpush1.msra.mxu0 %v2704
    %2819 = vmatprep.subr.mxu0 %v2709
    %2820 = vmatpush1.msra.mxu0 %v2708
    %2821 = vmatprep.subr.mxu0 %v2713
    %2822 = vmatpush1.msra.mxu0 %v2712
    %2823 = vmatprep.subr.mxu0 %v2717
    %2824 = vmatpush1.msra.mxu0 %v2716
    %2825 = vmatprep.subr.mxu0 %v2721
    %2826 = vmatpush1.msra.mxu0 %v2720
    %2827 = vmatprep.subr.mxu0 %v2725
    %2828 = vmatpush1.msra.mxu0 %v2724
    %2829 = vmatprep.subr.mxu0 0.0
    %2830 = vmatpush1.msra.mxu0 0.0
    %2831 = vmatprep.subr.mxu0 0.0
    %2832 = vmatpush1.msra.mxu0 0.0
    %2833 = vmatprep.subr.mxu0 0.0
    %2834 = vmatpush1.msra.mxu0 0.0
    %2835 = vmatprep.subr.mxu0 0.0
    %2836 = vmatpush1.msra.mxu0 0.0
    %2837 = vmatprep.subr.mxu0 0.0
    %2838 = vmatpush1.msra.mxu0 0.0
    %2839 = vmatprep.subr.mxu0 0.0
    %2840 = vmatpush1.msra.mxu0 0.0
    %2841 = vmatprep.subr.mxu0 0.0
    %2842 = vmatpush1.msra.mxu0 0.0
    %2843 = vmatprep.subr.mxu0 0.0
    %2844 = vmatpush1.msra.mxu0 0.0
    %2845 = vmatprep.subr.mxu0 0.0
    %2846 = vmatpush1.msra.mxu0 0.0
    %2847 = vmatprep.subr.mxu0 0.0
    %2848 = vmatpush1.msra.mxu0 0.0
    %2849 = vmatprep.subr.mxu0 0.0
    %2850 = vmatpush1.msra.mxu0 0.0
    %2851 = vmatprep.subr.mxu0 0.0
    %2852 = vmatpush1.msra.mxu0 0.0
    %2853 = vmatprep.subr.mxu0 0.0
    %2854 = vmatpush1.msra.mxu0 0.0
    %2855 = vmatprep.subr.mxu0 0.0
    %2856 = vmatpush1.msra.mxu0 0.0
    %2857 = vmatprep.subr.mxu0 0.0
    %2858 = vmatpush1.msra.mxu0 0.0
    %2859 = vmatprep.subr.mxu0 0.0
    %2860 = vmatpush1.msra.mxu0 0.0
    %2861 = vmatprep.mubr.f32.mxu0 0.0
    %2862 = vmatmul.mubr.f32.gmra.mrb[0].mxu0 0.0
    %v2863 = vpop.f32.mrb[0].mxu0
    %v2864 = vadd.f32 0.0, %v2863
    %v2865 = vpop.f32.mrb[0].mxu0
    %v2866 = vadd.f32 0.0, %v2865
    %2867 = vdwg.mxu0
    %v2868 = vadd.f32 %v2658, %v2793
    %v2869 = vadd.f32 %v2659, %v2795
    %v2870 = vadd.f32 %v2660, %v2864
    %v2871 = vadd.f32 %v2661, %v2866
    %v2872 = vxor.u32 %v2868, 2147483648
    %v2873 = vmul.f32 %v2872, 1.442695
    %v2874 = vpow.pop %v2873
    %v2875 = vadd.f32 %v2874, 1.0
    %v2876 = vrcp.pop %v2875
    %v2877 = vmul.f32 1.0, %v2876
    %v2878 = vxor.u32 %v2869, 2147483648
    %v2879 = vmul.f32 %v2878, 1.442695
    %v2880 = vpow.pop %v2879
    %v2881 = vadd.f32 %v2880, 1.0
    %v2882 = vrcp.pop %v2881
    %v2883 = vmul.f32 1.0, %v2882
    %v2884 = vtanh.pop %v2870
    %v2885 = vxor.u32 %v2871, 2147483648
    %v2886 = vmul.f32 %v2885, 1.442695
    %v2887 = vpow.pop %v2886
    %v2888 = vadd.f32 %v2887, 1.0
    %v2889 = vrcp.pop %v2888
    %v2890 = vmul.f32 1.0, %v2889
    %v2891 = vmul.f32 %v2883, 0.0
    %v2892 = vmul.f32 %v2877, %v2884
    %v2893 = vadd.f32 %v2891, %v2892
    %v2894 = vtanh.pop %v2893
    %v2895 = vmul.f32 %v2890, %v2894
    %v2896 = vld [vmem:[#allocation2 + $0x20] sm:$0xff]
    %v2897 = vld [vmem:[#allocation2 + $0x28] sm:$0xff]
    %v2898 = vld [vmem:[#allocation2 + $0x30] sm:$0xff]
    %v2899 = vld [vmem:[#allocation2 + $0x38] sm:$0xff]
    %2900 = vmatprep.subr.mxu0 %v2663
    %2901 = vmatpush1.msra.mxu0 %v2662
    %2902 = vmatprep.subr.mxu0 %v2667
    %2903 = vmatpush1.msra.mxu0 %v2666
    %2904 = vmatprep.subr.mxu0 %v2671
    %2905 = vmatpush1.msra.mxu0 %v2670
    %2906 = vmatprep.subr.mxu0 %v2675
    %2907 = vmatpush1.msra.mxu0 %v2674
    %2908 = vmatprep.subr.mxu0 %v2679
    %2909 = vmatpush1.msra.mxu0 %v2678
    %2910 = vmatprep.subr.mxu0 %v2683
    %2911 = vmatpush1.msra.mxu0 %v2682
    %2912 = vmatprep.subr.mxu0 %v2687
    %2913 = vmatpush1.msra.mxu0 %v2686
    %2914 = vmatprep.subr.mxu0 %v2691
    %2915 = vmatpush1.msra.mxu0 %v2690
    %2916 = vmatprep.subr.mxu0 %v2695
    %2917 = vmatpush1.msra.mxu0 %v2694
    %2918 = vmatprep.subr.mxu0 %v2699
    %2919 = vmatpush1.msra.mxu0 %v2698
    %2920 = vmatprep.subr.mxu0 %v2703
    %2921 = vmatpush1.msra.mxu0 %v2702
    %2922 = vmatprep.subr.mxu0 %v2707
    %2923 = vmatpush1.msra.mxu0 %v2706
    %2924 = vmatprep.subr.mxu0 %v2711
    %2925 = vmatpush1.msra.mxu0 %v2710
    %2926 = vmatprep.subr.mxu0 %v2715
    %2927 = vmatpush1.msra.mxu0 %v2714
    %2928 = vmatprep.subr.mxu0 %v2719
    %2929 = vmatpush1.msra.mxu0 %v2718
    %2930 = vmatprep.subr.mxu0 %v2723
    %2931 = vmatpush1.msra.mxu0 %v2722
    %2932 = vmatprep.subr.mxu0 0.0
    %2933 = vmatpush1.msra.mxu0 0.0
    %2934 = vmatprep.subr.mxu0 0.0
    %2935 = vmatpush1.msra.mxu0 0.0
    %2936 = vmatprep.subr.mxu0 0.0
    %2937 = vmatpush1.msra.mxu0 0.0
    %2938 = vmatprep.subr.mxu0 0.0
    %2939 = vmatpush1.msra.mxu0 0.0
    %2940 = vmatprep.subr.mxu0 0.0
    %2941 = vmatpush1.msra.mxu0 0.0
    %2942 = vmatprep.subr.mxu0 0.0
    %2943 = vmatpush1.msra.mxu0 0.0
    %2944 = vmatprep.subr.mxu0 0.0
    %2945 = vmatpush1.msra.mxu0 0.0
    %2946 = vmatprep.subr.mxu0 0.0
    %2947 = vmatpush1.msra.mxu0 0.0
    %2948 = vmatprep.subr.mxu0 0.0
    %2949 = vmatpush1.msra.mxu0 0.0
    %2950 = vmatprep.subr.mxu0 0.0
    %2951 = vmatpush1.msra.mxu0 0.0
    %2952 = vmatprep.subr.mxu0 0.0
    %2953 = vmatpush1.msra.mxu0 0.0
    %2954 = vmatprep.subr.mxu0 0.0
    %2955 = vmatpush1.msra.mxu0 0.0
    %2956 = vmatprep.subr.mxu0 0.0
    %2957 = vmatpush1.msra.mxu0 0.0
    %2958 = vmatprep.subr.mxu0 0.0
    %2959 = vmatpush1.msra.mxu0 0.0
    %2960 = vmatprep.subr.mxu0 0.0
    %2961 = vmatpush1.msra.mxu0 0.0
    %2962 = vmatprep.subr.mxu0 0.0
    %2963 = vmatpush1.msra.mxu0 0.0
    %2964 = vmatprep.mubr.f32.mxu0 0.0
    %2965 = vmatmul.mubr.f32.gmra.mrb[0].mxu0 %v2895
    %v2966 = vpop.f32.mrb[0].mxu0
    %v2967 = vadd.f32 0.0, %v2966
    %v2968 = vpop.f32.mrb[0].mxu0
    %v2969 = vadd.f32 0.0, %v2968
    %2970 = vdwg.mxu0
    %2971 = vmatprep.subr.mxu0 %v2665
    %2972 = vmatpush1.msra.mxu0 %v2664
    %2973 = vmatprep.subr.mxu0 %v2669
    %2974 = vmatpush1.msra.mxu0 %v2668
    %2975 = vmatprep.subr.mxu0 %v2673
    %2976 = vmatpush1.msra.mxu0 %v2672
    %2977 = vmatprep.subr.mxu0 %v2677
    %2978 = vmatpush1.msra.mxu0 %v2676
    %2979 = vmatprep.subr.mxu0 %v2681
    %2980 = vmatpush1.msra.mxu0 %v2680
    %2981 = vmatprep.subr.mxu0 %v2685
    %2982 = vmatpush1.msra.mxu0 %v2684
    %2983 = vmatprep.subr.mxu0 %v2689
    %2984 = vmatpush1.msra.mxu0 %v2688
    %2985 = vmatprep.subr.mxu0 %v2693
    %2986 = vmatpush1.msra.mxu0 %v2692
    %2987 = vmatprep.subr.mxu0 %v2697
    %2988 = vmatpush1.msra.mxu0 %v2696
    %2989 = vmatprep.subr.mxu0 %v2701
    %2990 = vmatpush1.msra.mxu0 %v2700
    %2991 = vmatprep.subr.mxu0 %v2705
    %2992 = vmatpush1.msra.mxu0 %v2704
    %2993 = vmatprep.subr.mxu0 %v2709
    %2994 = vmatpush1.msra.mxu0 %v2708
    %2995 = vmatprep.subr.mxu0 %v2713
    %2996 = vmatpush1.msra.mxu0 %v2712
    %2997 = vmatprep.subr.mxu0 %v2717
    %2998 = vmatpush1.msra.mxu0 %v2716
    %2999 = vmatprep.subr.mxu0 %v2721
    %3000 = vmatpush1.msra.mxu0 %v2720
    %3001 = vmatprep.subr.mxu0 %v2725
    %3002 = vmatpush1.msra.mxu0 %v2724
    %3003 = vmatprep.subr.mxu0 0.0
    %3004 = vmatpush1.msra.mxu0 0.0
    %3005 = vmatprep.subr.mxu0 0.0
    %3006 = vmatpush1.msra.mxu0 0.0
    %3007 = vmatprep.subr.mxu0 0.0
    %3008 = vmatpush1.msra.mxu0 0.0
    %3009 = vmatprep.subr.mxu0 0.0
    %3010 = vmatpush1.msra.mxu0 0.0
    %3011 = vmatprep.subr.mxu0 0.0
    %3012 = vmatpush1.msra.mxu0 0.0
    %3013 = vmatprep.subr.mxu0 0.0
    %3014 = vmatpush1.msra.mxu0 0.0
    %3015 = vmatprep.subr.mxu0 0.0
    %3016 = vmatpush1.msra.mxu0 0.0
    %3017 = vmatprep.subr.mxu0 0.0
    %3018 = vmatpush1.msra.mxu0 0.0
    %3019 = vmatprep.subr.mxu0 0.0
    %3020 = vmatpush1.msra.mxu0 0.0
    %3021 = vmatprep.subr.mxu0 0.0
    %3022 = vmatpush1.msra.mxu0 0.0
    %3023 = vmatprep.subr.mxu0 0.0
    %3024 = vmatpush1.msra.mxu0 0.0
    %3025 = vmatprep.subr.mxu0 0.0
    %3026 = vmatpush1.msra.mxu0 0.0
    %3027 = vmatprep.subr.mxu0 0.0
    %3028 = vmatpush1.msra.mxu0 0.0
    %3029 = vmatprep.subr.mxu0 0.0
    %3030 = vmatpush1.msra.mxu0 0.0
    %3031 = vmatprep.subr.mxu0 0.0
    %3032 = vmatpush1.msra.mxu0 0.0
    %3033 = vmatprep.subr.mxu0 0.0
    %3034 = vmatpush1.msra.mxu0 0.0
    %3035 = vmatprep.mubr.f32.mxu0 0.0
    %3036 = vmatmul.mubr.f32.gmra.mrb[0].mxu0 %v2895
    %v3037 = vpop.f32.mrb[0].mxu0
    %v3038 = vadd.f32 0.0, %v3037
    %v3039 = vpop.f32.mrb[0].mxu0
    %v3040 = vadd.f32 0.0, %v3039
    %3041 = vdwg.mxu0
    %v3042 = vadd.f32 %v2896, %v2967
    %v3043 = vadd.f32 %v2897, %v2969
    %v3044 = vadd.f32 %v2898, %v3038
    %v3045 = vadd.f32 %v2899, %v3040
    %v3046 = vxor.u32 %v3042, 2147483648
    %v3047 = vmul.f32 %v3046, 1.442695
    %v3048 = vpow.pop %v3047
    %v3049 = vadd.f32 %v3048, 1.0
    %v3050 = vrcp.pop %v3049
    %v3051 = vmul.f32 1.0, %v3050
    %v3052 = vxor.u32 %v3043, 2147483648
    %v3053 = vmul.f32 %v3052, 1.442695
    %v3054 = vpow.pop %v3053
    %v3055 = vadd.f32 %v3054, 1.0
    %v3056 = vrcp.pop %v3055
    %v3057 = vmul.f32 1.0, %v3056
    %v3058 = vtanh.pop %v3044
    %v3059 = vxor.u32 %v3045, 2147483648
    %v3060 = vmul.f32 %v3059, 1.442695
    %v3061 = vpow.pop %v3060
    %v3062 = vadd.f32 %v3061, 1.0
    %v3063 = vrcp.pop %v3062
    %v3064 = vmul.f32 1.0, %v3063
    %v3065 = vmul.f32 %v3057, %v2893
    %v3066 = vmul.f32 %v3051, %v3058
    %v3067 = vadd.f32 %v3065, %v3066
    %v3068 = vtanh.pop %v3067
    %v3069 = vmul.f32 %v3064, %v3068
    %v3070 = vld [vmem:[#allocation2 + $0x40] sm:$0xff]
    %v3071 = vld [vmem:[#allocation2 + $0x48] sm:$0xff]
    %v3072 = vld [vmem:[#allocation2 + $0x50] sm:$0xff]
    %v3073 = vld [vmem:[#allocation2 + $0x58] sm:$0xff]
    %3074 = vmatprep.subr.mxu0 %v2663
    %3075 = vmatpush1.msra.mxu0 %v2662
    %3076 = vmatprep.subr.mxu0 %v2667
    %3077 = vmatpush1.msra.mxu0 %v2666
    %3078 = vmatprep.subr.mxu0 %v2671
    %3079 = vmatpush1.msra.mxu0 %v2670
    %3080 = vmatprep.subr.mxu0 %v2675
    %3081 = vmatpush1.msra.mxu0 %v2674
    %3082 = vmatprep.subr.mxu0 %v2679
    %3083 = vmatpush1.msra.mxu0 %v2678
    %3084 = vmatprep.subr.mxu0 %v2683
    %3085 = vmatpush1.msra.mxu0 %v2682
    %3086 = vmatprep.subr.mxu0 %v2687
    %3087 = vmatpush1.msra.mxu0 %v2686
    %3088 = vmatprep.subr.mxu0 %v2691
    %3089 = vmatpush1.msra.mxu0 %v2690
    %3090 = vmatprep.subr.mxu0 %v2695
    %3091 = vmatpush1.msra.mxu0 %v2694
    %3092 = vmatprep.subr.mxu0 %v2699
    %3093 = vmatpush1.msra.mxu0 %v2698
    %3094 = vmatprep.subr.mxu0 %v2703
    %3095 = vmatpush1.msra.mxu0 %v2702
    %3096 = vmatprep.subr.mxu0 %v2707
    %3097 = vmatpush1.msra.mxu0 %v2706
    %3098 = vmatprep.subr.mxu0 %v2711
    %3099 = vmatpush1.msra.mxu0 %v2710
    %3100 = vmatprep.subr.mxu0 %v2715
    %3101 = vmatpush1.msra.mxu0 %v2714
    %3102 = vmatprep.subr.mxu0 %v2719
    %3103 = vmatpush1.msra.mxu0 %v2718
    %3104 = vmatprep.subr.mxu0 %v2723
    %3105 = vmatpush1.msra.mxu0 %v2722
    %3106 = vmatprep.subr.mxu0 0.0
    %3107 = vmatpush1.msra.mxu0 0.0
    %3108 = vmatprep.subr.mxu0 0.0
    %3109 = vmatpush1.msra.mxu0 0.0
    %3110 = vmatprep.subr.mxu0 0.0
    %3111 = vmatpush1.msra.mxu0 0.0
    %3112 = vmatprep.subr.mxu0 0.0
    %3113 = vmatpush1.msra.mxu0 0.0
    %3114 = vmatprep.subr.mxu0 0.0
    %3115 = vmatpush1.msra.mxu0 0.0
    %3116 = vmatprep.subr.mxu0 0.0
    %3117 = vmatpush1.msra.mxu0 0.0
    %3118 = vmatprep.subr.mxu0 0.0
    %3119 = vmatpush1.msra.mxu0 0.0
    %3120 = vmatprep.subr.mxu0 0.0
    %3121 = vmatpush1.msra.mxu0 0.0
    %3122 = vmatprep.subr.mxu0 0.0
    %3123 = vmatpush1.msra.mxu0 0.0
    %3124 = vmatprep.subr.mxu0 0.0
    %3125 = vmatpush1.msra.mxu0 0.0
    %3126 = vmatprep.subr.mxu0 0.0
    %3127 = vmatpush1.msra.mxu0 0.0
    %3128 = vmatprep.subr.mxu0 0.0
    %3129 = vmatpush1.msra.mxu0 0.0
    %3130 = vmatprep.subr.mxu0 0.0
    %3131 = vmatpush1.msra.mxu0 0.0
    %3132 = vmatprep.subr.mxu0 0.0
    %3133 = vmatpush1.msra.mxu0 0.0
    %3134 = vmatprep.subr.mxu0 0.0
    %3135 = vmatpush1.msra.mxu0 0.0
    %3136 = vmatprep.subr.mxu0 0.0
    %3137 = vmatpush1.msra.mxu0 0.0
    %3138 = vmatprep.mubr.f32.mxu0 0.0
    %3139 = vmatmul.mubr.f32.gmra.mrb[0].mxu0 %v3069
    %v3140 = vpop.f32.mrb[0].mxu0
    %v3141 = vadd.f32 0.0, %v3140
    %v3142 = vpop.f32.mrb[0].mxu0
    %v3143 = vadd.f32 0.0, %v3142
    %3144 = vdwg.mxu0
    %3145 = vmatprep.subr.mxu0 %v2665
    %3146 = vmatpush1.msra.mxu0 %v2664
    %3147 = vmatprep.subr.mxu0 %v2669
    %3148 = vmatpush1.msra.mxu0 %v2668
    %3149 = vmatprep.subr.mxu0 %v2673
    %3150 = vmatpush1.msra.mxu0 %v2672
    %3151 = vmatprep.subr.mxu0 %v2677
    %3152 = vmatpush1.msra.mxu0 %v2676
    %3153 = vmatprep.subr.mxu0 %v2681
    %3154 = vmatpush1.msra.mxu0 %v2680
    %3155 = vmatprep.subr.mxu0 %v2685
    %3156 = vmatpush1.msra.mxu0 %v2684
    %3157 = vmatprep.subr.mxu0 %v2689
    %3158 = vmatpush1.msra.mxu0 %v2688
    %3159 = vmatprep.subr.mxu0 %v2693
    %3160 = vmatpush1.msra.mxu0 %v2692
    %3161 = vmatprep.subr.mxu0 %v2697
    %3162 = vmatpush1.msra.mxu0 %v2696
    %3163 = vmatprep.subr.mxu0 %v2701
    %3164 = vmatpush1.msra.mxu0 %v2700
    %3165 = vmatprep.subr.mxu0 %v2705
    %3166 = vmatpush1.msra.mxu0 %v2704
    %3167 = vmatprep.subr.mxu0 %v2709
    %3168 = vmatpush1.msra.mxu0 %v2708
    %3169 = vmatprep.subr.mxu0 %v2713
    %3170 = vmatpush1.msra.mxu0 %v2712
    %3171 = vmatprep.subr.mxu0 %v2717
    %3172 = vmatpush1.msra.mxu0 %v2716
    %3173 = vmatprep.subr.mxu0 %v2721
    %3174 = vmatpush1.msra.mxu0 %v2720
    %3175 = vmatprep.subr.mxu0 %v2725
    %3176 = vmatpush1.msra.mxu0 %v2724
    %3177 = vmatprep.subr.mxu0 0.0
    %3178 = vmatpush1.msra.mxu0 0.0
    %3179 = vmatprep.subr.mxu0 0.0
    %3180 = vmatpush1.msra.mxu0 0.0
    %3181 = vmatprep.subr.mxu0 0.0
    %3182 = vmatpush1.msra.mxu0 0.0
    %3183 = vmatprep.subr.mxu0 0.0
    %3184 = vmatpush1.msra.mxu0 0.0
    %3185 = vmatprep.subr.mxu0 0.0
    %3186 = vmatpush1.msra.mxu0 0.0
    %3187 = vmatprep.subr.mxu0 0.0
    %3188 = vmatpush1.msra.mxu0 0.0
    %3189 = vmatprep.subr.mxu0 0.0
    %3190 = vmatpush1.msra.mxu0 0.0
    %3191 = vmatprep.subr.mxu0 0.0
    %3192 = vmatpush1.msra.mxu0 0.0
    %3193 = vmatprep.subr.mxu0 0.0
    %3194 = vmatpush1.msra.mxu0 0.0
    %3195 = vmatprep.subr.mxu0 0.0
    %3196 = vmatpush1.msra.mxu0 0.0
    %3197 = vmatprep.subr.mxu0 0.0
    %3198 = vmatpush1.msra.mxu0 0.0
    %3199 = vmatprep.subr.mxu0 0.0
    %3200 = vmatpush1.msra.mxu0 0.0
    %3201 = vmatprep.subr.mxu0 0.0
    %3202 = vmatpush1.msra.mxu0 0.0
    %3203 = vmatprep.subr.mxu0 0.0
    %3204 = vmatpush1.msra.mxu0 0.0
    %3205 = vmatprep.subr.mxu0 0.0
    %3206 = vmatpush1.msra.mxu0 0.0
    %3207 = vmatprep.subr.mxu0 0.0
    %3208 = vmatpush1.msra.mxu0 0.0
    %3209 = vmatprep.mubr.f32.mxu0 0.0
    %3210 = vmatmul.mubr.f32.gmra.mrb[0].mxu0 %v3069
    %v3211 = vpop.f32.mrb[0].mxu0
    %v3212 = vadd.f32 0.0, %v3211
    %v3213 = vpop.f32.mrb[0].mxu0
    %v3214 = vadd.f32 0.0, %v3213
    %3215 = vdwg.mxu0
    %v3216 = vadd.f32 %v3070, %v3141
    %v3217 = vadd.f32 %v3071, %v3143
    %v3218 = vadd.f32 %v3072, %v3212
    %v3219 = vadd.f32 %v3073, %v3214
    %v3220 = vxor.u32 %v3216, 2147483648
    %v3221 = vmul.f32 %v3220, 1.442695
    %v3222 = vpow.pop %v3221
    %v3223 = vadd.f32 %v3222, 1.0
    %v3224 = vrcp.pop %v3223
    %v3225 = vmul.f32 1.0, %v3224
    %v3226 = vxor.u32 %v3217, 2147483648
    %v3227 = vmul.f32 %v3226, 1.442695
    %v3228 = vpow.pop %v3227
    %v3229 = vadd.f32 %v3228, 1.0
    %v3230 = vrcp.pop %v3229
    %v3231 = vmul.f32 1.0, %v3230
    %v3232 = vtanh.pop %v3218
    %v3233 = vxor.u32 %v3219, 2147483648
    %v3234 = vmul.f32 %v3233, 1.442695
    %v3235 = vpow.pop %v3234
    %v3236 = vadd.f32 %v3235, 1.0
    %v3237 = vrcp.pop %v3236
    %v3238 = vmul.f32 1.0, %v3237
    %v3239 = vmul.f32 %v3231, %v3067
    %v3240 = vmul.f32 %v3225, %v3232
    %v3241 = vadd.f32 %v3239, %v3240
    %v3242 = vtanh.pop %v3241
    %v3243 = vmul.f32 %v3238, %v3242
    %v3244 = vld [vmem:[#allocation2 + $0x60] sm:$0xff]
    %v3245 = vld [vmem:[#allocation2 + $0x68] sm:$0xff]
    %v3246 = vld [vmem:[#allocation2 + $0x70] sm:$0xff]
    %v3247 = vld [vmem:[#allocation2 + $0x78] sm:$0xff]
    %3248 = vmatprep.subr.mxu0 %v2663
    %3249 = vmatpush1.msra.mxu0 %v2662
    %3250 = vmatprep.subr.mxu0 %v2667
    %3251 = vmatpush1.msra.mxu0 %v2666
    %3252 = vmatprep.subr.mxu0 %v2671
    %3253 = vmatpush1.msra.mxu0 %v2670
    %3254 = vmatprep.subr.mxu0 %v2675
    %3255 = vmatpush1.msra.mxu0 %v2674
    %3256 = vmatprep.subr.mxu0 %v2679
    %3257 = vmatpush1.msra.mxu0 %v2678
    %3258 = vmatprep.subr.mxu0 %v2683
    %3259 = vmatpush1.msra.mxu0 %v2682
    %3260 = vmatprep.subr.mxu0 %v2687
    %3261 = vmatpush1.msra.mxu0 %v2686
    %3262 = vmatprep.subr.mxu0 %v2691
    %3263 = vmatpush1.msra.mxu0 %v2690
    %3264 = vmatprep.subr.mxu0 %v2695
    %3265 = vmatpush1.msra.mxu0 %v2694
    %3266 = vmatprep.subr.mxu0 %v2699
    %3267 = vmatpush1.msra.mxu0 %v2698
    %3268 = vmatprep.subr.mxu0 %v2703
    %3269 = vmatpush1.msra.mxu0 %v2702
    %3270 = vmatprep.subr.mxu0 %v2707
    %3271 = vmatpush1.msra.mxu0 %v2706
    %3272 = vmatprep.subr.mxu0 %v2711
    %3273 = vmatpush1.msra.mxu0 %v2710
    %3274 = vmatprep.subr.mxu0 %v2715
    %3275 = vmatpush1.msra.mxu0 %v2714
    %3276 = vmatprep.subr.mxu0 %v2719
    %3277 = vmatpush1.msra.mxu0 %v2718
    %3278 = vmatprep.subr.mxu0 %v2723
    %3279 = vmatpush1.msra.mxu0 %v2722
    %3280 = vmatprep.subr.mxu0 0.0
    %3281 = vmatpush1.msra.mxu0 0.0
    %3282 = vmatprep.subr.mxu0 0.0
    %3283 = vmatpush1.msra.mxu0 0.0
    %3284 = vmatprep.subr.mxu0 0.0
    %3285 = vmatpush1.msra.mxu0 0.0
    %3286 = vmatprep.subr.mxu0 0.0
    %3287 = vmatpush1.msra.mxu0 0.0
    %3288 = vmatprep.subr.mxu0 0.0
    %3289 = vmatpush1.msra.mxu0 0.0
    %3290 = vmatprep.subr.mxu0 0.0
    %3291 = vmatpush1.msra.mxu0 0.0
    %3292 = vmatprep.subr.mxu0 0.0
    %3293 = vmatpush1.msra.mxu0 0.0
    %3294 = vmatprep.subr.mxu0 0.0
    %3295 = vmatpush1.msra.mxu0 0.0
    %3296 = vmatprep.subr.mxu0 0.0
    %3297 = vmatpush1.msra.mxu0 0.0
    %3298 = vmatprep.subr.mxu0 0.0
    %3299 = vmatpush1.msra.mxu0 0.0
    %3300 = vmatprep.subr.mxu0 0.0
    %3301 = vmatpush1.msra.mxu0 0.0
    %3302 = vmatprep.subr.mxu0 0.0
    %3303 = vmatpush1.msra.mxu0 0.0
    %3304 = vmatprep.subr.mxu0 0.0
    %3305 = vmatpush1.msra.mxu0 0.0
    %3306 = vmatprep.subr.mxu0 0.0
    %3307 = vmatpush1.msra.mxu0 0.0
    %3308 = vmatprep.subr.mxu0 0.0
    %3309 = vmatpush1.msra.mxu0 0.0
    %3310 = vmatprep.subr.mxu0 0.0
    %3311 = vmatpush1.msra.mxu0 0.0
    %3312 = vmatprep.mubr.f32.mxu0 0.0
    %3313 = vmatmul.mubr.f32.gmra.mrb[0].mxu0 %v3243
    %v3314 = vpop.f32.mrb[0].mxu0
    %v3315 = vadd.f32 0.0, %v3314
    %v3316 = vpop.f32.mrb[0].mxu0
    %v3317 = vadd.f32 0.0, %v3316
    %3318 = vdwg.mxu0
    %3319 = vmatprep.subr.mxu0 %v2665
    %3320 = vmatpush1.msra.mxu0 %v2664
    %3321 = vmatprep.subr.mxu0 %v2669
    %3322 = vmatpush1.msra.mxu0 %v2668
    %3323 = vmatprep.subr.mxu0 %v2673
    %3324 = vmatpush1.msra.mxu0 %v2672
    %3325 = vmatprep.subr.mxu0 %v2677
    %3326 = vmatpush1.msra.mxu0 %v2676
    %3327 = vmatprep.subr.mxu0 %v2681
    %3328 = vmatpush1.msra.mxu0 %v2680
    %3329 = vmatprep.subr.mxu0 %v2685
    %3330 = vmatpush1.msra.mxu0 %v2684
    %3331 = vmatprep.subr.mxu0 %v2689
    %3332 = vmatpush1.msra.mxu0 %v2688
    %3333 = vmatprep.subr.mxu0 %v2693
    %3334 = vmatpush1.msra.mxu0 %v2692
    %3335 = vmatprep.subr.mxu0 %v2697
    %3336 = vmatpush1.msra.mxu0 %v2696
    %3337 = vmatprep.subr.mxu0 %v2701
    %3338 = vmatpush1.msra.mxu0 %v2700
    %3339 = vmatprep.subr.mxu0 %v2705
    %3340 = vmatpush1.msra.mxu0 %v2704
    %3341 = vmatprep.subr.mxu0 %v2709
    %3342 = vmatpush1.msra.mxu0 %v2708
    %3343 = vmatprep.subr.mxu0 %v2713
    %3344 = vmatpush1.msra.mxu0 %v2712
    %3345 = vmatprep.subr.mxu0 %v2717
    %3346 = vmatpush1.msra.mxu0 %v2716
    %3347 = vmatprep.subr.mxu0 %v2721
    %3348 = vmatpush1.msra.mxu0 %v2720
    %3349 = vmatprep.subr.mxu0 %v2725
    %3350 = vmatpush1.msra.mxu0 %v2724
    %3351 = vmatprep.subr.mxu0 0.0
    %3352 = vmatpush1.msra.mxu0 0.0
    %3353 = vmatprep.subr.mxu0 0.0
    %3354 = vmatpush1.msra.mxu0 0.0
    %3355 = vmatprep.subr.mxu0 0.0
    %3356 = vmatpush1.msra.mxu0 0.0
    %3357 = vmatprep.subr.mxu0 0.0
    %3358 = vmatpush1.msra.mxu0 0.0
    %3359 = vmatprep.subr.mxu0 0.0
    %3360 = vmatpush1.msra.mxu0 0.0
    %3361 = vmatprep.subr.mxu0 0.0
    %3362 = vmatpush1.msra.mxu0 0.0
    %3363 = vmatprep.subr.mxu0 0.0
    %3364 = vmatpush1.msra.mxu0 0.0
    %3365 = vmatprep.subr.mxu0 0.0
    %3366 = vmatpush1.msra.mxu0 0.0
    %3367 = vmatprep.subr.mxu0 0.0
    %3368 = vmatpush1.msra.mxu0 0.0
    %3369 = vmatprep.subr.mxu0 0.0
    %3370 = vmatpush1.msra.mxu0 0.0
    %3371 = vmatprep.subr.mxu0 0.0
    %3372 = vmatpush1.msra.mxu0 0.0
    %3373 = vmatprep.subr.mxu0 0.0
    %3374 = vmatpush1.msra.mxu0 0.0
    %3375 = vmatprep.subr.mxu0 0.0
    %3376 = vmatpush1.msra.mxu0 0.0
    %3377 = vmatprep.subr.mxu0 0.0
    %3378 = vmatpush1.msra.mxu0 0.0
    %3379 = vmatprep.subr.mxu0 0.0
    %3380 = vmatpush1.msra.mxu0 0.0
    %3381 = vmatprep.subr.mxu0 0.0
    %3382 = vmatpush1.msra.mxu0 0.0
    %3383 = vmatprep.mubr.f32.mxu0 0.0
    %3384 = vmatmul.mubr.f32.gmra.mrb[0].mxu0 %v3243
    %v3385 = vpop.f32.mrb[0].mxu0
    %v3386 = vadd.f32 0.0, %v3385
    %v3387 = vpop.f32.mrb[0].mxu0
    %v3388 = vadd.f32 0.0, %v3387
    %3389 = vdwg.mxu0
    %v3390 = vadd.f32 %v3244, %v3315
    %v3391 = vadd.f32 %v3245, %v3317
    %v3392 = vadd.f32 %v3246, %v3386
    %v3393 = vadd.f32 %v3247, %v3388
    %v3394 = vxor.u32 %v3390, 2147483648
    %v3395 = vmul.f32 %v3394, 1.442695
    %v3396 = vpow.pop %v3395
    %v3397 = vadd.f32 %v3396, 1.0
    %v3398 = vrcp.pop %v3397
    %v3399 = vmul.f32 1.0, %v3398
    %v3400 = vxor.u32 %v3391, 2147483648
    %v3401 = vmul.f32 %v3400, 1.442695
    %v3402 = vpow.pop %v3401
    %v3403 = vadd.f32 %v3402, 1.0
    %v3404 = vrcp.pop %v3403
    %v3405 = vmul.f32 1.0, %v3404
    %v3406 = vtanh.pop %v3392
    %v3407 = vxor.u32 %v3393, 2147483648
    %v3408 = vmul.f32 %v3407, 1.442695
    %v3409 = vpow.pop %v3408
    %v3410 = vadd.f32 %v3409, 1.0
    %v3411 = vrcp.pop %v3410
    %v3412 = vmul.f32 1.0, %v3411
    %v3413 = vmul.f32 %v3405, %v3241
    %v3414 = vmul.f32 %v3399, %v3406
    %v3415 = vadd.f32 %v3413, %v3414
    %v3416 = vtanh.pop %v3415
    %v3417 = vmul.f32 %v3412, %v3416
    %v3418 = vld [vmem:[#allocation2 + $0x80] sm:$0xff]
    %v3419 = vld [vmem:[#allocation2 + $0x88] sm:$0xff]
    %v3420 = vld [vmem:[#allocation2 + $0x90] sm:$0xff]
    %v3421 = vld [vmem:[#allocation2 + $0x98] sm:$0xff]
    %3422 = vmatprep.subr.mxu0 %v2663
    %3423 = vmatpush1.msra.mxu0 %v2662
    %3424 = vmatprep.subr.mxu0 %v2667
    %3425 = vmatpush1.msra.mxu0 %v2666
    %3426 = vmatprep.subr.mxu0 %v2671
    %3427 = vmatpush1.msra.mxu0 %v2670
    %3428 = vmatprep.subr.mxu0 %v2675
    %3429 = vmatpush1.msra.mxu0 %v2674
    %3430 = vmatprep.subr.mxu0 %v2679
    %3431 = vmatpush1.msra.mxu0 %v2678
    %3432 = vmatprep.subr.mxu0 %v2683
    %3433 = vmatpush1.msra.mxu0 %v2682
    %3434 = vmatprep.subr.mxu0 %v2687
    %3435 = vmatpush1.msra.mxu0 %v2686
    %3436 = vmatprep.subr.mxu0 %v2691
    %3437 = vmatpush1.msra.mxu0 %v2690
    %3438 = vmatprep.subr.mxu0 %v2695
    %3439 = vmatpush1.msra.mxu0 %v2694
    %3440 = vmatprep.subr.mxu0 %v2699
    %3441 = vmatpush1.msra.mxu0 %v2698
    %3442 = vmatprep.subr.mxu0 %v2703
    %3443 = vmatpush1.msra.mxu0 %v2702
    %3444 = vmatprep.subr.mxu0 %v2707
    %3445 = vmatpush1.msra.mxu0 %v2706
    %3446 = vmatprep.subr.mxu0 %v2711
    %3447 = vmatpush1.msra.mxu0 %v2710
    %3448 = vmatprep.subr.mxu0 %v2715
    %3449 = vmatpush1.msra.mxu0 %v2714
    %3450 = vmatprep.subr.mxu0 %v2719
    %3451 = vmatpush1.msra.mxu0 %v2718
    %3452 = vmatprep.subr.mxu0 %v2723
    %3453 = vmatpush1.msra.mxu0 %v2722
    %3454 = vmatprep.subr.mxu0 0.0
    %3455 = vmatpush1.msra.mxu0 0.0
    %3456 = vmatprep.subr.mxu0 0.0
    %3457 = vmatpush1.msra.mxu0 0.0
    %3458 = vmatprep.subr.mxu0 0.0
    %3459 = vmatpush1.msra.mxu0 0.0
    %3460 = vmatprep.subr.mxu0 0.0
    %3461 = vmatpush1.msra.mxu0 0.0
    %3462 = vmatprep.subr.mxu0 0.0
    %3463 = vmatpush1.msra.mxu0 0.0
    %3464 = vmatprep.subr.mxu0 0.0
    %3465 = vmatpush1.msra.mxu0 0.0
    %3466 = vmatprep.subr.mxu0 0.0
    %3467 = vmatpush1.msra.mxu0 0.0
    %3468 = vmatprep.subr.mxu0 0.0
    %3469 = vmatpush1.msra.mxu0 0.0
    %3470 = vmatprep.subr.mxu0 0.0
    %3471 = vmatpush1.msra.mxu0 0.0
    %3472 = vmatprep.subr.mxu0 0.0
    %3473 = vmatpush1.msra.mxu0 0.0
    %3474 = vmatprep.subr.mxu0 0.0
    %3475 = vmatpush1.msra.mxu0 0.0
    %3476 = vmatprep.subr.mxu0 0.0
    %3477 = vmatpush1.msra.mxu0 0.0
    %3478 = vmatprep.subr.mxu0 0.0
    %3479 = vmatpush1.msra.mxu0 0.0
    %3480 = vmatprep.subr.mxu0 0.0
    %3481 = vmatpush1.msra.mxu0 0.0
    %3482 = vmatprep.subr.mxu0 0.0
    %3483 = vmatpush1.msra.mxu0 0.0
    %3484 = vmatprep.subr.mxu0 0.0
    %3485 = vmatpush1.msra.mxu0 0.0
    %3486 = vmatprep.mubr.f32.mxu0 0.0
    %3487 = vmatmul.mubr.f32.gmra.mrb[0].mxu0 %v3417
    %v3488 = vpop.f32.mrb[0].mxu0
    %v3489 = vadd.f32 0.0, %v3488
    %v3490 = vpop.f32.mrb[0].mxu0
    %v3491 = vadd.f32 0.0, %v3490
    %3492 = vdwg.mxu0
    %3493 = vmatprep.subr.mxu0 %v2665
    %3494 = vmatpush1.msra.mxu0 %v2664
    %3495 = vmatprep.subr.mxu0 %v2669
    %3496 = vmatpush1.msra.mxu0 %v2668
    %3497 = vmatprep.subr.mxu0 %v2673
    %3498 = vmatpush1.msra.mxu0 %v2672
    %3499 = vmatprep.subr.mxu0 %v2677
    %3500 = vmatpush1.msra.mxu0 %v2676
    %3501 = vmatprep.subr.mxu0 %v2681
    %3502 = vmatpush1.msra.mxu0 %v2680
    %3503 = vmatprep.subr.mxu0 %v2685
    %3504 = vmatpush1.msra.mxu0 %v2684
    %3505 = vmatprep.subr.mxu0 %v2689
    %3506 = vmatpush1.msra.mxu0 %v2688
    %3507 = vmatprep.subr.mxu0 %v2693
    %3508 = vmatpush1.msra.mxu0 %v2692
    %3509 = vmatprep.subr.mxu0 %v2697
    %3510 = vmatpush1.msra.mxu0 %v2696
    %3511 = vmatprep.subr.mxu0 %v2701
    %3512 = vmatpush1.msra.mxu0 %v2700
    %3513 = vmatprep.subr.mxu0 %v2705
    %3514 = vmatpush1.msra.mxu0 %v2704
    %3515 = vmatprep.subr.mxu0 %v2709
    %3516 = vmatpush1.msra.mxu0 %v2708
    %3517 = vmatprep.subr.mxu0 %v2713
    %3518 = vmatpush1.msra.mxu0 %v2712
    %3519 = vmatprep.subr.mxu0 %v2717
    %3520 = vmatpush1.msra.mxu0 %v2716
    %3521 = vmatprep.subr.mxu0 %v2721
    %3522 = vmatpush1.msra.mxu0 %v2720
    %3523 = vmatprep.subr.mxu0 %v2725
    %3524 = vmatpush1.msra.mxu0 %v2724
    %3525 = vmatprep.subr.mxu0 0.0
    %3526 = vmatpush1.msra.mxu0 0.0
    %3527 = vmatprep.subr.mxu0 0.0
    %3528 = vmatpush1.msra.mxu0 0.0
    %3529 = vmatprep.subr.mxu0 0.0
    %3530 = vmatpush1.msra.mxu0 0.0
    %3531 = vmatprep.subr.mxu0 0.0
    %3532 = vmatpush1.msra.mxu0 0.0
    %3533 = vmatprep.subr.mxu0 0.0
    %3534 = vmatpush1.msra.mxu0 0.0
    %3535 = vmatprep.subr.mxu0 0.0
    %3536 = vmatpush1.msra.mxu0 0.0
    %3537 = vmatprep.subr.mxu0 0.0
    %3538 = vmatpush1.msra.mxu0 0.0
    %3539 = vmatprep.subr.mxu0 0.0
    %3540 = vmatpush1.msra.mxu0 0.0
    %3541 = vmatprep.subr.mxu0 0.0
    %3542 = vmatpush1.msra.mxu0 0.0
    %3543 = vmatprep.subr.mxu0 0.0
    %3544 = vmatpush1.msra.mxu0 0.0
    %3545 = vmatprep.subr.mxu0 0.0
    %3546 = vmatpush1.msra.mxu0 0.0
    %3547 = vmatprep.subr.mxu0 0.0
    %3548 = vmatpush1.msra.mxu0 0.0
    %3549 = vmatprep.subr.mxu0 0.0
    %3550 = vmatpush1.msra.mxu0 0.0
    %3551 = vmatprep.subr.mxu0 0.0
    %3552 = vmatpush1.msra.mxu0 0.0
    %3553 = vmatprep.subr.mxu0 0.0
    %3554 = vmatpush1.msra.mxu0 0.0
    %3555 = vmatprep.subr.mxu0 0.0
    %3556 = vmatpush1.msra.mxu0 0.0
    %3557 = vmatprep.mubr.f32.mxu0 0.0
    %3558 = vmatmul.mubr.f32.gmra.mrb[0].mxu0 %v3417
    %v3559 = vpop.f32.mrb[0].mxu0
    %v3560 = vadd.f32 0.0, %v3559
    %v3561 = vpop.f32.mrb[0].mxu0
    %v3562 = vadd.f32 0.0, %v3561
    %3563 = vdwg.mxu0
    %v3564 = vadd.f32 %v3418, %v3489
    %v3565 = vadd.f32 %v3419, %v3491
    %v3566 = vadd.f32 %v3420, %v3560
    %v3567 = vadd.f32 %v3421, %v3562
    %v3568 = vxor.u32 %v3564, 2147483648
    %v3569 = vmul.f32 %v3568, 1.442695
    %v3570 = vpow.pop %v3569
    %v3571 = vadd.f32 %v3570, 1.0
    %v3572 = vrcp.pop %v3571
    %v3573 = vmul.f32 1.0, %v3572
    %v3574 = vxor.u32 %v3565, 2147483648
    %v3575 = vmul.f32 %v3574, 1.442695
    %v3576 = vpow.pop %v3575
    %v3577 = vadd.f32 %v3576, 1.0
    %v3578 = vrcp.pop %v3577
    %v3579 = vmul.f32 1.0, %v3578
    %v3580 = vtanh.pop %v3566
    %v3581 = vxor.u32 %v3567, 2147483648
    %v3582 = vmul.f32 %v3581, 1.442695
    %v3583 = vpow.pop %v3582
    %v3584 = vadd.f32 %v3583, 1.0
    %v3585 = vrcp.pop %v3584
    %v3586 = vmul.f32 1.0, %v3585
    %v3587 = vmul.f32 %v3579, %v3415
    %v3588 = vmul.f32 %v3573, %v3580
    %v3589 = vadd.f32 %v3587, %v3588
    %v3590 = vtanh.pop %v3589
    %v3591 = vmul.f32 %v3586, %v3590
    %v3592 = vld [vmem:[#allocation2 + $0xa0] sm:$0xff]
    %v3593 = vld [vmem:[#allocation2 + $0xa8] sm:$0xff]
    %v3594 = vld [vmem:[#allocation2 + $0xb0] sm:$0xff]
    %v3595 = vld [vmem:[#allocation2 + $0xb8] sm:$0xff]
    %3596 = vmatprep.subr.mxu0 %v2663
    %3597 = vmatpush1.msra.mxu0 %v2662
    %3598 = vmatprep.subr.mxu0 %v2667
    %3599 = vmatpush1.msra.mxu0 %v2666
    %3600 = vmatprep.subr.mxu0 %v2671
    %3601 = vmatpush1.msra.mxu0 %v2670
    %3602 = vmatprep.subr.mxu0 %v2675
    %3603 = vmatpush1.msra.mxu0 %v2674
    %3604 = vmatprep.subr.mxu0 %v2679
    %3605 = vmatpush1.msra.mxu0 %v2678
    %3606 = vmatprep.subr.mxu0 %v2683
    %3607 = vmatpush1.msra.mxu0 %v2682
    %3608 = vmatprep.subr.mxu0 %v2687
    %3609 = vmatpush1.msra.mxu0 %v2686
    %3610 = vmatprep.subr.mxu0 %v2691
    %3611 = vmatpush1.msra.mxu0 %v2690
    %3612 = vmatprep.subr.mxu0 %v2695
    %3613 = vmatpush1.msra.mxu0 %v2694
    %3614 = vmatprep.subr.mxu0 %v2699
    %3615 = vmatpush1.msra.mxu0 %v2698
    %3616 = vmatprep.subr.mxu0 %v2703
    %3617 = vmatpush1.msra.mxu0 %v2702
    %3618 = vmatprep.subr.mxu0 %v2707
    %3619 = vmatpush1.msra.mxu0 %v2706
    %3620 = vmatprep.subr.mxu0 %v2711
    %3621 = vmatpush1.msra.mxu0 %v2710
    %3622 = vmatprep.subr.mxu0 %v2715
    %3623 = vmatpush1.msra.mxu0 %v2714
    %3624 = vmatprep.subr.mxu0 %v2719
    %3625 = vmatpush1.msra.mxu0 %v2718
    %3626 = vmatprep.subr.mxu0 %v2723
    %3627 = vmatpush1.msra.mxu0 %v2722
    %3628 = vmatprep.subr.mxu0 0.0
    %3629 = vmatpush1.msra.mxu0 0.0
    %3630 = vmatprep.subr.mxu0 0.0
    %3631 = vmatpush1.msra.mxu0 0.0
    %3632 = vmatprep.subr.mxu0 0.0
    %3633 = vmatpush1.msra.mxu0 0.0
    %3634 = vmatprep.subr.mxu0 0.0
    %3635 = vmatpush1.msra.mxu0 0.0
    %3636 = vmatprep.subr.mxu0 0.0
    %3637 = vmatpush1.msra.mxu0 0.0
    %3638 = vmatprep.subr.mxu0 0.0
    %3639 = vmatpush1.msra.mxu0 0.0
    %3640 = vmatprep.subr.mxu0 0.0
    %3641 = vmatpush1.msra.mxu0 0.0
    %3642 = vmatprep.subr.mxu0 0.0
    %3643 = vmatpush1.msra.mxu0 0.0
    %3644 = vmatprep.subr.mxu0 0.0
    %3645 = vmatpush1.msra.mxu0 0.0
    %3646 = vmatprep.subr.mxu0 0.0
    %3647 = vmatpush1.msra.mxu0 0.0
    %3648 = vmatprep.subr.mxu0 0.0
    %3649 = vmatpush1.msra.mxu0 0.0
    %3650 = vmatprep.subr.mxu0 0.0
    %3651 = vmatpush1.msra.mxu0 0.0
    %3652 = vmatprep.subr.mxu0 0.0
    %3653 = vmatpush1.msra.mxu0 0.0
    %3654 = vmatprep.subr.mxu0 0.0
    %3655 = vmatpush1.msra.mxu0 0.0
    %3656 = vmatprep.subr.mxu0 0.0
    %3657 = vmatpush1.msra.mxu0 0.0
    %3658 = vmatprep.subr.mxu0 0.0
    %3659 = vmatpush1.msra.mxu0 0.0
    %3660 = vmatprep.mubr.f32.mxu0 0.0
    %3661 = vmatmul.mubr.f32.gmra.mrb[0].mxu0 %v3591
    %v3662 = vpop.f32.mrb[0].mxu0
    %v3663 = vadd.f32 0.0, %v3662
    %v3664 = vpop.f32.mrb[0].mxu0
    %v3665 = vadd.f32 0.0, %v3664
    %3666 = vdwg.mxu0
    %3667 = vmatprep.subr.mxu0 %v2665
    %3668 = vmatpush1.msra.mxu0 %v2664
    %3669 = vmatprep.subr.mxu0 %v2669
    %3670 = vmatpush1.msra.mxu0 %v2668
    %3671 = vmatprep.subr.mxu0 %v2673
    %3672 = vmatpush1.msra.mxu0 %v2672
    %3673 = vmatprep.subr.mxu0 %v2677
    %3674 = vmatpush1.msra.mxu0 %v2676
    %3675 = vmatprep.subr.mxu0 %v2681
    %3676 = vmatpush1.msra.mxu0 %v2680
    %3677 = vmatprep.subr.mxu0 %v2685
    %3678 = vmatpush1.msra.mxu0 %v2684
    %3679 = vmatprep.subr.mxu0 %v2689
    %3680 = vmatpush1.msra.mxu0 %v2688
    %3681 = vmatprep.subr.mxu0 %v2693
    %3682 = vmatpush1.msra.mxu0 %v2692
    %3683 = vmatprep.subr.mxu0 %v2697
    %3684 = vmatpush1.msra.mxu0 %v2696
    %3685 = vmatprep.subr.mxu0 %v2701
    %3686 = vmatpush1.msra.mxu0 %v2700
    %3687 = vmatprep.subr.mxu0 %v2705
    %3688 = vmatpush1.msra.mxu0 %v2704
    %3689 = vmatprep.subr.mxu0 %v2709
    %3690 = vmatpush1.msra.mxu0 %v2708
    %3691 = vmatprep.subr.mxu0 %v2713
    %3692 = vmatpush1.msra.mxu0 %v2712
    %3693 = vmatprep.subr.mxu0 %v2717
    %3694 = vmatpush1.msra.mxu0 %v2716
    %3695 = vmatprep.subr.mxu0 %v2721
    %3696 = vmatpush1.msra.mxu0 %v2720
    %3697 = vmatprep.subr.mxu0 %v2725
    %3698 = vmatpush1.msra.mxu0 %v2724
    %3699 = vmatprep.subr.mxu0 0.0
    %3700 = vmatpush1.msra.mxu0 0.0
    %3701 = vmatprep.subr.mxu0 0.0
    %3702 = vmatpush1.msra.mxu0 0.0
    %3703 = vmatprep.subr.mxu0 0.0
    %3704 = vmatpush1.msra.mxu0 0.0
    %3705 = vmatprep.subr.mxu0 0.0
    %3706 = vmatpush1.msra.mxu0 0.0
    %3707 = vmatprep.subr.mxu0 0.0
    %3708 = vmatpush1.msra.mxu0 0.0
    %3709 = vmatprep.subr.mxu0 0.0
    %3710 = vmatpush1.msra.mxu0 0.0
    %3711 = vmatprep.subr.mxu0 0.0
    %3712 = vmatpush1.msra.mxu0 0.0
    %3713 = vmatprep.subr.mxu0 0.0
    %3714 = vmatpush1.msra.mxu0 0.0
    %3715 = vmatprep.subr.mxu0 0.0
    %3716 = vmatpush1.msra.mxu0 0.0
    %3717 = vmatprep.subr.mxu0 0.0
    %3718 = vmatpush1.msra.mxu0 0.0
    %3719 = vmatprep.subr.mxu0 0.0
    %3720 = vmatpush1.msra.mxu0 0.0
    %3721 = vmatprep.subr.mxu0 0.0
    %3722 = vmatpush1.msra.mxu0 0.0
    %3723 = vmatprep.subr.mxu0 0.0
    %3724 = vmatpush1.msra.mxu0 0.0
    %3725 = vmatprep.subr.mxu0 0.0
    %3726 = vmatpush1.msra.mxu0 0.0
    %3727 = vmatprep.subr.mxu0 0.0
    %3728 = vmatpush1.msra.mxu0 0.0
    %3729 = vmatprep.subr.mxu0 0.0
    %3730 = vmatpush1.msra.mxu0 0.0
    %3731 = vmatprep.mubr.f32.mxu0 0.0
    %3732 = vmatmul.mubr.f32.gmra.mrb[0].mxu0 %v3591
    %v3733 = vpop.f32.mrb[0].mxu0
    %v3734 = vadd.f32 0.0, %v3733
    %v3735 = vpop.f32.mrb[0].mxu0
    %v3736 = vadd.f32 0.0, %v3735
    %3737 = vdwg.mxu0
    %v3738 = vadd.f32 %v3592, %v3663
    %v3739 = vadd.f32 %v3593, %v3665
    %v3740 = vadd.f32 %v3594, %v3734
    %v3741 = vadd.f32 %v3595, %v3736
    %v3742 = vxor.u32 %v3738, 2147483648
    %v3743 = vmul.f32 %v3742, 1.442695
    %v3744 = vpow.pop %v3743
    %v3745 = vadd.f32 %v3744, 1.0
    %v3746 = vrcp.pop %v3745
    %v3747 = vmul.f32 1.0, %v3746
    %v3748 = vxor.u32 %v3739, 2147483648
    %v3749 = vmul.f32 %v3748, 1.442695
    %v3750 = vpow.pop %v3749
    %v3751 = vadd.f32 %v3750, 1.0
    %v3752 = vrcp.pop %v3751
    %v3753 = vmul.f32 1.0, %v3752
    %v3754 = vtanh.pop %v3740
    %v3755 = vxor.u32 %v3741, 2147483648
    %v3756 = vmul.f32 %v3755, 1.442695
    %v3757 = vpow.pop %v3756
    %v3758 = vadd.f32 %v3757, 1.0
    %v3759 = vrcp.pop %v3758
    %v3760 = vmul.f32 1.0, %v3759
    %v3761 = vmul.f32 %v3753, %v3589
    %v3762 = vmul.f32 %v3747, %v3754
    %v3763 = vadd.f32 %v3761, %v3762
    %v3764 = vtanh.pop %v3763
    %v3765 = vmul.f32 %v3760, %v3764
    %v3766 = vld [vmem:[#allocation2 + $0xc0] sm:$0xff]
    %v3767 = vld [vmem:[#allocation2 + $0xc8] sm:$0xff]
    %v3768 = vld [vmem:[#allocation2 + $0xd0] sm:$0xff]
    %v3769 = vld [vmem:[#allocation2 + $0xd8] sm:$0xff]
    %3770 = vmatprep.subr.mxu0 %v2663
    %3771 = vmatpush1.msra.mxu0 %v2662
    %3772 = vmatprep.subr.mxu0 %v2667
    %3773 = vmatpush1.msra.mxu0 %v2666
    %3774 = vmatprep.subr.mxu0 %v2671
    %3775 = vmatpush1.msra.mxu0 %v2670
    %3776 = vmatprep.subr.mxu0 %v2675
    %3777 = vmatpush1.msra.mxu0 %v2674
    %3778 = vmatprep.subr.mxu0 %v2679
    %3779 = vmatpush1.msra.mxu0 %v2678
    %3780 = vmatprep.subr.mxu0 %v2683
    %3781 = vmatpush1.msra.mxu0 %v2682
    %3782 = vmatprep.subr.mxu0 %v2687
    %3783 = vmatpush1.msra.mxu0 %v2686
    %3784 = vmatprep.subr.mxu0 %v2691
    %3785 = vmatpush1.msra.mxu0 %v2690
    %3786 = vmatprep.subr.mxu0 %v2695
    %3787 = vmatpush1.msra.mxu0 %v2694
    %3788 = vmatprep.subr.mxu0 %v2699
    %3789 = vmatpush1.msra.mxu0 %v2698
    %3790 = vmatprep.subr.mxu0 %v2703
    %3791 = vmatpush1.msra.mxu0 %v2702
    %3792 = vmatprep.subr.mxu0 %v2707
    %3793 = vmatpush1.msra.mxu0 %v2706
    %3794 = vmatprep.subr.mxu0 %v2711
    %3795 = vmatpush1.msra.mxu0 %v2710
    %3796 = vmatprep.subr.mxu0 %v2715
    %3797 = vmatpush1.msra.mxu0 %v2714
    %3798 = vmatprep.subr.mxu0 %v2719
    %3799 = vmatpush1.msra.mxu0 %v2718
    %3800 = vmatprep.subr.mxu0 %v2723
    %3801 = vmatpush1.msra.mxu0 %v2722
    %3802 = vmatprep.subr.mxu0 0.0
    %3803 = vmatpush1.msra.mxu0 0.0
    %3804 = vmatprep.subr.mxu0 0.0
    %3805 = vmatpush1.msra.mxu0 0.0
    %3806 = vmatprep.subr.mxu0 0.0
    %3807 = vmatpush1.msra.mxu0 0.0
    %3808 = vmatprep.subr.mxu0 0.0
    %3809 = vmatpush1.msra.mxu0 0.0
    %3810 = vmatprep.subr.mxu0 0.0
    %3811 = vmatpush1.msra.mxu0 0.0
    %3812 = vmatprep.subr.mxu0 0.0
    %3813 = vmatpush1.msra.mxu0 0.0
    %3814 = vmatprep.subr.mxu0 0.0
    %3815 = vmatpush1.msra.mxu0 0.0
    %3816 = vmatprep.subr.mxu0 0.0
    %3817 = vmatpush1.msra.mxu0 0.0
    %3818 = vmatprep.subr.mxu0 0.0
    %3819 = vmatpush1.msra.mxu0 0.0
    %3820 = vmatprep.subr.mxu0 0.0
    %3821 = vmatpush1.msra.mxu0 0.0
    %3822 = vmatprep.subr.mxu0 0.0
    %3823 = vmatpush1.msra.mxu0 0.0
    %3824 = vmatprep.subr.mxu0 0.0
    %3825 = vmatpush1.msra.mxu0 0.0
    %3826 = vmatprep.subr.mxu0 0.0
    %3827 = vmatpush1.msra.mxu0 0.0
    %3828 = vmatprep.subr.mxu0 0.0
    %3829 = vmatpush1.msra.mxu0 0.0
    %3830 = vmatprep.subr.mxu0 0.0
    %3831 = vmatpush1.msra.mxu0 0.0
    %3832 = vmatprep.subr.mxu0 0.0
    %3833 = vmatpush1.msra.mxu0 0.0
    %3834 = vmatprep.mubr.f32.mxu0 0.0
    %3835 = vmatmul.mubr.f32.gmra.mrb[0].mxu0 %v3765
    %v3836 = vpop.f32.mrb[0].mxu0
    %v3837 = vadd.f32 0.0, %v3836
    %v3838 = vpop.f32.mrb[0].mxu0
    %v3839 = vadd.f32 0.0, %v3838
    %3840 = vdwg.mxu0
    %3841 = vmatprep.subr.mxu0 %v2665
    %3842 = vmatpush1.msra.mxu0 %v2664
    %3843 = vmatprep.subr.mxu0 %v2669
    %3844 = vmatpush1.msra.mxu0 %v2668
    %3845 = vmatprep.subr.mxu0 %v2673
    %3846 = vmatpush1.msra.mxu0 %v2672
    %3847 = vmatprep.subr.mxu0 %v2677
    %3848 = vmatpush1.msra.mxu0 %v2676
    %3849 = vmatprep.subr.mxu0 %v2681
    %3850 = vmatpush1.msra.mxu0 %v2680
    %3851 = vmatprep.subr.mxu0 %v2685
    %3852 = vmatpush1.msra.mxu0 %v2684
    %3853 = vmatprep.subr.mxu0 %v2689
    %3854 = vmatpush1.msra.mxu0 %v2688
    %3855 = vmatprep.subr.mxu0 %v2693
    %3856 = vmatpush1.msra.mxu0 %v2692
    %3857 = vmatprep.subr.mxu0 %v2697
    %3858 = vmatpush1.msra.mxu0 %v2696
    %3859 = vmatprep.subr.mxu0 %v2701
    %3860 = vmatpush1.msra.mxu0 %v2700
    %3861 = vmatprep.subr.mxu0 %v2705
    %3862 = vmatpush1.msra.mxu0 %v2704
    %3863 = vmatprep.subr.mxu0 %v2709
    %3864 = vmatpush1.msra.mxu0 %v2708
    %3865 = vmatprep.subr.mxu0 %v2713
    %3866 = vmatpush1.msra.mxu0 %v2712
    %3867 = vmatprep.subr.mxu0 %v2717
    %3868 = vmatpush1.msra.mxu0 %v2716
    %3869 = vmatprep.subr.mxu0 %v2721
    %3870 = vmatpush1.msra.mxu0 %v2720
    %3871 = vmatprep.subr.mxu0 %v2725
    %3872 = vmatpush1.msra.mxu0 %v2724
    %3873 = vmatprep.subr.mxu0 0.0
    %3874 = vmatpush1.msra.mxu0 0.0
    %3875 = vmatprep.subr.mxu0 0.0
    %3876 = vmatpush1.msra.mxu0 0.0
    %3877 = vmatprep.subr.mxu0 0.0
    %3878 = vmatpush1.msra.mxu0 0.0
    %3879 = vmatprep.subr.mxu0 0.0
    %3880 = vmatpush1.msra.mxu0 0.0
    %3881 = vmatprep.subr.mxu0 0.0
    %3882 = vmatpush1.msra.mxu0 0.0
    %3883 = vmatprep.subr.mxu0 0.0
    %3884 = vmatpush1.msra.mxu0 0.0
    %3885 = vmatprep.subr.mxu0 0.0
    %3886 = vmatpush1.msra.mxu0 0.0
    %3887 = vmatprep.subr.mxu0 0.0
    %3888 = vmatpush1.msra.mxu0 0.0
    %3889 = vmatprep.subr.mxu0 0.0
    %3890 = vmatpush1.msra.mxu0 0.0
    %3891 = vmatprep.subr.mxu0 0.0
    %3892 = vmatpush1.msra.mxu0 0.0
    %3893 = vmatprep.subr.mxu0 0.0
    %3894 = vmatpush1.msra.mxu0 0.0
    %3895 = vmatprep.subr.mxu0 0.0
    %3896 = vmatpush1.msra.mxu0 0.0
    %3897 = vmatprep.subr.mxu0 0.0
    %3898 = vmatpush1.msra.mxu0 0.0
    %3899 = vmatprep.subr.mxu0 0.0
    %3900 = vmatpush1.msra.mxu0 0.0
    %3901 = vmatprep.subr.mxu0 0.0
    %3902 = vmatpush1.msra.mxu0 0.0
    %3903 = vmatprep.subr.mxu0 0.0
    %3904 = vmatpush1.msra.mxu0 0.0
    %3905 = vmatprep.mubr.f32.mxu0 0.0
    %3906 = vmatmul.mubr.f32.gmra.mrb[0].mxu0 %v3765
    %v3907 = vpop.f32.mrb[0].mxu0
    %v3908 = vadd.f32 0.0, %v3907
    %v3909 = vpop.f32.mrb[0].mxu0
    %v3910 = vadd.f32 0.0, %v3909
    %3911 = vdwg.mxu0
    %v3912 = vadd.f32 %v3766, %v3837
    %v3913 = vadd.f32 %v3767, %v3839
    %v3914 = vadd.f32 %v3768, %v3908
    %v3915 = vadd.f32 %v3769, %v3910
    %v3916 = vxor.u32 %v3912, 2147483648
    %v3917 = vmul.f32 %v3916, 1.442695
    %v3918 = vpow.pop %v3917
    %v3919 = vadd.f32 %v3918, 1.0
    %v3920 = vrcp.pop %v3919
    %v3921 = vmul.f32 1.0, %v3920
    %v3922 = vxor.u32 %v3913, 2147483648
    %v3923 = vmul.f32 %v3922, 1.442695
    %v3924 = vpow.pop %v3923
    %v3925 = vadd.f32 %v3924, 1.0
    %v3926 = vrcp.pop %v3925
    %v3927 = vmul.f32 1.0, %v3926
    %v3928 = vtanh.pop %v3914
    %v3929 = vxor.u32 %v3915, 2147483648
    %v3930 = vmul.f32 %v3929, 1.442695
    %v3931 = vpow.pop %v3930
    %v3932 = vadd.f32 %v3931, 1.0
    %v3933 = vrcp.pop %v3932
    %v3934 = vmul.f32 1.0, %v3933
    %v3935 = vmul.f32 %v3927, %v3763
    %v3936 = vmul.f32 %v3921, %v3928
    %v3937 = vadd.f32 %v3935, %v3936
    %v3938 = vtanh.pop %v3937
    %v3939 = vmul.f32 %v3934, %v3938
    %v3940 = vld [vmem:[#allocation2 + $0xe0] sm:$0xff]
    %v3941 = vld [vmem:[#allocation2 + $0xe8] sm:$0xff]
    %v3942 = vld [vmem:[#allocation2 + $0xf0] sm:$0xff]
    %v3943 = vld [vmem:[#allocation2 + $0xf8] sm:$0xff]
    %3944 = vmatprep.subr.mxu0 %v2663
    %3945 = vmatpush1.msra.mxu0 %v2662
    %3946 = vmatprep.subr.mxu0 %v2667
    %3947 = vmatpush1.msra.mxu0 %v2666
    %3948 = vmatprep.subr.mxu0 %v2671
    %3949 = vmatpush1.msra.mxu0 %v2670
    %3950 = vmatprep.subr.mxu0 %v2675
    %3951 = vmatpush1.msra.mxu0 %v2674
    %3952 = vmatprep.subr.mxu0 %v2679
    %3953 = vmatpush1.msra.mxu0 %v2678
    %3954 = vmatprep.subr.mxu0 %v2683
    %3955 = vmatpush1.msra.mxu0 %v2682
    %3956 = vmatprep.subr.mxu0 %v2687
    %3957 = vmatpush1.msra.mxu0 %v2686
    %3958 = vmatprep.subr.mxu0 %v2691
    %3959 = vmatpush1.msra.mxu0 %v2690
    %3960 = vmatprep.subr.mxu0 %v2695
    %3961 = vmatpush1.msra.mxu0 %v2694
    %3962 = vmatprep.subr.mxu0 %v2699
    %3963 = vmatpush1.msra.mxu0 %v2698
    %3964 = vmatprep.subr.mxu0 %v2703
    %3965 = vmatpush1.msra.mxu0 %v2702
    %3966 = vmatprep.subr.mxu0 %v2707
    %3967 = vmatpush1.msra.mxu0 %v2706
    %3968 = vmatprep.subr.mxu0 %v2711
    %3969 = vmatpush1.msra.mxu0 %v2710
    %3970 = vmatprep.subr.mxu0 %v2715
    %3971 = vmatpush1.msra.mxu0 %v2714
    %3972 = vmatprep.subr.mxu0 %v2719
    %3973 = vmatpush1.msra.mxu0 %v2718
    %3974 = vmatprep.subr.mxu0 %v2723
    %3975 = vmatpush1.msra.mxu0 %v2722
    %3976 = vmatprep.subr.mxu0 0.0
    %3977 = vmatpush1.msra.mxu0 0.0
    %3978 = vmatprep.subr.mxu0 0.0
    %3979 = vmatpush1.msra.mxu0 0.0
    %3980 = vmatprep.subr.mxu0 0.0
    %3981 = vmatpush1.msra.mxu0 0.0
    %3982 = vmatprep.subr.mxu0 0.0
    %3983 = vmatpush1.msra.mxu0 0.0
    %3984 = vmatprep.subr.mxu0 0.0
    %3985 = vmatpush1.msra.mxu0 0.0
    %3986 = vmatprep.subr.mxu0 0.0
    %3987 = vmatpush1.msra.mxu0 0.0
    %3988 = vmatprep.subr.mxu0 0.0
    %3989 = vmatpush1.msra.mxu0 0.0
    %3990 = vmatprep.subr.mxu0 0.0
    %3991 = vmatpush1.msra.mxu0 0.0
    %3992 = vmatprep.subr.mxu0 0.0
    %3993 = vmatpush1.msra.mxu0 0.0
    %3994 = vmatprep.subr.mxu0 0.0
    %3995 = vmatpush1.msra.mxu0 0.0
    %3996 = vmatprep.subr.mxu0 0.0
    %3997 = vmatpush1.msra.mxu0 0.0
    %3998 = vmatprep.subr.mxu0 0.0
    %3999 = vmatpush1.msra.mxu0 0.0
    %4000 = vmatprep.subr.mxu0 0.0
    %4001 = vmatpush1.msra.mxu0 0.0
    %4002 = vmatprep.subr.mxu0 0.0
    %4003 = vmatpush1.msra.mxu0 0.0
    %4004 = vmatprep.subr.mxu0 0.0
    %4005 = vmatpush1.msra.mxu0 0.0
    %4006 = vmatprep.subr.mxu0 0.0
    %4007 = vmatpush1.msra.mxu0 0.0
    %4008 = vmatprep.mubr.f32.mxu0 0.0
    %4009 = vmatmul.mubr.f32.gmra.mrb[0].mxu0 %v3939
    %v4010 = vpop.f32.mrb[0].mxu0
    %v4011 = vadd.f32 0.0, %v4010
    %v4012 = vpop.f32.mrb[0].mxu0
    %v4013 = vadd.f32 0.0, %v4012
    %4014 = vdwg.mxu0
    %4015 = vmatprep.subr.mxu0 %v2665
    %4016 = vmatpush1.msra.mxu0 %v2664
    %4017 = vmatprep.subr.mxu0 %v2669
    %4018 = vmatpush1.msra.mxu0 %v2668
    %4019 = vmatprep.subr.mxu0 %v2673
    %4020 = vmatpush1.msra.mxu0 %v2672
    %4021 = vmatprep.subr.mxu0 %v2677
    %4022 = vmatpush1.msra.mxu0 %v2676
    %4023 = vmatprep.subr.mxu0 %v2681
    %4024 = vmatpush1.msra.mxu0 %v2680
    %4025 = vmatprep.subr.mxu0 %v2685
    %4026 = vmatpush1.msra.mxu0 %v2684
    %4027 = vmatprep.subr.mxu0 %v2689
    %4028 = vmatpush1.msra.mxu0 %v2688
    %4029 = vmatprep.subr.mxu0 %v2693
    %4030 = vmatpush1.msra.mxu0 %v2692
    %4031 = vmatprep.subr.mxu0 %v2697
    %4032 = vmatpush1.msra.mxu0 %v2696
    %4033 = vmatprep.subr.mxu0 %v2701
    %4034 = vmatpush1.msra.mxu0 %v2700
    %4035 = vmatprep.subr.mxu0 %v2705
    %4036 = vmatpush1.msra.mxu0 %v2704
    %4037 = vmatprep.subr.mxu0 %v2709
    %4038 = vmatpush1.msra.mxu0 %v2708
    %4039 = vmatprep.subr.mxu0 %v2713
    %4040 = vmatpush1.msra.mxu0 %v2712
    %4041 = vmatprep.subr.mxu0 %v2717
    %4042 = vmatpush1.msra.mxu0 %v2716
    %4043 = vmatprep.subr.mxu0 %v2721
    %4044 = vmatpush1.msra.mxu0 %v2720
    %4045 = vmatprep.subr.mxu0 %v2725
    %4046 = vmatpush1.msra.mxu0 %v2724
    %4047 = vmatprep.subr.mxu0 0.0
    %4048 = vmatpush1.msra.mxu0 0.0
    %4049 = vmatprep.subr.mxu0 0.0
    %4050 = vmatpush1.msra.mxu0 0.0
    %4051 = vmatprep.subr.mxu0 0.0
    %4052 = vmatpush1.msra.mxu0 0.0
    %4053 = vmatprep.subr.mxu0 0.0
    %4054 = vmatpush1.msra.mxu0 0.0
    %4055 = vmatprep.subr.mxu0 0.0
    %4056 = vmatpush1.msra.mxu0 0.0
    %4057 = vmatprep.subr.mxu0 0.0
    %4058 = vmatpush1.msra.mxu0 0.0
    %4059 = vmatprep.subr.mxu0 0.0
    %4060 = vmatpush1.msra.mxu0 0.0
    %4061 = vmatprep.subr.mxu0 0.0
    %4062 = vmatpush1.msra.mxu0 0.0
    %4063 = vmatprep.subr.mxu0 0.0
    %4064 = vmatpush1.msra.mxu0 0.0
    %4065 = vmatprep.subr.mxu0 0.0
    %4066 = vmatpush1.msra.mxu0 0.0
    %4067 = vmatprep.subr.mxu0 0.0
    %4068 = vmatpush1.msra.mxu0 0.0
    %4069 = vmatprep.subr.mxu0 0.0
    %4070 = vmatpush1.msra.mxu0 0.0
    %4071 = vmatprep.subr.mxu0 0.0
    %4072 = vmatpush1.msra.mxu0 0.0
    %4073 = vmatprep.subr.mxu0 0.0
    %4074 = vmatpush1.msra.mxu0 0.0
    %4075 = vmatprep.subr.mxu0 0.0
    %4076 = vmatpush1.msra.mxu0 0.0
    %4077 = vmatprep.subr.mxu0 0.0
    %4078 = vmatpush1.msra.mxu0 0.0
    %4079 = vmatprep.mubr.f32.mxu0 0.0
    %4080 = vmatmul.mubr.f32.gmra.mrb[0].mxu0 %v3939
    %v4081 = vpop.f32.mrb[0].mxu0
    %v4082 = vadd.f32 0.0, %v4081
    %v4083 = vpop.f32.mrb[0].mxu0
    %v4084 = vadd.f32 0.0, %v4083
    %4085 = vdwg.mxu0
    %v4086 = vadd.f32 %v3940, %v4011
    %v4087 = vadd.f32 %v3941, %v4013
    %v4088 = vadd.f32 %v3942, %v4082
    %v4089 = vadd.f32 %v3943, %v4084
    %v4090 = vxor.u32 %v4086, 2147483648
    %v4091 = vmul.f32 %v4090, 1.442695
    %v4092 = vpow.pop %v4091
    %v4093 = vadd.f32 %v4092, 1.0
    %v4094 = vrcp.pop %v4093
    %v4095 = vmul.f32 1.0, %v4094
    %v4096 = vxor.u32 %v4087, 2147483648
    %v4097 = vmul.f32 %v4096, 1.442695
    %v4098 = vpow.pop %v4097
    %v4099 = vadd.f32 %v4098, 1.0
    %v4100 = vrcp.pop %v4099
    %v4101 = vmul.f32 1.0, %v4100
    %v4102 = vtanh.pop %v4088
    %v4103 = vxor.u32 %v4089, 2147483648
    %v4104 = vmul.f32 %v4103, 1.442695
    %v4105 = vpow.pop %v4104
    %v4106 = vadd.f32 %v4105, 1.0
    %v4107 = vrcp.pop %v4106
    %v4108 = vmul.f32 1.0, %v4107
    %v4109 = vmul.f32 %v4101, %v3937
    %v4110 = vmul.f32 %v4095, %v4102
    %v4111 = vadd.f32 %v4109, %v4110
    %v4112 = vtanh.pop %v4111
    %v4113 = vmul.f32 %v4108, %v4112
    %v4114 = vld [vmem:[%s7] sm:$0xff]
    %v4115 = vld [vmem:[%s7 + $0x8] sm:$0xff]
    %v4116 = vld [vmem:[%s7 + $0x10] sm:$0xff]
    %v4117 = vld [vmem:[%s7 + $0x18] sm:$0xff]
    %v4118 = vld [vmem:[%s7 + $0x20] sm:$0xff]
    %v4119 = vld [vmem:[%s7 + $0x28] sm:$0xff]
    %v4120 = vld [vmem:[%s7 + $0x30] sm:$0xff]
    %v4121 = vld [vmem:[%s7 + $0x38] sm:$0xff]
    %v4122 = vld [vmem:[%s7 + $0x40] sm:$0xff]
    %v4123 = vld [vmem:[%s7 + $0x48] sm:$0xff]
    %v4124 = vld [vmem:[%s7 + $0x50] sm:$0xff]
    %v4125 = vld [vmem:[%s7 + $0x58] sm:$0xff]
    %v4126 = vld [vmem:[%s7 + $0x60] sm:$0xff]
    %v4127 = vld [vmem:[%s7 + $0x68] sm:$0xff]
    %v4128 = vld [vmem:[%s7 + $0x70] sm:$0xff]
    %v4129 = vld [vmem:[%s7 + $0x78] sm:$0xff]
    %v4130 = vld [vmem:[%s8] sm:$0x1]
    %v4132 = vlaneseq
    %v4133 = vshrl.u32 %v4132, 7
    %v4134 = vsub.s32 0, %v4133
    %v4135 = vrot.slane %v4130, %v4134
    %4137 = vmatprep.subr.mxu0 0.0
    %4138 = vmatpush1.msra.mxu0 %v4114
    %4139 = vmatprep.subr.mxu0 0.0
    %4140 = vmatpush1.msra.mxu0 %v4115
    %4141 = vmatprep.subr.mxu0 0.0
    %4142 = vmatpush1.msra.mxu0 %v4116
    %4143 = vmatprep.subr.mxu0 0.0
    %4144 = vmatpush1.msra.mxu0 %v4117
    %4145 = vmatprep.subr.mxu0 0.0
    %4146 = vmatpush1.msra.mxu0 %v4118
    %4147 = vmatprep.subr.mxu0 0.0
    %4148 = vmatpush1.msra.mxu0 %v4119
    %4149 = vmatprep.subr.mxu0 0.0
    %4150 = vmatpush1.msra.mxu0 %v4120
    %4151 = vmatprep.subr.mxu0 0.0
    %4152 = vmatpush1.msra.mxu0 %v4121
    %4153 = vmatprep.subr.mxu0 0.0
    %4154 = vmatpush1.msra.mxu0 %v4122
    %4155 = vmatprep.subr.mxu0 0.0
    %4156 = vmatpush1.msra.mxu0 %v4123
    %4157 = vmatprep.subr.mxu0 0.0
    %4158 = vmatpush1.msra.mxu0 %v4124
    %4159 = vmatprep.subr.mxu0 0.0
    %4160 = vmatpush1.msra.mxu0 %v4125
    %4161 = vmatprep.subr.mxu0 0.0
    %4162 = vmatpush1.msra.mxu0 %v4126
    %4163 = vmatprep.subr.mxu0 0.0
    %4164 = vmatpush1.msra.mxu0 %v4127
    %4165 = vmatprep.subr.mxu0 0.0
    %4166 = vmatpush1.msra.mxu0 %v4128
    %4167 = vmatprep.subr.mxu0 0.0
    %4168 = vmatpush1.msra.mxu0 %v4129
    %4169 = vmatprep.subr.mxu0 0.0
    %4170 = vmatpush1.msra.mxu0 0.0
    %4171 = vmatprep.subr.mxu0 0.0
    %4172 = vmatpush1.msra.mxu0 0.0
    %4173 = vmatprep.subr.mxu0 0.0
    %4174 = vmatpush1.msra.mxu0 0.0
    %4175 = vmatprep.subr.mxu0 0.0
    %4176 = vmatpush1.msra.mxu0 0.0
    %4177 = vmatprep.subr.mxu0 0.0
    %4178 = vmatpush1.msra.mxu0 0.0
    %4179 = vmatprep.subr.mxu0 0.0
    %4180 = vmatpush1.msra.mxu0 0.0
    %4181 = vmatprep.subr.mxu0 0.0
    %4182 = vmatpush1.msra.mxu0 0.0
    %4183 = vmatprep.subr.mxu0 0.0
    %4184 = vmatpush1.msra.mxu0 0.0
    %4185 = vmatprep.subr.mxu0 0.0
    %4186 = vmatpush1.msra.mxu0 0.0
    %4187 = vmatprep.subr.mxu0 0.0
    %4188 = vmatpush1.msra.mxu0 0.0
    %4189 = vmatprep.subr.mxu0 0.0
    %4190 = vmatpush1.msra.mxu0 0.0
    %4191 = vmatprep.subr.mxu0 0.0
    %4192 = vmatpush1.msra.mxu0 0.0
    %4193 = vmatprep.subr.mxu0 0.0
    %4194 = vmatpush1.msra.mxu0 0.0
    %4195 = vmatprep.subr.mxu0 0.0
    %4196 = vmatpush1.msra.mxu0 0.0
    %4197 = vmatprep.subr.mxu0 0.0
    %4198 = vmatpush1.msra.mxu0 0.0
    %4199 = vmatprep.subr.mxu0 0.0
    %4200 = vmatpush1.msra.mxu0 0.0
    %4201 = vmatprep.mubr.f32.mxu0 0.0
    %4202 = vmatmul.mubr.f32.gmra.mrb[0].mxu0 %v4113
    %v4203 = vpop.f32.mrb[0].mxu0
    %v4204 = vadd.f32 %v4135, %v4203
    %v4205 = vpop.f32.mrb[0].mxu0
    %4206 = vdwg.mxu0
    %vm4207 = vcmask 31744
    %4208 = vst.msk [vmem:[%s9] sm:$0xff] %vm4207, %v4204
    // Predicated region
    $region50: #{tpu_custom_call.1} parent=1 // pred_check
      _
    $region51: #{tpu_custom_call.1} parent=1 // pred_check_branch
      %4210 = sbr.rel (0) target = $region53
    $region52: #{tpu_custom_call.1} parent=1 // pred_region
      _
    $region53: #{tpu_custom_call.1} parent=1 // pred_fallthru
      _
    // Predicated region
    $region54: #{tpu_custom_call.1} parent=1 // pred_check
      _
    $region55: #{tpu_custom_call.1} parent=1 // pred_check_branch
      %4212 = sbr.rel (0) target = $region57
    $region56: #{tpu_custom_call.1} parent=1 // pred_region
      _
    $region57: #{tpu_custom_call.1} parent=1 // pred_fallthru
      _
    %4213 = vsyncpa [#allocation5], 1
    %4214 = vsyncpa [#allocation7], 1

</llo_original>
